<compile_context>
chip_gen: v7x
topology: tpu7x:2x2x1
jax: 0.10.0
libtpu: 0.0.40
codegen_flags: <defaults>
</compile_context>

<pallas_src>
import functools

import numpy as np
import jax
import jax.numpy as jnp
from jax.experimental import pallas as pl
from jax.experimental.pallas import tpu as pltpu


_TAPS = tuple((dy, dx) for dy in (-1, 0, 1) for dx in (-1, 0, 1))


# --------------------------- fused Pallas kernel -----------------------------

def _centernet_head_kernel(*refs, H, W, n_cls_convs, n_wh_convs):
    """One grid step == one batch element. Internal layout: (C, H*W)."""
    it = iter(refs)
    x_ref = next(it)
    mask_ref = next(it)
    cls_convs = [(next(it), next(it)) for _ in range(n_cls_convs)]
    cls_wo, cls_bo = next(it), next(it)
    wh_convs = [(next(it), next(it)) for _ in range(n_wh_convs)]
    wh_wo, wh_bo = next(it), next(it)
    cls_out_ref = next(it)
    wh_out_ref = next(it)

    HW = H * W
    x = x_ref[...]                                   # (Cin, HW) f32
    # Border masks for the 9 taps (tap t = (dy+1)*3 + (dx+1)); each (1, HW).
    masks = [mask_ref[t] for t in range(9)]

    def conv3x3_relu(act, w_ref, b_ref):
        # act: (Cin, HW) f32.  One fused matmul: (Cout, 9*Cin) @ (9*Cin, HW).
        parts = []
        for t, (dy, dx) in enumerate(_TAPS):
            shift = dy * W + dx                      # neighbour offset in flat HW
            tap = act if shift == 0 else pltpu.roll(act, (-shift) % HW, axis=1)
            if dy != 0 or dx != 0:
                tap = tap * masks[t]                 # zero wrapped border taps
            parts.append(tap.astype(jnp.bfloat16))
        stacked = jnp.concatenate(parts, axis=0)     # (9*Cin, HW) bf16
        y = jnp.dot(w_ref[...], stacked,
                    preferred_element_type=jnp.float32)   # (Cout, HW) f32
        return jnp.maximum(y + b_ref[...], 0.0)      # bias + ReLU, f32

    def run_head(convs, wo_ref, bo_ref, relu_out):
        act = x
        for w_ref, b_ref in convs:
            act = conv3x3_relu(act, w_ref, b_ref)
        y = jnp.dot(wo_ref[...], act.astype(jnp.bfloat16),
                    preferred_element_type=jnp.float32) + bo_ref[...]
        if relu_out:
            y = jnp.maximum(y, 0.0)                  # scale already folded in
        return y                                     # (Cout, HW) f32, lane-dense

    cls_out_ref[...] = run_head(cls_convs, cls_wo, cls_bo, False)
    wh_out_ref[...] = run_head(wh_convs, wh_wo, wh_bo, True)


# --------------------------- pallas_call wrapper ------------------------------

def _tap_masks(H, W):
    """(9, 1, H*W) f32 validity masks for the 3x3 taps, built host-side."""
    ys, xs = np.meshgrid(np.arange(H), np.arange(W), indexing="ij")
    ys, xs = ys.reshape(-1), xs.reshape(-1)
    m = np.ones((9, 1, H * W), np.float32)
    for t, (dy, dx) in enumerate(_TAPS):
        valid = ((ys + dy >= 0) & (ys + dy < H) &
                 (xs + dx >= 0) & (xs + dx < W))
        m[t, 0, :] = valid.astype(np.float32)
    return jnp.asarray(m)


def _conv3x3_weight_to_mat(w):
    # (3, 3, Cin, Cout) HWIO -> (Cout, 9*Cin), tap-major / channel-minor,
    # matching the tap-concat order used inside the kernel.
    kh, kw, cin, cout = w.shape
    wm = (w.reshape(kh * kw, cin, cout)
           .transpose(2, 0, 1)
           .reshape(cout, kh * kw * cin))
    return wm.astype(jnp.bfloat16)


def centernet_head_forward(x_nchw, cls_params, wh_params, wh_offset_base=16.0):
    B, Cin, H, W = x_nchw.shape
    HW = H * W
    num_cls = cls_params["w_out"].shape[-1]
    n_wh_out = wh_params["w_out"].shape[-1]

    x_flat = x_nchw.reshape(B, Cin, HW)              # channel-major, free reshape

    inputs = [x_flat, _tap_masks(H, W)]
    in_specs = [
        pl.BlockSpec((None, Cin, HW), lambda b: (b, 0, 0)),
        pl.BlockSpec((9, 1, HW), lambda b: (0, 0, 0)),
    ]

    def add_mat(arr):                                # full 2-D array, constant per step
        inputs.append(arr)
        in_specs.append(pl.BlockSpec(arr.shape, lambda b: (0, 0)))

    for w, b in cls_params["convs"]:
        add_mat(_conv3x3_weight_to_mat(w))
        add_mat(b.reshape(-1, 1).astype(jnp.float32))
    add_mat(cls_params["w_out"].T.astype(jnp.bfloat16))            # (num_cls, inner)
    add_mat(cls_params["b_out"].reshape(-1, 1).astype(jnp.float32))

    s = float(wh_offset_base)                        # fold: relu(y)*s == relu(s*y)
    for w, b in wh_params["convs"]:
        add_mat(_conv3x3_weight_to_mat(w))
        add_mat(b.reshape(-1, 1).astype(jnp.float32))
    add_mat((wh_params["w_out"].T * s).astype(jnp.bfloat16))       # (4, inner)
    add_mat((wh_params["b_out"].reshape(-1, 1) * s).astype(jnp.float32))

    kern = functools.partial(
        _centernet_head_kernel, H=H, W=W,
        n_cls_convs=len(cls_params["convs"]),
        n_wh_convs=len(wh_params["convs"]))

    cls_flat, wh_flat = pl.pallas_call(
        kern,
        out_shape=(jax.ShapeDtypeStruct((B, num_cls, HW), jnp.float32),
                   jax.ShapeDtypeStruct((B, n_wh_out, HW), jnp.float32)),
        grid=(B,),
        in_specs=in_specs,
        out_specs=(pl.BlockSpec((None, num_cls, HW), lambda b: (b, 0, 0)),
                   pl.BlockSpec((None, n_wh_out, HW), lambda b: (b, 0, 0))),
        compiler_params=pltpu.CompilerParams(
            dimension_semantics=("parallel",)),
    )(*inputs)

    cls = cls_flat.reshape(B, num_cls, H, W)         # [B, num_cls, H, W]
    wh = wh_flat.reshape(B, n_wh_out, H, W)          # [B, 4, H, W]
    return cls, wh


# --------------------------- parameter init (matches nn.init) ----------------

def _conv_params(key, kh, kw, cin, cout, bias_value=0.0):
    # PyTorch: nn.init.normal_(weight, std=0.01); bias constant
    w = 0.01 * jax.random.normal(key, (kh, kw, cin, cout), jnp.float32)
    b = jnp.full((1, cout), bias_value, jnp.float32)
    return w, b


def init_single_head(key, in_channel, inner_channel, out_channel, num_convs,
                     bias_fill=False, bias_value=0.0):
    keys = jax.random.split(key, num_convs + 1)
    convs = []
    for i in range(num_convs):
        inc = in_channel if i == 0 else inner_channel
        convs.append(_conv_params(keys[i], 3, 3, inc, inner_channel))
    w_out, b_out = _conv_params(keys[-1], 1, 1, inner_channel, out_channel,
                                bias_value if bias_fill else 0.0)
    w_out = w_out.reshape(inner_channel, out_channel)   # 1x1 kernel -> (Cin, Cout)
    return {"convs": convs, "w_out": w_out, "b_out": b_out}


# --------------------------- pure-JAX reference -------------------------------

def _ref_conv(x_nchw, w_hwio, b):
    y = jax.lax.conv_general_dilated(
        x_nchw, w_hwio, (1, 1), "SAME",
        dimension_numbers=("NCHW", "HWIO", "NCHW"),
        precision=jax.lax.Precision.HIGHEST)
    return y + b.reshape(1, -1, 1, 1)


def ref_single_head(x_nchw, params, *, final_relu=False, final_scale=1.0):
    y = x_nchw
    for w, b in params["convs"]:
        y = jnp.maximum(_ref_conv(y, w, b), 0.0)
    w_out = params["w_out"].reshape(1, 1, *params["w_out"].shape)
    y = _ref_conv(y, w_out, params["b_out"])
    if final_relu:
        y = jnp.maximum(y, 0.0) * final_scale
    return y


def ref_forward(x_nchw, cls_params, wh_params, wh_offset_base=16.0):
    cls = ref_single_head(x_nchw, cls_params)
    wh = ref_single_head(x_nchw, wh_params,
                         final_relu=True, final_scale=wh_offset_base)
    return cls, wh


# --------------------------- demo --------------------------------------------

if __name__ == "__main__":
    key = jax.random.PRNGKey(0)
    k_x, k_cls, k_wh = jax.random.split(key, 3)

    B, C, H, W = 2, 64, 16, 16          # CenternetHead heads take 64 channels in
    num_cls = 8
    cls_num_convs, wh_num_convs = 2, 2
    bias_value = -2.19
    wh_offset_base = 16.0

    x_nchw = jax.random.normal(k_x, (B, C, H, W), jnp.float32)

    cls_params = init_single_head(k_cls, 64, 128, num_cls, cls_num_convs,
                                  bias_fill=True, bias_value=bias_value)
    wh_params = init_single_head(k_wh, 64, 64, 4, wh_num_convs)

    cls_out, wh_out = centernet_head_forward(x_nchw, cls_params, wh_params,
                                             wh_offset_base)
    jax.block_until_ready((cls_out, wh_out))

    assert cls_out.shape == (B, num_cls, H, W)
    assert wh_out.shape == (B, 4, H, W)

    cls_ref, wh_ref = ref_forward(x_nchw, cls_params, wh_params, wh_offset_base)
    np.testing.assert_allclose(np.asarray(cls_out), np.asarray(cls_ref),
                               rtol=1e-2, atol=1e-2)
    np.testing.assert_allclose(np.asarray(wh_out), np.asarray(wh_ref),
                               rtol=1e-2, atol=1e-2)

    print("KERNEL_OK")
</pallas_src>

<mosaic_0001>
module attributes {stable_mosaic.version = 11 : i64} {
  func.func @_centernet_head_kernel(%arg0: i32, %arg1: memref<1x64x256xf32, #tpu.memory_space<vmem>>, %arg2: memref<9x1x256xf32, #tpu.memory_space<vmem>>, %arg3: memref<128x576xbf16, #tpu.memory_space<vmem>>, %arg4: memref<128x1xf32, #tpu.memory_space<vmem>>, %arg5: memref<128x1152xbf16, #tpu.memory_space<vmem>>, %arg6: memref<128x1xf32, #tpu.memory_space<vmem>>, %arg7: memref<8x128xbf16, #tpu.memory_space<vmem>>, %arg8: memref<8x1xf32, #tpu.memory_space<vmem>>, %arg9: memref<64x576xbf16, #tpu.memory_space<vmem>>, %arg10: memref<64x1xf32, #tpu.memory_space<vmem>>, %arg11: memref<64x576xbf16, #tpu.memory_space<vmem>>, %arg12: memref<64x1xf32, #tpu.memory_space<vmem>>, %arg13: memref<4x64xbf16, #tpu.memory_space<vmem>>, %arg14: memref<4x1xf32, #tpu.memory_space<vmem>>, %arg15: memref<1x8x256xf32, #tpu.memory_space<vmem>>, %arg16: memref<1x4x256xf32, #tpu.memory_space<vmem>>) attributes {dimension_semantics = [#tpu.dimension_semantics<parallel>], iteration_bounds = array<i64: 2>, scalar_prefetch = 0 : i64, scratch_operands = 0 : i64, tpu.core_type = #tpu.core_type<tc>, window_params = [{transform_indices = @transform_0, window_bounds = array<i64: 1, 64, 256>}, {pipeline_mode = #tpu.pipeline_mode<synchronous>, transform_indices = @transform_1, window_bounds = array<i64: 9, 1, 256>}, {pipeline_mode = #tpu.pipeline_mode<synchronous>, transform_indices = @transform_2, window_bounds = array<i64: 128, 576>}, {pipeline_mode = #tpu.pipeline_mode<synchronous>, transform_indices = @transform_3, window_bounds = array<i64: 128, 1>}, {pipeline_mode = #tpu.pipeline_mode<synchronous>, transform_indices = @transform_4, window_bounds = array<i64: 128, 1152>}, {pipeline_mode = #tpu.pipeline_mode<synchronous>, transform_indices = @transform_5, window_bounds = array<i64: 128, 1>}, {pipeline_mode = #tpu.pipeline_mode<synchronous>, transform_indices = @transform_6, window_bounds = array<i64: 8, 128>}, {pipeline_mode = #tpu.pipeline_mode<synchronous>, transform_indices = @transform_7, window_bounds = array<i64: 8, 1>}, {pipeline_mode = #tpu.pipeline_mode<synchronous>, transform_indices = @transform_8, window_bounds = array<i64: 64, 576>}, {pipeline_mode = #tpu.pipeline_mode<synchronous>, transform_indices = @transform_9, window_bounds = array<i64: 64, 1>}, {pipeline_mode = #tpu.pipeline_mode<synchronous>, transform_indices = @transform_10, window_bounds = array<i64: 64, 576>}, {pipeline_mode = #tpu.pipeline_mode<synchronous>, transform_indices = @transform_11, window_bounds = array<i64: 64, 1>}, {pipeline_mode = #tpu.pipeline_mode<synchronous>, transform_indices = @transform_12, window_bounds = array<i64: 4, 64>}, {pipeline_mode = #tpu.pipeline_mode<synchronous>, transform_indices = @transform_13, window_bounds = array<i64: 4, 1>}, {transform_indices = @transform_14, window_bounds = array<i64: 1, 8, 256>}, {transform_indices = @transform_15, window_bounds = array<i64: 1, 4, 256>}]} {
    %c0 = arith.constant 0 : index
    %c0_0 = arith.constant 0 : index
    %c0_1 = arith.constant 0 : index
    %0 = vector.load %arg1[%c0, %c0_0, %c0_1] : memref<1x64x256xf32, #tpu.memory_space<vmem>>, vector<1x64x256xf32>
    %1 = vector.shape_cast %0 : vector<1x64x256xf32> to vector<64x256xf32>
    %c0_2 = arith.constant 0 : index
    %c0_3 = arith.constant 0 : index
    %c0_4 = arith.constant 0 : index
    %2 = vector.load %arg2[%c0_2, %c0_3, %c0_4] : memref<9x1x256xf32, #tpu.memory_space<vmem>>, vector<1x1x256xf32>
    %3 = vector.shape_cast %2 : vector<1x1x256xf32> to vector<1x256xf32>
    %c1 = arith.constant 1 : index
    %c0_5 = arith.constant 0 : index
    %c0_6 = arith.constant 0 : index
    %4 = vector.load %arg2[%c1, %c0_5, %c0_6] : memref<9x1x256xf32, #tpu.memory_space<vmem>>, vector<1x1x256xf32>
    %5 = vector.shape_cast %4 : vector<1x1x256xf32> to vector<1x256xf32>
    %c2 = arith.constant 2 : index
    %c0_7 = arith.constant 0 : index
    %c0_8 = arith.constant 0 : index
    %6 = vector.load %arg2[%c2, %c0_7, %c0_8] : memref<9x1x256xf32, #tpu.memory_space<vmem>>, vector<1x1x256xf32>
    %7 = vector.shape_cast %6 : vector<1x1x256xf32> to vector<1x256xf32>
    %c3 = arith.constant 3 : index
    %c0_9 = arith.constant 0 : index
    %c0_10 = arith.constant 0 : index
    %8 = vector.load %arg2[%c3, %c0_9, %c0_10] : memref<9x1x256xf32, #tpu.memory_space<vmem>>, vector<1x1x256xf32>
    %9 = vector.shape_cast %8 : vector<1x1x256xf32> to vector<1x256xf32>
    %c5 = arith.constant 5 : index
    %c0_11 = arith.constant 0 : index
    %c0_12 = arith.constant 0 : index
    %10 = vector.load %arg2[%c5, %c0_11, %c0_12] : memref<9x1x256xf32, #tpu.memory_space<vmem>>, vector<1x1x256xf32>
    %11 = vector.shape_cast %10 : vector<1x1x256xf32> to vector<1x256xf32>
    %c6 = arith.constant 6 : index
    %c0_13 = arith.constant 0 : index
    %c0_14 = arith.constant 0 : index
    %12 = vector.load %arg2[%c6, %c0_13, %c0_14] : memref<9x1x256xf32, #tpu.memory_space<vmem>>, vector<1x1x256xf32>
    %13 = vector.shape_cast %12 : vector<1x1x256xf32> to vector<1x256xf32>
    %c7 = arith.constant 7 : index
    %c0_15 = arith.constant 0 : index
    %c0_16 = arith.constant 0 : index
    %14 = vector.load %arg2[%c7, %c0_15, %c0_16] : memref<9x1x256xf32, #tpu.memory_space<vmem>>, vector<1x1x256xf32>
    %15 = vector.shape_cast %14 : vector<1x1x256xf32> to vector<1x256xf32>
    %c8 = arith.constant 8 : index
    %c0_17 = arith.constant 0 : index
    %c0_18 = arith.constant 0 : index
    %16 = vector.load %arg2[%c8, %c0_17, %c0_18] : memref<9x1x256xf32, #tpu.memory_space<vmem>>, vector<1x1x256xf32>
    %17 = vector.shape_cast %16 : vector<1x1x256xf32> to vector<1x256xf32>
    %c17_i32 = arith.constant 17 : i32
    %18 = tpu.dynamic_rotate %1 by %c17_i32 dim 1 : vector<64x256xf32>, i32 -> vector<64x256xf32>
    %19 = vector.broadcast %3 : vector<1x256xf32> to vector<64x256xf32>
    %20 = arith.mulf %18, %19 : vector<64x256xf32>
    %21 = arith.truncf %20 : vector<64x256xf32> to vector<64x256xbf16>
    %c16_i32 = arith.constant 16 : i32
    %22 = tpu.dynamic_rotate %1 by %c16_i32 dim 1 : vector<64x256xf32>, i32 -> vector<64x256xf32>
    %23 = vector.broadcast %5 : vector<1x256xf32> to vector<64x256xf32>
    %24 = arith.mulf %22, %23 : vector<64x256xf32>
    %25 = arith.truncf %24 : vector<64x256xf32> to vector<64x256xbf16>
    %c15_i32 = arith.constant 15 : i32
    %26 = tpu.dynamic_rotate %1 by %c15_i32 dim 1 : vector<64x256xf32>, i32 -> vector<64x256xf32>
    %27 = vector.broadcast %7 : vector<1x256xf32> to vector<64x256xf32>
    %28 = arith.mulf %26, %27 : vector<64x256xf32>
    %29 = arith.truncf %28 : vector<64x256xf32> to vector<64x256xbf16>
    %c1_i32 = arith.constant 1 : i32
    %30 = tpu.dynamic_rotate %1 by %c1_i32 dim 1 : vector<64x256xf32>, i32 -> vector<64x256xf32>
    %31 = vector.broadcast %9 : vector<1x256xf32> to vector<64x256xf32>
    %32 = arith.mulf %30, %31 : vector<64x256xf32>
    %33 = arith.truncf %32 : vector<64x256xf32> to vector<64x256xbf16>
    %34 = arith.truncf %1 : vector<64x256xf32> to vector<64x256xbf16>
    %c255_i32 = arith.constant 255 : i32
    %35 = tpu.dynamic_rotate %1 by %c255_i32 dim 1 : vector<64x256xf32>, i32 -> vector<64x256xf32>
    %36 = vector.broadcast %11 : vector<1x256xf32> to vector<64x256xf32>
    %37 = arith.mulf %35, %36 : vector<64x256xf32>
    %38 = arith.truncf %37 : vector<64x256xf32> to vector<64x256xbf16>
    %c241_i32 = arith.constant 241 : i32
    %39 = tpu.dynamic_rotate %1 by %c241_i32 dim 1 : vector<64x256xf32>, i32 -> vector<64x256xf32>
    %40 = vector.broadcast %13 : vector<1x256xf32> to vector<64x256xf32>
    %41 = arith.mulf %39, %40 : vector<64x256xf32>
    %42 = arith.truncf %41 : vector<64x256xf32> to vector<64x256xbf16>
    %c240_i32 = arith.constant 240 : i32
    %43 = tpu.dynamic_rotate %1 by %c240_i32 dim 1 : vector<64x256xf32>, i32 -> vector<64x256xf32>
    %44 = vector.broadcast %15 : vector<1x256xf32> to vector<64x256xf32>
    %45 = arith.mulf %43, %44 : vector<64x256xf32>
    %46 = arith.truncf %45 : vector<64x256xf32> to vector<64x256xbf16>
    %c239_i32 = arith.constant 239 : i32
    %47 = tpu.dynamic_rotate %1 by %c239_i32 dim 1 : vector<64x256xf32>, i32 -> vector<64x256xf32>
    %48 = vector.broadcast %17 : vector<1x256xf32> to vector<64x256xf32>
    %49 = arith.mulf %47, %48 : vector<64x256xf32>
    %50 = arith.truncf %49 : vector<64x256xf32> to vector<64x256xbf16>
    %51 = tpu.concatenate %21, %25, %29, %33, %34, %38, %42, %46, %50 in 0 : vector<64x256xbf16>, vector<64x256xbf16>, vector<64x256xbf16>, vector<64x256xbf16>, vector<64x256xbf16>, vector<64x256xbf16>, vector<64x256xbf16>, vector<64x256xbf16>, vector<64x256xbf16> -> vector<576x256xbf16>
    %c0_19 = arith.constant 0 : index
    %c0_20 = arith.constant 0 : index
    %52 = vector.load %arg3[%c0_19, %c0_20] : memref<128x576xbf16, #tpu.memory_space<vmem>>, vector<128x576xbf16>
    %cst = arith.constant dense<0.000000e+00> : vector<128x256xf32>
    %53 = tpu.matmul %52, %51, %cst {dimension_numbers = #tpu.dot_dimension_numbers<[1], [0], [0], [1], [0, 0, 1, 1], [], []>} : vector<128x576xbf16>, vector<576x256xbf16>, vector<128x256xf32> -> vector<128x256xf32>
    %c0_21 = arith.constant 0 : index
    %c0_22 = arith.constant 0 : index
    %54 = vector.load %arg4[%c0_21, %c0_22] : memref<128x1xf32, #tpu.memory_space<vmem>>, vector<128x1xf32>
    %55 = vector.broadcast %54 : vector<128x1xf32> to vector<128x256xf32>
    %56 = arith.addf %53, %55 : vector<128x256xf32>
    %cst_23 = arith.constant 0.000000e+00 : f32
    %57 = vector.broadcast %cst_23 : f32 to vector<128x256xf32>
    %58 = arith.maximumf %56, %57 : vector<128x256xf32>
    %c17_i32_24 = arith.constant 17 : i32
    %59 = tpu.dynamic_rotate %58 by %c17_i32_24 dim 1 : vector<128x256xf32>, i32 -> vector<128x256xf32>
    %60 = vector.broadcast %3 : vector<1x256xf32> to vector<128x256xf32>
    %61 = arith.mulf %59, %60 : vector<128x256xf32>
    %62 = arith.truncf %61 : vector<128x256xf32> to vector<128x256xbf16>
    %c16_i32_25 = arith.constant 16 : i32
    %63 = tpu.dynamic_rotate %58 by %c16_i32_25 dim 1 : vector<128x256xf32>, i32 -> vector<128x256xf32>
    %64 = vector.broadcast %5 : vector<1x256xf32> to vector<128x256xf32>
    %65 = arith.mulf %63, %64 : vector<128x256xf32>
    %66 = arith.truncf %65 : vector<128x256xf32> to vector<128x256xbf16>
    %c15_i32_26 = arith.constant 15 : i32
    %67 = tpu.dynamic_rotate %58 by %c15_i32_26 dim 1 : vector<128x256xf32>, i32 -> vector<128x256xf32>
    %68 = vector.broadcast %7 : vector<1x256xf32> to vector<128x256xf32>
    %69 = arith.mulf %67, %68 : vector<128x256xf32>
    %70 = arith.truncf %69 : vector<128x256xf32> to vector<128x256xbf16>
    %c1_i32_27 = arith.constant 1 : i32
    %71 = tpu.dynamic_rotate %58 by %c1_i32_27 dim 1 : vector<128x256xf32>, i32 -> vector<128x256xf32>
    %72 = vector.broadcast %9 : vector<1x256xf32> to vector<128x256xf32>
    %73 = arith.mulf %71, %72 : vector<128x256xf32>
    %74 = arith.truncf %73 : vector<128x256xf32> to vector<128x256xbf16>
    %75 = arith.truncf %58 : vector<128x256xf32> to vector<128x256xbf16>
    %c255_i32_28 = arith.constant 255 : i32
    %76 = tpu.dynamic_rotate %58 by %c255_i32_28 dim 1 : vector<128x256xf32>, i32 -> vector<128x256xf32>
    %77 = vector.broadcast %11 : vector<1x256xf32> to vector<128x256xf32>
    %78 = arith.mulf %76, %77 : vector<128x256xf32>
    %79 = arith.truncf %78 : vector<128x256xf32> to vector<128x256xbf16>
    %c241_i32_29 = arith.constant 241 : i32
    %80 = tpu.dynamic_rotate %58 by %c241_i32_29 dim 1 : vector<128x256xf32>, i32 -> vector<128x256xf32>
    %81 = vector.broadcast %13 : vector<1x256xf32> to vector<128x256xf32>
    %82 = arith.mulf %80, %81 : vector<128x256xf32>
    %83 = arith.truncf %82 : vector<128x256xf32> to vector<128x256xbf16>
    %c240_i32_30 = arith.constant 240 : i32
    %84 = tpu.dynamic_rotate %58 by %c240_i32_30 dim 1 : vector<128x256xf32>, i32 -> vector<128x256xf32>
    %85 = vector.broadcast %15 : vector<1x256xf32> to vector<128x256xf32>
    %86 = arith.mulf %84, %85 : vector<128x256xf32>
    %87 = arith.truncf %86 : vector<128x256xf32> to vector<128x256xbf16>
    %c239_i32_31 = arith.constant 239 : i32
    %88 = tpu.dynamic_rotate %58 by %c239_i32_31 dim 1 : vector<128x256xf32>, i32 -> vector<128x256xf32>
    %89 = vector.broadcast %17 : vector<1x256xf32> to vector<128x256xf32>
    %90 = arith.mulf %88, %89 : vector<128x256xf32>
    %91 = arith.truncf %90 : vector<128x256xf32> to vector<128x256xbf16>
    %92 = tpu.concatenate %62, %66, %70, %74, %75, %79, %83, %87, %91 in 0 : vector<128x256xbf16>, vector<128x256xbf16>, vector<128x256xbf16>, vector<128x256xbf16>, vector<128x256xbf16>, vector<128x256xbf16>, vector<128x256xbf16>, vector<128x256xbf16>, vector<128x256xbf16> -> vector<1152x256xbf16>
    %c0_32 = arith.constant 0 : index
    %c0_33 = arith.constant 0 : index
    %93 = vector.load %arg5[%c0_32, %c0_33] : memref<128x1152xbf16, #tpu.memory_space<vmem>>, vector<128x1152xbf16>
    %cst_34 = arith.constant dense<0.000000e+00> : vector<128x256xf32>
    %94 = tpu.matmul %93, %92, %cst_34 {dimension_numbers = #tpu.dot_dimension_numbers<[1], [0], [0], [1], [0, 0, 1, 1], [], []>} : vector<128x1152xbf16>, vector<1152x256xbf16>, vector<128x256xf32> -> vector<128x256xf32>
    %c0_35 = arith.constant 0 : index
    %c0_36 = arith.constant 0 : index
    %95 = vector.load %arg6[%c0_35, %c0_36] : memref<128x1xf32, #tpu.memory_space<vmem>>, vector<128x1xf32>
    %96 = vector.broadcast %95 : vector<128x1xf32> to vector<128x256xf32>
    %97 = arith.addf %94, %96 : vector<128x256xf32>
    %cst_37 = arith.constant 0.000000e+00 : f32
    %98 = vector.broadcast %cst_37 : f32 to vector<128x256xf32>
    %99 = arith.maximumf %97, %98 : vector<128x256xf32>
    %c0_38 = arith.constant 0 : index
    %c0_39 = arith.constant 0 : index
    %100 = vector.load %arg7[%c0_38, %c0_39] : memref<8x128xbf16, #tpu.memory_space<vmem>>, vector<8x128xbf16>
    %101 = arith.truncf %99 : vector<128x256xf32> to vector<128x256xbf16>
    %cst_40 = arith.constant dense<0.000000e+00> : vector<8x256xf32>
    %102 = tpu.matmul %100, %101, %cst_40 {dimension_numbers = #tpu.dot_dimension_numbers<[1], [0], [0], [1], [0, 0, 1, 1], [], []>} : vector<8x128xbf16>, vector<128x256xbf16>, vector<8x256xf32> -> vector<8x256xf32>
    %c0_41 = arith.constant 0 : index
    %c0_42 = arith.constant 0 : index
    %103 = vector.load %arg8[%c0_41, %c0_42] : memref<8x1xf32, #tpu.memory_space<vmem>>, vector<8x1xf32>
    %104 = vector.broadcast %103 : vector<8x1xf32> to vector<8x256xf32>
    %105 = arith.addf %102, %104 : vector<8x256xf32>
    %c0_43 = arith.constant 0 : index
    %c0_44 = arith.constant 0 : index
    %c0_45 = arith.constant 0 : index
    %106 = vector.load %arg15[%c0_43, %c0_44, %c0_45] : memref<1x8x256xf32, #tpu.memory_space<vmem>>, vector<1x8x256xf32>
    %107 = vector.shape_cast %106 : vector<1x8x256xf32> to vector<8x256xf32>
    %108 = vector.shape_cast %105 : vector<8x256xf32> to vector<1x8x256xf32>
    tpu.vector_store %arg15[%c0_43, %c0_44, %c0_45], %108 {strides = array<i32>} : memref<1x8x256xf32, #tpu.memory_space<vmem>>, vector<1x8x256xf32>,
    %c17_i32_46 = arith.constant 17 : i32
    %109 = tpu.dynamic_rotate %1 by %c17_i32_46 dim 1 : vector<64x256xf32>, i32 -> vector<64x256xf32>
    %110 = vector.broadcast %3 : vector<1x256xf32> to vector<64x256xf32>
    %111 = arith.mulf %109, %110 : vector<64x256xf32>
    %112 = arith.truncf %111 : vector<64x256xf32> to vector<64x256xbf16>
    %c16_i32_47 = arith.constant 16 : i32
    %113 = tpu.dynamic_rotate %1 by %c16_i32_47 dim 1 : vector<64x256xf32>, i32 -> vector<64x256xf32>
    %114 = vector.broadcast %5 : vector<1x256xf32> to vector<64x256xf32>
    %115 = arith.mulf %113, %114 : vector<64x256xf32>
    %116 = arith.truncf %115 : vector<64x256xf32> to vector<64x256xbf16>
    %c15_i32_48 = arith.constant 15 : i32
    %117 = tpu.dynamic_rotate %1 by %c15_i32_48 dim 1 : vector<64x256xf32>, i32 -> vector<64x256xf32>
    %118 = vector.broadcast %7 : vector<1x256xf32> to vector<64x256xf32>
    %119 = arith.mulf %117, %118 : vector<64x256xf32>
    %120 = arith.truncf %119 : vector<64x256xf32> to vector<64x256xbf16>
    %c1_i32_49 = arith.constant 1 : i32
    %121 = tpu.dynamic_rotate %1 by %c1_i32_49 dim 1 : vector<64x256xf32>, i32 -> vector<64x256xf32>
    %122 = vector.broadcast %9 : vector<1x256xf32> to vector<64x256xf32>
    %123 = arith.mulf %121, %122 : vector<64x256xf32>
    %124 = arith.truncf %123 : vector<64x256xf32> to vector<64x256xbf16>
    %125 = arith.truncf %1 : vector<64x256xf32> to vector<64x256xbf16>
    %c255_i32_50 = arith.constant 255 : i32
    %126 = tpu.dynamic_rotate %1 by %c255_i32_50 dim 1 : vector<64x256xf32>, i32 -> vector<64x256xf32>
    %127 = vector.broadcast %11 : vector<1x256xf32> to vector<64x256xf32>
    %128 = arith.mulf %126, %127 : vector<64x256xf32>
    %129 = arith.truncf %128 : vector<64x256xf32> to vector<64x256xbf16>
    %c241_i32_51 = arith.constant 241 : i32
    %130 = tpu.dynamic_rotate %1 by %c241_i32_51 dim 1 : vector<64x256xf32>, i32 -> vector<64x256xf32>
    %131 = vector.broadcast %13 : vector<1x256xf32> to vector<64x256xf32>
    %132 = arith.mulf %130, %131 : vector<64x256xf32>
    %133 = arith.truncf %132 : vector<64x256xf32> to vector<64x256xbf16>
    %c240_i32_52 = arith.constant 240 : i32
    %134 = tpu.dynamic_rotate %1 by %c240_i32_52 dim 1 : vector<64x256xf32>, i32 -> vector<64x256xf32>
    %135 = vector.broadcast %15 : vector<1x256xf32> to vector<64x256xf32>
    %136 = arith.mulf %134, %135 : vector<64x256xf32>
    %137 = arith.truncf %136 : vector<64x256xf32> to vector<64x256xbf16>
    %c239_i32_53 = arith.constant 239 : i32
    %138 = tpu.dynamic_rotate %1 by %c239_i32_53 dim 1 : vector<64x256xf32>, i32 -> vector<64x256xf32>
    %139 = vector.broadcast %17 : vector<1x256xf32> to vector<64x256xf32>
    %140 = arith.mulf %138, %139 : vector<64x256xf32>
    %141 = arith.truncf %140 : vector<64x256xf32> to vector<64x256xbf16>
    %142 = tpu.concatenate %112, %116, %120, %124, %125, %129, %133, %137, %141 in 0 : vector<64x256xbf16>, vector<64x256xbf16>, vector<64x256xbf16>, vector<64x256xbf16>, vector<64x256xbf16>, vector<64x256xbf16>, vector<64x256xbf16>, vector<64x256xbf16>, vector<64x256xbf16> -> vector<576x256xbf16>
    %c0_54 = arith.constant 0 : index
    %c0_55 = arith.constant 0 : index
    %143 = vector.load %arg9[%c0_54, %c0_55] : memref<64x576xbf16, #tpu.memory_space<vmem>>, vector<64x576xbf16>
    %cst_56 = arith.constant dense<0.000000e+00> : vector<64x256xf32>
    %144 = tpu.matmul %143, %142, %cst_56 {dimension_numbers = #tpu.dot_dimension_numbers<[1], [0], [0], [1], [0, 0, 1, 1], [], []>} : vector<64x576xbf16>, vector<576x256xbf16>, vector<64x256xf32> -> vector<64x256xf32>
    %c0_57 = arith.constant 0 : index
    %c0_58 = arith.constant 0 : index
    %145 = vector.load %arg10[%c0_57, %c0_58] : memref<64x1xf32, #tpu.memory_space<vmem>>, vector<64x1xf32>
    %146 = vector.broadcast %145 : vector<64x1xf32> to vector<64x256xf32>
    %147 = arith.addf %144, %146 : vector<64x256xf32>
    %cst_59 = arith.constant 0.000000e+00 : f32
    %148 = vector.broadcast %cst_59 : f32 to vector<64x256xf32>
    %149 = arith.maximumf %147, %148 : vector<64x256xf32>
    %c17_i32_60 = arith.constant 17 : i32
    %150 = tpu.dynamic_rotate %149 by %c17_i32_60 dim 1 : vector<64x256xf32>, i32 -> vector<64x256xf32>
    %151 = vector.broadcast %3 : vector<1x256xf32> to vector<64x256xf32>
    %152 = arith.mulf %150, %151 : vector<64x256xf32>
    %153 = arith.truncf %152 : vector<64x256xf32> to vector<64x256xbf16>
    %c16_i32_61 = arith.constant 16 : i32
    %154 = tpu.dynamic_rotate %149 by %c16_i32_61 dim 1 : vector<64x256xf32>, i32 -> vector<64x256xf32>
    %155 = vector.broadcast %5 : vector<1x256xf32> to vector<64x256xf32>
    %156 = arith.mulf %154, %155 : vector<64x256xf32>
    %157 = arith.truncf %156 : vector<64x256xf32> to vector<64x256xbf16>
    %c15_i32_62 = arith.constant 15 : i32
    %158 = tpu.dynamic_rotate %149 by %c15_i32_62 dim 1 : vector<64x256xf32>, i32 -> vector<64x256xf32>
    %159 = vector.broadcast %7 : vector<1x256xf32> to vector<64x256xf32>
    %160 = arith.mulf %158, %159 : vector<64x256xf32>
    %161 = arith.truncf %160 : vector<64x256xf32> to vector<64x256xbf16>
    %c1_i32_63 = arith.constant 1 : i32
    %162 = tpu.dynamic_rotate %149 by %c1_i32_63 dim 1 : vector<64x256xf32>, i32 -> vector<64x256xf32>
    %163 = vector.broadcast %9 : vector<1x256xf32> to vector<64x256xf32>
    %164 = arith.mulf %162, %163 : vector<64x256xf32>
    %165 = arith.truncf %164 : vector<64x256xf32> to vector<64x256xbf16>
    %166 = arith.truncf %149 : vector<64x256xf32> to vector<64x256xbf16>
    %c255_i32_64 = arith.constant 255 : i32
    %167 = tpu.dynamic_rotate %149 by %c255_i32_64 dim 1 : vector<64x256xf32>, i32 -> vector<64x256xf32>
    %168 = vector.broadcast %11 : vector<1x256xf32> to vector<64x256xf32>
    %169 = arith.mulf %167, %168 : vector<64x256xf32>
    %170 = arith.truncf %169 : vector<64x256xf32> to vector<64x256xbf16>
    %c241_i32_65 = arith.constant 241 : i32
    %171 = tpu.dynamic_rotate %149 by %c241_i32_65 dim 1 : vector<64x256xf32>, i32 -> vector<64x256xf32>
    %172 = vector.broadcast %13 : vector<1x256xf32> to vector<64x256xf32>
    %173 = arith.mulf %171, %172 : vector<64x256xf32>
    %174 = arith.truncf %173 : vector<64x256xf32> to vector<64x256xbf16>
    %c240_i32_66 = arith.constant 240 : i32
    %175 = tpu.dynamic_rotate %149 by %c240_i32_66 dim 1 : vector<64x256xf32>, i32 -> vector<64x256xf32>
    %176 = vector.broadcast %15 : vector<1x256xf32> to vector<64x256xf32>
    %177 = arith.mulf %175, %176 : vector<64x256xf32>
    %178 = arith.truncf %177 : vector<64x256xf32> to vector<64x256xbf16>
    %c239_i32_67 = arith.constant 239 : i32
    %179 = tpu.dynamic_rotate %149 by %c239_i32_67 dim 1 : vector<64x256xf32>, i32 -> vector<64x256xf32>
    %180 = vector.broadcast %17 : vector<1x256xf32> to vector<64x256xf32>
    %181 = arith.mulf %179, %180 : vector<64x256xf32>
    %182 = arith.truncf %181 : vector<64x256xf32> to vector<64x256xbf16>
    %183 = tpu.concatenate %153, %157, %161, %165, %166, %170, %174, %178, %182 in 0 : vector<64x256xbf16>, vector<64x256xbf16>, vector<64x256xbf16>, vector<64x256xbf16>, vector<64x256xbf16>, vector<64x256xbf16>, vector<64x256xbf16>, vector<64x256xbf16>, vector<64x256xbf16> -> vector<576x256xbf16>
    %c0_68 = arith.constant 0 : index
    %c0_69 = arith.constant 0 : index
    %184 = vector.load %arg11[%c0_68, %c0_69] : memref<64x576xbf16, #tpu.memory_space<vmem>>, vector<64x576xbf16>
    %cst_70 = arith.constant dense<0.000000e+00> : vector<64x256xf32>
    %185 = tpu.matmul %184, %183, %cst_70 {dimension_numbers = #tpu.dot_dimension_numbers<[1], [0], [0], [1], [0, 0, 1, 1], [], []>} : vector<64x576xbf16>, vector<576x256xbf16>, vector<64x256xf32> -> vector<64x256xf32>
    %c0_71 = arith.constant 0 : index
    %c0_72 = arith.constant 0 : index
    %186 = vector.load %arg12[%c0_71, %c0_72] : memref<64x1xf32, #tpu.memory_space<vmem>>, vector<64x1xf32>
    %187 = vector.broadcast %186 : vector<64x1xf32> to vector<64x256xf32>
    %188 = arith.addf %185, %187 : vector<64x256xf32>
    %cst_73 = arith.constant 0.000000e+00 : f32
    %189 = vector.broadcast %cst_73 : f32 to vector<64x256xf32>
    %190 = arith.maximumf %188, %189 : vector<64x256xf32>
    %c0_74 = arith.constant 0 : index
    %c0_75 = arith.constant 0 : index
    %191 = vector.load %arg13[%c0_74, %c0_75] : memref<4x64xbf16, #tpu.memory_space<vmem>>, vector<4x64xbf16>
    %192 = arith.truncf %190 : vector<64x256xf32> to vector<64x256xbf16>
    %cst_76 = arith.constant dense<0.000000e+00> : vector<4x256xf32>
    %193 = tpu.matmul %191, %192, %cst_76 {dimension_numbers = #tpu.dot_dimension_numbers<[1], [0], [0], [1], [0, 0, 1, 1], [], []>} : vector<4x64xbf16>, vector<64x256xbf16>, vector<4x256xf32> -> vector<4x256xf32>
    %c0_77 = arith.constant 0 : index
    %c0_78 = arith.constant 0 : index
    %194 = vector.load %arg14[%c0_77, %c0_78] : memref<4x1xf32, #tpu.memory_space<vmem>>, vector<4x1xf32>
    %195 = vector.broadcast %194 : vector<4x1xf32> to vector<4x256xf32>
    %196 = arith.addf %193, %195 : vector<4x256xf32>
    %cst_79 = arith.constant 0.000000e+00 : f32
    %197 = vector.broadcast %cst_79 : f32 to vector<4x256xf32>
    %198 = arith.maximumf %196, %197 : vector<4x256xf32>
    %c0_80 = arith.constant 0 : index
    %c0_81 = arith.constant 0 : index
    %c0_82 = arith.constant 0 : index
    %199 = vector.load %arg16[%c0_80, %c0_81, %c0_82] : memref<1x4x256xf32, #tpu.memory_space<vmem>>, vector<1x4x256xf32>
    %200 = vector.shape_cast %199 : vector<1x4x256xf32> to vector<4x256xf32>
    %201 = vector.shape_cast %198 : vector<4x256xf32> to vector<1x4x256xf32>
    tpu.vector_store %arg16[%c0_80, %c0_81, %c0_82], %201 {strides = array<i32>} : memref<1x4x256xf32, #tpu.memory_space<vmem>>, vector<1x4x256xf32>,
    return
  }
  func.func @transform_0(%arg0: i32) -> (i32, i32, i32) {
    %c0_i32 = arith.constant 0 : i32
    %c0_i32_0 = arith.constant 0 : i32
    %c0_i32_1 = arith.constant 0 : i32
    return %arg0, %c0_i32, %c0_i32_0 : i32, i32, i32
  }
  func.func @transform_1(%arg0: i32) -> (i32, i32, i32) {
    %c0_i32 = arith.constant 0 : i32
    %c0_i32_0 = arith.constant 0 : i32
    %c0_i32_1 = arith.constant 0 : i32
    %c0_i32_2 = arith.constant 0 : i32
    return %c0_i32, %c0_i32_0, %c0_i32_1 : i32, i32, i32
  }
  func.func @transform_2(%arg0: i32) -> (i32, i32) {
    %c0_i32 = arith.constant 0 : i32
    %c0_i32_0 = arith.constant 0 : i32
    %c0_i32_1 = arith.constant 0 : i32
    return %c0_i32, %c0_i32_0 : i32, i32
  }
  func.func @transform_3(%arg0: i32) -> (i32, i32) {
    %c0_i32 = arith.constant 0 : i32
    %c0_i32_0 = arith.constant 0 : i32
    %c0_i32_1 = arith.constant 0 : i32
    return %c0_i32, %c0_i32_0 : i32, i32
  }
  func.func @transform_4(%arg0: i32) -> (i32, i32) {
    %c0_i32 = arith.constant 0 : i32
    %c0_i32_0 = arith.constant 0 : i32
    %c0_i32_1 = arith.constant 0 : i32
    return %c0_i32, %c0_i32_0 : i32, i32
  }
  func.func @transform_5(%arg0: i32) -> (i32, i32) {
    %c0_i32 = arith.constant 0 : i32
    %c0_i32_0 = arith.constant 0 : i32
    %c0_i32_1 = arith.constant 0 : i32
    return %c0_i32, %c0_i32_0 : i32, i32
  }
  func.func @transform_6(%arg0: i32) -> (i32, i32) {
    %c0_i32 = arith.constant 0 : i32
    %c0_i32_0 = arith.constant 0 : i32
    %c0_i32_1 = arith.constant 0 : i32
    return %c0_i32, %c0_i32_0 : i32, i32
  }
  func.func @transform_7(%arg0: i32) -> (i32, i32) {
    %c0_i32 = arith.constant 0 : i32
    %c0_i32_0 = arith.constant 0 : i32
    %c0_i32_1 = arith.constant 0 : i32
    return %c0_i32, %c0_i32_0 : i32, i32
  }
  func.func @transform_8(%arg0: i32) -> (i32, i32) {
    %c0_i32 = arith.constant 0 : i32
    %c0_i32_0 = arith.constant 0 : i32
    %c0_i32_1 = arith.constant 0 : i32
    return %c0_i32, %c0_i32_0 : i32, i32
  }
  func.func @transform_9(%arg0: i32) -> (i32, i32) {
    %c0_i32 = arith.constant 0 : i32
    %c0_i32_0 = arith.constant 0 : i32
    %c0_i32_1 = arith.constant 0 : i32
    return %c0_i32, %c0_i32_0 : i32, i32
  }
  func.func @transform_10(%arg0: i32) -> (i32, i32) {
    %c0_i32 = arith.constant 0 : i32
    %c0_i32_0 = arith.constant 0 : i32
    %c0_i32_1 = arith.constant 0 : i32
    return %c0_i32, %c0_i32_0 : i32, i32
  }
  func.func @transform_11(%arg0: i32) -> (i32, i32) {
    %c0_i32 = arith.constant 0 : i32
    %c0_i32_0 = arith.constant 0 : i32
    %c0_i32_1 = arith.constant 0 : i32
    return %c0_i32, %c0_i32_0 : i32, i32
  }
  func.func @transform_12(%arg0: i32) -> (i32, i32) {
    %c0_i32 = arith.constant 0 : i32
    %c0_i32_0 = arith.constant 0 : i32
    %c0_i32_1 = arith.constant 0 : i32
    return %c0_i32, %c0_i32_0 : i32, i32
  }
  func.func @transform_13(%arg0: i32) -> (i32, i32) {
    %c0_i32 = arith.constant 0 : i32
    %c0_i32_0 = arith.constant 0 : i32
    %c0_i32_1 = arith.constant 0 : i32
    return %c0_i32, %c0_i32_0 : i32, i32
  }
  func.func @transform_14(%arg0: i32) -> (i32, i32, i32) {
    %c0_i32 = arith.constant 0 : i32
    %c0_i32_0 = arith.constant 0 : i32
    %c0_i32_1 = arith.constant 0 : i32
    return %arg0, %c0_i32, %c0_i32_0 : i32, i32, i32
  }
  func.func @transform_15(%arg0: i32) -> (i32, i32, i32) {
    %c0_i32 = arith.constant 0 : i32
    %c0_i32_0 = arith.constant 0 : i32
    %c0_i32_1 = arith.constant 0 : i32
    return %arg0, %c0_i32, %c0_i32_0 : i32, i32, i32
  }
}

</mosaic_0001>

<llo_original>
// kernel: tpu_custom_call.1
$region0: #{tpu_custom_call.1}
  #allocation0 [shape = 'u32[]', space=smem, size = 0x4, offset = 0x4, fixed_abs, tag = 'smem constant byte address 0x4 - core index']
  #allocation1 [shape = 'u32[144,128]{1,0:T(1,128)}', space=vmem, size = 0x12000, scoped, tag = 'internal scratch']
  %s0 = inlined_call_operand.vmem [shape: f32[2,64,256], index: 0, kind: input, shape index: {}]
  %s1 = inlined_call_operand.vmem [shape: f32[9,1,256], index: 1, kind: input, shape index: {}]
  %s2 = inlined_call_operand.vmem [shape: bf16[128,576], index: 2, kind: input, shape index: {}]
  %s3 = inlined_call_operand.vmem [shape: f32[128,1], index: 3, kind: input, shape index: {}]
  %s4 = inlined_call_operand.vmem [shape: bf16[128,1152], index: 4, kind: input, shape index: {}]
  %s5 = inlined_call_operand.vmem [shape: f32[128,1], index: 5, kind: input, shape index: {}]
  %s6 = inlined_call_operand.vmem [shape: bf16[8,128], index: 6, kind: input, shape index: {}]
  %s7 = inlined_call_operand.vmem [shape: f32[8,1], index: 7, kind: input, shape index: {}]
  %s8 = inlined_call_operand.vmem [shape: bf16[64,576], index: 8, kind: input, shape index: {}]
  %s9 = inlined_call_operand.vmem [shape: f32[64,1], index: 9, kind: input, shape index: {}]
  %s10 = inlined_call_operand.hbm [shape: bf16[64,576], index: 10, kind: input, shape index: {}]
  %s11 = inlined_call_operand.vmem [shape: f32[64,1], index: 11, kind: input, shape index: {}]
  %s12 = inlined_call_operand.vmem [shape: bf16[4,64], index: 12, kind: input, shape index: {}]
  %s13 = inlined_call_operand.vmem [shape: f32[4,1], index: 13, kind: input, shape index: {}]
  %s14 = inlined_call_operand.hbm [shape: f32[2,8,256], index: 14, kind: output, shape index: {0}]
  %s15 = inlined_call_operand.hbm [shape: f32[2,4,256], index: 15, kind: output, shape index: {1}]
  %16 = xla_tuple %s14, %s15
  %s17 = sld [smem:[#allocation0]]
  $region101: #{tpu_custom_call.1} parent=0
    _
  %s19 = ssub.s32 1, %s17
  %s20 = scalar_select 0, %s19, %s17
  $region1: #{tpu_custom_call.1} parent=0
    #allocation2 [shape = 'u8[81920]{0}', space=vmem, size = 0x14000, scoped, tag = 'input window, operand 10, single buffered']
    #allocation3 [shape = 's32[2]{0}', space=sflag, size = 0x8, scoped, tag = 'scoped memory for tpu_custom_call.1']
    #allocation4 [shape = 's32[2]{0}', space=sflag, size = 0x8, scoped, tag = 'scoped memory for tpu_custom_call.1']
    #allocation5 [shape = 'u8[16384]{0}', space=vmem, size = 0x4000, scoped, tag = 'output window, operand 0']
    #allocation6 [shape = 'u8[8192]{0}', space=vmem, size = 0x2000, scoped, tag = 'output window, operand 1']
    #allocation7 [shape = 's32[2]{0}', space=sflag, size = 0x8, scoped, tag = 'scoped memory for tpu_custom_call.1']
    %21 = vsyncpa [#allocation3], 0
    %22 = vsyncpa [#allocation4], 0
    %s23 = scalar_lea.sflag [#allocation4], 1
    %24 = vsyncpa %s23, 0
    %25 = vsyncpa [#allocation7], 0
    %s26 = scalar_lea.sflag [#allocation7], 1
    %27 = vsyncpa %s26, 0
    loop: start=0, step=1, limit=4
    $region2: #{tpu_custom_call.1} parent=1 // loop_pre_header
      _
    $region3: #{tpu_custom_call.1} parent=1 // loop_header
      %s29 = sphi 0, %s33
      %p30 = scmp.ge.s32.totalorder %s29, 4
      %s39 = sphi 0, %s41
      %s42 = sphi 0, %s39
      %s43 = sphi 0, %s42
      %s59 = sphi 0, %s43
      %s63 = sphi 0, %s63
      %s65 = sphi 0, %s63
      %s66 = sphi 0, %s65
      %s80 = sphi 0, %s66
      %s84 = sphi 0, %s84
      %s86 = sphi 0, %s84
      %s87 = sphi 0, %s86
      %s101 = sphi 0, %s87
      %s105 = sphi 0, %s105
      %s107 = sphi 0, %s105
      %s108 = sphi 0, %s107
      %s122 = sphi 0, %s108
      %s126 = sphi 0, %s126
      %s128 = sphi 0, %s126
      %s129 = sphi 0, %s128
      %s143 = sphi 0, %s129
      %s147 = sphi 0, %s147
      %s149 = sphi 0, %s147
      %s150 = sphi 0, %s149
      %s164 = sphi 0, %s150
      %s168 = sphi 0, %s168
      %s170 = sphi 0, %s168
      %s171 = sphi 0, %s170
      %s185 = sphi 0, %s171
      %s189 = sphi 0, %s189
      %s191 = sphi 0, %s189
      %s192 = sphi 0, %s191
      %s206 = sphi 0, %s192
      %s210 = sphi 0, %s210
      %s212 = sphi 0, %s210
      %s213 = sphi 0, %s212
      %s227 = sphi 0, %s213
      %s231 = sphi 0, %s231
      %s233 = sphi 0, %s231
      %s234 = sphi 0, %s233
      %s248 = sphi 0, %s234
      %s252 = sphi 0, %s252
      %s254 = sphi 0, %s252
      %s255 = sphi 0, %s254
      %s269 = sphi 0, %s255
      %s273 = sphi 0, %s273
      %s275 = sphi 0, %s273
      %s276 = sphi 0, %s275
      %s290 = sphi 0, %s276
      %s294 = sphi 0, %s294
      %s296 = sphi 0, %s294
      %s297 = sphi 0, %s296
      %s311 = sphi 0, %s297
      %s315 = sphi 0, %s315
      %s317 = sphi 0, %s315
      %s318 = sphi 0, %s317
      %s332 = sphi 0, %s318
      %s338 = sphi 0, %s340
      %s341 = sphi 0, %s338
      %s342 = sphi 0, %s341
      %s358 = sphi 0, %s342
      %s364 = sphi 0, %s366
      %s367 = sphi 0, %s364
      %s368 = sphi 0, %s367
      %s384 = sphi 0, %s368
    $region4: #{tpu_custom_call.1} parent=1 // loop_header_branch
      %32 = sbr.rel (%p30) target = $region8
    $region5: #{tpu_custom_call.1} parent=1 // loop_body
      %s34 = ssub.s32 %s29, 1
      %s35 = ssub.s32 %s29, 2
      %s36 = sadd.s32 %s29, 1
      %s37 = ssub.s32 %s29, %s36
      %p38 = scmp.eq.s32.totalorder %s37, 0
      %s40 = sadd.s32 %s39, 1
      %s41 = scalar_select %p38, %s39, %s40
      %p44 = pneg %p38
      %p45 = scmp.eq.s32.totalorder %s29, 1
      %p46 = por %p44, %p45
      %p47 = scmp.ne.s32.totalorder %s39, %s42
      %p48 = scmp.eq.s32.totalorder %s29, 0
      %p49 = por %p47, %p48
      %p50 = scmp.ne.s32.totalorder %s39, %s42
      %p51 = scmp.eq.s32.totalorder %s34, 1
      %p52 = por %p50, %p51
      %p53 = scmp.ne.s32.totalorder %s42, %s43
      %p54 = scmp.eq.s32.totalorder %s34, 0
      %p55 = por %p53, %p54
      %p56 = scmp.ne.s32.totalorder %s42, %s43
      %p57 = scmp.eq.s32.totalorder %s35, 1
      %p58 = por %p56, %p57
      %p60 = scmp.ne.s32.totalorder %s43, %s59
      %p61 = scmp.eq.s32.totalorder %s35, 0
      %p62 = por %p60, %p61
      %s64 = sadd.s32 %s63, 1
      %p67 = scmp.eq.s32.totalorder %s29, 1
      %p68 = scmp.ne.s32.totalorder %s63, %s65
      %p69 = scmp.eq.s32.totalorder %s29, 0
      %p70 = por %p68, %p69
      %p71 = scmp.ne.s32.totalorder %s63, %s65
      %p72 = scmp.eq.s32.totalorder %s34, 1
      %p73 = por %p71, %p72
      %p74 = scmp.ne.s32.totalorder %s65, %s66
      %p75 = scmp.eq.s32.totalorder %s34, 0
      %p76 = por %p74, %p75
      %p77 = scmp.ne.s32.totalorder %s65, %s66
      %p78 = scmp.eq.s32.totalorder %s35, 1
      %p79 = por %p77, %p78
      %p81 = scmp.ne.s32.totalorder %s66, %s80
      %p82 = scmp.eq.s32.totalorder %s35, 0
      %p83 = por %p81, %p82
      %s85 = sadd.s32 %s84, 1
      %p88 = scmp.eq.s32.totalorder %s29, 1
      %p89 = scmp.ne.s32.totalorder %s84, %s86
      %p90 = scmp.eq.s32.totalorder %s29, 0
      %p91 = por %p89, %p90
      %p92 = scmp.ne.s32.totalorder %s84, %s86
      %p93 = scmp.eq.s32.totalorder %s34, 1
      %p94 = por %p92, %p93
      %p95 = scmp.ne.s32.totalorder %s86, %s87
      %p96 = scmp.eq.s32.totalorder %s34, 0
      %p97 = por %p95, %p96
      %p98 = scmp.ne.s32.totalorder %s86, %s87
      %p99 = scmp.eq.s32.totalorder %s35, 1
      %p100 = por %p98, %p99
      %p102 = scmp.ne.s32.totalorder %s87, %s101
      %p103 = scmp.eq.s32.totalorder %s35, 0
      %p104 = por %p102, %p103
      %s106 = sadd.s32 %s105, 1
      %p109 = scmp.eq.s32.totalorder %s29, 1
      %p110 = scmp.ne.s32.totalorder %s105, %s107
      %p111 = scmp.eq.s32.totalorder %s29, 0
      %p112 = por %p110, %p111
      %p113 = scmp.ne.s32.totalorder %s105, %s107
      %p114 = scmp.eq.s32.totalorder %s34, 1
      %p115 = por %p113, %p114
      %p116 = scmp.ne.s32.totalorder %s107, %s108
      %p117 = scmp.eq.s32.totalorder %s34, 0
      %p118 = por %p116, %p117
      %p119 = scmp.ne.s32.totalorder %s107, %s108
      %p120 = scmp.eq.s32.totalorder %s35, 1
      %p121 = por %p119, %p120
      %p123 = scmp.ne.s32.totalorder %s108, %s122
      %p124 = scmp.eq.s32.totalorder %s35, 0
      %p125 = por %p123, %p124
      %s127 = sadd.s32 %s126, 1
      %p130 = scmp.eq.s32.totalorder %s29, 1
      %p131 = scmp.ne.s32.totalorder %s126, %s128
      %p132 = scmp.eq.s32.totalorder %s29, 0
      %p133 = por %p131, %p132
      %p134 = scmp.ne.s32.totalorder %s126, %s128
      %p135 = scmp.eq.s32.totalorder %s34, 1
      %p136 = por %p134, %p135
      %p137 = scmp.ne.s32.totalorder %s128, %s129
      %p138 = scmp.eq.s32.totalorder %s34, 0
      %p139 = por %p137, %p138
      %p140 = scmp.ne.s32.totalorder %s128, %s129
      %p141 = scmp.eq.s32.totalorder %s35, 1
      %p142 = por %p140, %p141
      %p144 = scmp.ne.s32.totalorder %s129, %s143
      %p145 = scmp.eq.s32.totalorder %s35, 0
      %p146 = por %p144, %p145
      %s148 = sadd.s32 %s147, 1
      %p151 = scmp.eq.s32.totalorder %s29, 1
      %p152 = scmp.ne.s32.totalorder %s147, %s149
      %p153 = scmp.eq.s32.totalorder %s29, 0
      %p154 = por %p152, %p153
      %p155 = scmp.ne.s32.totalorder %s147, %s149
      %p156 = scmp.eq.s32.totalorder %s34, 1
      %p157 = por %p155, %p156
      %p158 = scmp.ne.s32.totalorder %s149, %s150
      %p159 = scmp.eq.s32.totalorder %s34, 0
      %p160 = por %p158, %p159
      %p161 = scmp.ne.s32.totalorder %s149, %s150
      %p162 = scmp.eq.s32.totalorder %s35, 1
      %p163 = por %p161, %p162
      %p165 = scmp.ne.s32.totalorder %s150, %s164
      %p166 = scmp.eq.s32.totalorder %s35, 0
      %p167 = por %p165, %p166
      %s169 = sadd.s32 %s168, 1
      %p172 = scmp.eq.s32.totalorder %s29, 1
      %p173 = scmp.ne.s32.totalorder %s168, %s170
      %p174 = scmp.eq.s32.totalorder %s29, 0
      %p175 = por %p173, %p174
      %p176 = scmp.ne.s32.totalorder %s168, %s170
      %p177 = scmp.eq.s32.totalorder %s34, 1
      %p178 = por %p176, %p177
      %p179 = scmp.ne.s32.totalorder %s170, %s171
      %p180 = scmp.eq.s32.totalorder %s34, 0
      %p181 = por %p179, %p180
      %p182 = scmp.ne.s32.totalorder %s170, %s171
      %p183 = scmp.eq.s32.totalorder %s35, 1
      %p184 = por %p182, %p183
      %p186 = scmp.ne.s32.totalorder %s171, %s185
      %p187 = scmp.eq.s32.totalorder %s35, 0
      %p188 = por %p186, %p187
      %s190 = sadd.s32 %s189, 1
      %p193 = scmp.eq.s32.totalorder %s29, 1
      %p194 = scmp.ne.s32.totalorder %s189, %s191
      %p195 = scmp.eq.s32.totalorder %s29, 0
      %p196 = por %p194, %p195
      %p197 = scmp.ne.s32.totalorder %s189, %s191
      %p198 = scmp.eq.s32.totalorder %s34, 1
      %p199 = por %p197, %p198
      %p200 = scmp.ne.s32.totalorder %s191, %s192
      %p201 = scmp.eq.s32.totalorder %s34, 0
      %p202 = por %p200, %p201
      %p203 = scmp.ne.s32.totalorder %s191, %s192
      %p204 = scmp.eq.s32.totalorder %s35, 1
      %p205 = por %p203, %p204
      %p207 = scmp.ne.s32.totalorder %s192, %s206
      %p208 = scmp.eq.s32.totalorder %s35, 0
      %p209 = por %p207, %p208
      %s211 = sadd.s32 %s210, 1
      %p214 = scmp.eq.s32.totalorder %s29, 1
      %p215 = scmp.ne.s32.totalorder %s210, %s212
      %p216 = scmp.eq.s32.totalorder %s29, 0
      %p217 = por %p215, %p216
      %p218 = scmp.ne.s32.totalorder %s210, %s212
      %p219 = scmp.eq.s32.totalorder %s34, 1
      %p220 = por %p218, %p219
      %p221 = scmp.ne.s32.totalorder %s212, %s213
      %p222 = scmp.eq.s32.totalorder %s34, 0
      %p223 = por %p221, %p222
      %p224 = scmp.ne.s32.totalorder %s212, %s213
      %p225 = scmp.eq.s32.totalorder %s35, 1
      %p226 = por %p224, %p225
      %p228 = scmp.ne.s32.totalorder %s213, %s227
      %p229 = scmp.eq.s32.totalorder %s35, 0
      %p230 = por %p228, %p229
      %s232 = sadd.s32 %s231, 1
      %p235 = scmp.eq.s32.totalorder %s29, 1
      %p236 = scmp.ne.s32.totalorder %s231, %s233
      %p237 = scmp.eq.s32.totalorder %s29, 0
      %p238 = por %p236, %p237
      %p239 = scmp.ne.s32.totalorder %s231, %s233
      %p240 = scmp.eq.s32.totalorder %s34, 1
      %p241 = por %p239, %p240
      %p242 = scmp.ne.s32.totalorder %s233, %s234
      %p243 = scmp.eq.s32.totalorder %s34, 0
      %p244 = por %p242, %p243
      %p245 = scmp.ne.s32.totalorder %s233, %s234
      %p246 = scmp.eq.s32.totalorder %s35, 1
      %p247 = por %p245, %p246
      %p249 = scmp.ne.s32.totalorder %s234, %s248
      %p250 = scmp.eq.s32.totalorder %s35, 0
      %p251 = por %p249, %p250
      %s253 = sadd.s32 %s252, 1
      %p256 = scmp.eq.s32.totalorder %s29, 1
      %p257 = scmp.ne.s32.totalorder %s252, %s254
      %p258 = scmp.eq.s32.totalorder %s29, 0
      %p259 = por %p257, %p258
      %p260 = scmp.ne.s32.totalorder %s252, %s254
      %p261 = scmp.eq.s32.totalorder %s34, 1
      %p262 = por %p260, %p261
      %p263 = scmp.ne.s32.totalorder %s254, %s255
      %p264 = scmp.eq.s32.totalorder %s34, 0
      %p265 = por %p263, %p264
      %p266 = scmp.ne.s32.totalorder %s254, %s255
      %p267 = scmp.eq.s32.totalorder %s35, 1
      %p268 = por %p266, %p267
      %p270 = scmp.ne.s32.totalorder %s255, %s269
      %p271 = scmp.eq.s32.totalorder %s35, 0
      %p272 = por %p270, %p271
      %s274 = sadd.s32 %s273, 1
      %p277 = scmp.eq.s32.totalorder %s29, 1
      %p278 = scmp.ne.s32.totalorder %s273, %s275
      %p279 = scmp.eq.s32.totalorder %s29, 0
      %p280 = por %p278, %p279
      %p281 = scmp.ne.s32.totalorder %s273, %s275
      %p282 = scmp.eq.s32.totalorder %s34, 1
      %p283 = por %p281, %p282
      %p284 = scmp.ne.s32.totalorder %s275, %s276
      %p285 = scmp.eq.s32.totalorder %s34, 0
      %p286 = por %p284, %p285
      %p287 = scmp.ne.s32.totalorder %s275, %s276
      %p288 = scmp.eq.s32.totalorder %s35, 1
      %p289 = por %p287, %p288
      %p291 = scmp.ne.s32.totalorder %s276, %s290
      %p292 = scmp.eq.s32.totalorder %s35, 0
      %p293 = por %p291, %p292
      %s295 = sadd.s32 %s294, 1
      %p298 = scmp.eq.s32.totalorder %s29, 1
      %p299 = scmp.ne.s32.totalorder %s294, %s296
      %p300 = scmp.eq.s32.totalorder %s29, 0
      %p301 = por %p299, %p300
      %p302 = scmp.ne.s32.totalorder %s294, %s296
      %p303 = scmp.eq.s32.totalorder %s34, 1
      %p304 = por %p302, %p303
      %p305 = scmp.ne.s32.totalorder %s296, %s297
      %p306 = scmp.eq.s32.totalorder %s34, 0
      %p307 = por %p305, %p306
      %p308 = scmp.ne.s32.totalorder %s296, %s297
      %p309 = scmp.eq.s32.totalorder %s35, 1
      %p310 = por %p308, %p309
      %p312 = scmp.ne.s32.totalorder %s297, %s311
      %p313 = scmp.eq.s32.totalorder %s35, 0
      %p314 = por %p312, %p313
      %s316 = sadd.s32 %s315, 1
      %p319 = scmp.eq.s32.totalorder %s29, 1
      %p320 = scmp.ne.s32.totalorder %s315, %s317
      %p321 = scmp.eq.s32.totalorder %s29, 0
      %p322 = por %p320, %p321
      %p323 = scmp.ne.s32.totalorder %s315, %s317
      %p324 = scmp.eq.s32.totalorder %s34, 1
      %p325 = por %p323, %p324
      %p326 = scmp.ne.s32.totalorder %s317, %s318
      %p327 = scmp.eq.s32.totalorder %s34, 0
      %p328 = por %p326, %p327
      %p329 = scmp.ne.s32.totalorder %s317, %s318
      %p330 = scmp.eq.s32.totalorder %s35, 1
      %p331 = por %p329, %p330
      %p333 = scmp.ne.s32.totalorder %s318, %s332
      %p334 = scmp.eq.s32.totalorder %s35, 0
      %p335 = por %p333, %p334
      %s336 = ssub.s32 %s29, %s36
      %p337 = scmp.eq.s32.totalorder %s336, 0
      %s339 = sadd.s32 %s338, 1
      %s340 = scalar_select %p337, %s338, %s339
      %p343 = pneg %p337
      %p344 = scmp.eq.s32.totalorder %s29, 1
      %p345 = por %p343, %p344
      %p346 = scmp.ne.s32.totalorder %s338, %s341
      %p347 = scmp.eq.s32.totalorder %s29, 0
      %p348 = por %p346, %p347
      %p349 = scmp.ne.s32.totalorder %s338, %s341
      %p350 = scmp.eq.s32.totalorder %s34, 1
      %p351 = por %p349, %p350
      %p352 = scmp.ne.s32.totalorder %s341, %s342
      %p353 = scmp.eq.s32.totalorder %s34, 0
      %p354 = por %p352, %p353
      %p355 = scmp.ne.s32.totalorder %s341, %s342
      %p356 = scmp.eq.s32.totalorder %s35, 1
      %p357 = por %p355, %p356
      %p359 = scmp.ne.s32.totalorder %s342, %s358
      %p360 = scmp.eq.s32.totalorder %s35, 0
      %p361 = por %p359, %p360
      %s362 = ssub.s32 %s29, %s36
      %p363 = scmp.eq.s32.totalorder %s362, 0
      %s365 = sadd.s32 %s364, 1
      %s366 = scalar_select %p363, %s364, %s365
      %p369 = pneg %p363
      %p370 = scmp.eq.s32.totalorder %s29, 1
      %p371 = por %p369, %p370
      %p372 = scmp.ne.s32.totalorder %s364, %s367
      %p373 = scmp.eq.s32.totalorder %s29, 0
      %p374 = por %p372, %p373
      %p375 = scmp.ne.s32.totalorder %s364, %s367
      %p376 = scmp.eq.s32.totalorder %s34, 1
      %p377 = por %p375, %p376
      %p378 = scmp.ne.s32.totalorder %s367, %s368
      %p379 = scmp.eq.s32.totalorder %s34, 0
      %p380 = por %p378, %p379
      %p381 = scmp.ne.s32.totalorder %s367, %s368
      %p382 = scmp.eq.s32.totalorder %s35, 1
      %p383 = por %p381, %p382
      %p385 = scmp.ne.s32.totalorder %s368, %s384
      %p386 = scmp.eq.s32.totalorder %s35, 0
      %p387 = por %p385, %p386
      %p388 = scmp.le.s32.totalorder 1, %s29
      %p389 = scmp.lt.s32.totalorder %s29, 3
      %p390 = pnand %p388, %p389
      %p391 = pneg %p390
      // Predicated region
      $region9: #{tpu_custom_call.1} parent=5 // pred_check
        _
      $region10: #{tpu_custom_call.1} parent=5 // pred_check_branch
        %393 = sbr.rel (%p390) target = $region12
      $region11: #{tpu_custom_call.1} parent=5 // pred_region
        %s394 = ssub.s32 %s29, 1
        // Predicated region
        $region13: #{tpu_custom_call.1} parent=11 // pred_check
          %p395 = pneg %p76
        $region14: #{tpu_custom_call.1} parent=11 // pred_check_branch
          %397 = sbr.rel (%p395) target = $region16
        $region15: #{tpu_custom_call.1} parent=11 // pred_region
          _
        $region16: #{tpu_custom_call.1} parent=11 // pred_fallthru
          _
        // Predicated region
        $region17: #{tpu_custom_call.1} parent=11 // pred_check
          %p398 = pneg %p97
        $region18: #{tpu_custom_call.1} parent=11 // pred_check_branch
          %400 = sbr.rel (%p398) target = $region20
        $region19: #{tpu_custom_call.1} parent=11 // pred_region
          _
        $region20: #{tpu_custom_call.1} parent=11 // pred_fallthru
          _
        // Predicated region
        $region21: #{tpu_custom_call.1} parent=11 // pred_check
          %p401 = pneg %p118
        $region22: #{tpu_custom_call.1} parent=11 // pred_check_branch
          %403 = sbr.rel (%p401) target = $region24
        $region23: #{tpu_custom_call.1} parent=11 // pred_region
          _
        $region24: #{tpu_custom_call.1} parent=11 // pred_fallthru
          _
        // Predicated region
        $region25: #{tpu_custom_call.1} parent=11 // pred_check
          %p404 = pneg %p139
        $region26: #{tpu_custom_call.1} parent=11 // pred_check_branch
          %406 = sbr.rel (%p404) target = $region28
        $region27: #{tpu_custom_call.1} parent=11 // pred_region
          _
        $region28: #{tpu_custom_call.1} parent=11 // pred_fallthru
          _
        // Predicated region
        $region29: #{tpu_custom_call.1} parent=11 // pred_check
          %p407 = pneg %p160
        $region30: #{tpu_custom_call.1} parent=11 // pred_check_branch
          %409 = sbr.rel (%p407) target = $region32
        $region31: #{tpu_custom_call.1} parent=11 // pred_region
          _
        $region32: #{tpu_custom_call.1} parent=11 // pred_fallthru
          _
        // Predicated region
        $region33: #{tpu_custom_call.1} parent=11 // pred_check
          %p410 = pneg %p181
        $region34: #{tpu_custom_call.1} parent=11 // pred_check_branch
          %412 = sbr.rel (%p410) target = $region36
        $region35: #{tpu_custom_call.1} parent=11 // pred_region
          _
        $region36: #{tpu_custom_call.1} parent=11 // pred_fallthru
          _
        // Predicated region
        $region37: #{tpu_custom_call.1} parent=11 // pred_check
          %p413 = pneg %p202
        $region38: #{tpu_custom_call.1} parent=11 // pred_check_branch
          %415 = sbr.rel (%p413) target = $region40
        $region39: #{tpu_custom_call.1} parent=11 // pred_region
          _
        $region40: #{tpu_custom_call.1} parent=11 // pred_fallthru
          _
        // Predicated region
        $region41: #{tpu_custom_call.1} parent=11 // pred_check
          %p416 = pneg %p223
        $region42: #{tpu_custom_call.1} parent=11 // pred_check_branch
          %418 = sbr.rel (%p416) target = $region44
        $region43: #{tpu_custom_call.1} parent=11 // pred_region
          _
        $region44: #{tpu_custom_call.1} parent=11 // pred_fallthru
          _
        // Predicated region
        $region45: #{tpu_custom_call.1} parent=11 // pred_check
          %p419 = pneg %p244
        $region46: #{tpu_custom_call.1} parent=11 // pred_check_branch
          %421 = sbr.rel (%p419) target = $region48
        $region47: #{tpu_custom_call.1} parent=11 // pred_region
          _
        $region48: #{tpu_custom_call.1} parent=11 // pred_fallthru
          _
        // Predicated region
        $region49: #{tpu_custom_call.1} parent=11 // pred_check
          %p422 = pneg %p265
        $region50: #{tpu_custom_call.1} parent=11 // pred_check_branch
          %424 = sbr.rel (%p422) target = $region52
        $region51: #{tpu_custom_call.1} parent=11 // pred_region
          %s426 = ssub.s32 2560, 2560
          %427 = vsyncadd [#allocation3], %s426
          %s428 = sshll.u32 [#allocation2], 4
          %s429 = int_to_ptr.vmem [resolvable:$true] %s428
          %434 = dma.hbm_to_vmem [thread:$0]  %s10, 2560, %s429, [#allocation3], 320, 320, 20
        $region52: #{tpu_custom_call.1} parent=11 // pred_fallthru
          _
        // Predicated region
        $region53: #{tpu_custom_call.1} parent=11 // pred_check
          %p435 = pneg %p286
        $region54: #{tpu_custom_call.1} parent=11 // pred_check_branch
          %437 = sbr.rel (%p435) target = $region56
        $region55: #{tpu_custom_call.1} parent=11 // pred_region
          _
        $region56: #{tpu_custom_call.1} parent=11 // pred_fallthru
          _
        // Predicated region
        $region57: #{tpu_custom_call.1} parent=11 // pred_check
          %p438 = pneg %p307
        $region58: #{tpu_custom_call.1} parent=11 // pred_check_branch
          %440 = sbr.rel (%p438) target = $region60
        $region59: #{tpu_custom_call.1} parent=11 // pred_region
          _
        $region60: #{tpu_custom_call.1} parent=11 // pred_fallthru
          _
        // Predicated region
        $region61: #{tpu_custom_call.1} parent=11 // pred_check
          %p441 = pneg %p328
        $region62: #{tpu_custom_call.1} parent=11 // pred_check_branch
          %443 = sbr.rel (%p441) target = $region64
        $region63: #{tpu_custom_call.1} parent=11 // pred_region
          _
        $region64: #{tpu_custom_call.1} parent=11 // pred_fallthru
          _
      $region12: #{tpu_custom_call.1} parent=5 // pred_fallthru
        _
      %p444 = scmp.lt.s32.totalorder %s29, 2
      // Predicated region
      $region65: #{tpu_custom_call.1} parent=5 // pred_check
        %p445 = pneg %p444
      $region66: #{tpu_custom_call.1} parent=5 // pred_check_branch
        %447 = sbr.rel (%p445) target = $region68
      $region67: #{tpu_custom_call.1} parent=5 // pred_region
        // Predicated region
        $region69: #{tpu_custom_call.1} parent=67 // pred_check
          %p448 = pneg %p49
        $region70: #{tpu_custom_call.1} parent=67 // pred_check_branch
          %450 = sbr.rel (%p448) target = $region72
        $region71: #{tpu_custom_call.1} parent=67 // pred_region
          %p451 = scmp.lt.s32.totalorder %s29, 1
          %s452 = scalar_select %p451, %s29, 1
          %s453 = smul.addr %s452, 16
          %s454 = smul.addr %s453, 8
          %s455 = scalar_lea.vmem %s0, %s454
        $region72: #{tpu_custom_call.1} parent=67 // pred_fallthru
          _
      $region68: #{tpu_custom_call.1} parent=5 // pred_fallthru
        _
      %p456 = scmp.le.s32.totalorder 1, %s29
      %p457 = scmp.lt.s32.totalorder %s29, 3
      %p458 = pnand %p456, %p457
      %p459 = pneg %p458
      // Predicated region
      $region73: #{tpu_custom_call.1} parent=5 // pred_check
        _
      $region74: #{tpu_custom_call.1} parent=5 // pred_check_branch
        %461 = sbr.rel (%p458) target = $region76
      $region75: #{tpu_custom_call.1} parent=5 // pred_region
        %s462 = ssub.s32 %s29, 1
        // Predicated region
        $region77: #{tpu_custom_call.1} parent=75 // pred_check
          %p463 = pneg %p265
        $region78: #{tpu_custom_call.1} parent=75 // pred_check_branch
          %465 = sbr.rel (%p463) target = $region80
        $region79: #{tpu_custom_call.1} parent=75 // pred_region
          %466 = dma.done [#allocation3], 2560
        $region80: #{tpu_custom_call.1} parent=75 // pred_fallthru
          _
        %p467 = scmp.lt.s32.totalorder %s34, 1
        %s468 = scalar_select %p467, %s34, 1
        %s469 = smul.addr %s468, 16
        %s470 = smul.addr %s469, 8
        %s471 = scalar_lea.vmem %s0, %s470
        %p472 = pneg %p55
        %p473 = pneg %p52
        %p474 = pneg %p76
        %p475 = pneg %p73
        %p476 = pneg %p97
        %p477 = pneg %p94
        %p478 = pneg %p118
        %p479 = pneg %p115
        %p480 = pneg %p139
        %p481 = pneg %p136
        %p482 = pneg %p160
        %p483 = pneg %p157
        %p484 = pneg %p181
        %p485 = pneg %p178
        %p486 = pneg %p202
        %p487 = pneg %p199
        %p488 = pneg %p223
        %p489 = pneg %p220
        %p490 = pneg %p244
        %p491 = pneg %p241
        %p492 = pneg %p265
        %p493 = pneg %p262
        %p494 = pneg %p286
        %p495 = pneg %p283
        %p496 = pneg %p307
        %p497 = pneg %p304
        %p498 = pneg %p328
        %p499 = pneg %p325
        %p500 = pneg %p354
        %p501 = pneg %p351
        %s502 = sand.u32 %s341, 1
        %s503 = scalar_lea.sflag [#allocation4], %s502
        %s504 = sand.u32 %s341, 1
        %s505 = smul.addr %s504, 16
        %s506 = scalar_lea.vmem [#allocation5], %s505
        %p507 = pneg %p380
        %p508 = pneg %p377
        %s509 = sand.u32 %s367, 1
        %s510 = scalar_lea.sflag [#allocation7], %s509
        %s511 = sand.u32 %s367, 1
        %s512 = smul.addr %s511, 8
        %s513 = scalar_lea.vmem [#allocation6], %s512
        %p514 = scmp.lt.s32.totalorder %s34, 1
        %s515 = scalar_select %p514, %s34, 1
        %s516 = smul.addr %s515, 16
        %s517 = smul.addr %s516, 8
        %s518 = scalar_lea.vmem %s0, %s517
        %v520 = vld [vmem:[%s518] sm:$0xff]
        %v521 = vld [vmem:[%s518 + $0x8] sm:$0xff]
        %v522 = vld [vmem:[%s518 + $0x10] sm:$0xff]
        %v523 = vld [vmem:[%s518 + $0x18] sm:$0xff]
        %v524 = vld [vmem:[%s518 + $0x20] sm:$0xff]
        %v525 = vld [vmem:[%s518 + $0x28] sm:$0xff]
        %v526 = vld [vmem:[%s518 + $0x30] sm:$0xff]
        %v527 = vld [vmem:[%s518 + $0x38] sm:$0xff]
        %v528 = vld [vmem:[%s518 + $0x40] sm:$0xff]
        %v529 = vld [vmem:[%s518 + $0x48] sm:$0xff]
        %v530 = vld [vmem:[%s518 + $0x50] sm:$0xff]
        %v531 = vld [vmem:[%s518 + $0x58] sm:$0xff]
        %v532 = vld [vmem:[%s518 + $0x60] sm:$0xff]
        %v533 = vld [vmem:[%s518 + $0x68] sm:$0xff]
        %v534 = vld [vmem:[%s518 + $0x70] sm:$0xff]
        %v535 = vld [vmem:[%s518 + $0x78] sm:$0xff]
        %v536 = vld [vmem:[%s1] sm:$0x3]
        %s537 = scalar_lea.vmem %s1, 2
        %v538 = vld [vmem:[%s537] sm:$0x3]
        %s539 = scalar_lea.vmem %s1, 4
        %v540 = vld [vmem:[%s539] sm:$0x3]
        %s541 = scalar_lea.vmem %s1, 6
        %v542 = vld [vmem:[%s541] sm:$0x3]
        %s543 = scalar_lea.vmem %s1, 10
        %v544 = vld [vmem:[%s543] sm:$0x3]
        %s545 = scalar_lea.vmem %s1, 12
        %v546 = vld [vmem:[%s545] sm:$0x3]
        %s547 = scalar_lea.vmem %s1, 14
        %v548 = vld [vmem:[%s547] sm:$0x3]
        %s549 = scalar_lea.vmem %s1, 16
        %v550 = vld [vmem:[%s549] sm:$0x3]
        %551 = vrot.lane.b32.xlu0 %v520, 17
        %v552 = vpop.permute.xlu0 %551
        %553 = vrot.lane.b32.xlu0 %v522, 17
        %v554 = vpop.permute.xlu0 %553
        %555 = vrot.lane.b32.xlu0 %v524, 17
        %v556 = vpop.permute.xlu0 %555
        %557 = vrot.lane.b32.xlu0 %v526, 17
        %v558 = vpop.permute.xlu0 %557
        %559 = vrot.lane.b32.xlu0 %v528, 17
        %v560 = vpop.permute.xlu0 %559
        %561 = vrot.lane.b32.xlu0 %v530, 17
        %v562 = vpop.permute.xlu0 %561
        %563 = vrot.lane.b32.xlu0 %v532, 17
        %v564 = vpop.permute.xlu0 %563
        %565 = vrot.lane.b32.xlu0 %v534, 17
        %v566 = vpop.permute.xlu0 %565
        %567 = vrot.lane.b32.xlu0 %v521, 17
        %v568 = vpop.permute.xlu0 %567
        %569 = vrot.lane.b32.xlu0 %v523, 17
        %v570 = vpop.permute.xlu0 %569
        %571 = vrot.lane.b32.xlu0 %v525, 17
        %v572 = vpop.permute.xlu0 %571
        %573 = vrot.lane.b32.xlu0 %v527, 17
        %v574 = vpop.permute.xlu0 %573
        %575 = vrot.lane.b32.xlu0 %v529, 17
        %v576 = vpop.permute.xlu0 %575
        %577 = vrot.lane.b32.xlu0 %v531, 17
        %v578 = vpop.permute.xlu0 %577
        %579 = vrot.lane.b32.xlu0 %v533, 17
        %v580 = vpop.permute.xlu0 %579
        %581 = vrot.lane.b32.xlu0 %v535, 17
        %v582 = vpop.permute.xlu0 %581
        %v583 = vlaneseq
        %v584 = vand.u32 %v583, 127
        %vm585 = vcmp.lt.s32.totalorder %v584, 17
        %v586 = vsel %vm585, %v552, %v568
        %v587 = vsel %vm585, %v554, %v570
        %v588 = vsel %vm585, %v556, %v572
        %v589 = vsel %vm585, %v558, %v574
        %v590 = vsel %vm585, %v560, %v576
        %v591 = vsel %vm585, %v562, %v578
        %v592 = vsel %vm585, %v564, %v580
        %v593 = vsel %vm585, %v566, %v582
        %v594 = vsel %vm585, %v568, %v552
        %v595 = vsel %vm585, %v570, %v554
        %v596 = vsel %vm585, %v572, %v556
        %v597 = vsel %vm585, %v574, %v558
        %v598 = vsel %vm585, %v576, %v560
        %v599 = vsel %vm585, %v578, %v562
        %v600 = vsel %vm585, %v580, %v564
        %v601 = vsel %vm585, %v582, %v566
        %v603 = vlaneseq
        %v604 = vshrl.u32 %v603, 7
        %v605 = vsub.s32 0, %v604
        %v606 = vrot.slane %v536, %v605
        %v607 = vlaneseq
        %v608 = vshrl.u32 %v607, 7
        %v609 = vsub.s32 1, %v608
        %v610 = vrot.slane %v536, %v609
        %v613 = vmul.f32 %v594, %v606
        %v614 = vmul.f32 %v586, %v610
        %v615 = vmul.f32 %v595, %v606
        %v616 = vmul.f32 %v587, %v610
        %v617 = vmul.f32 %v596, %v606
        %v618 = vmul.f32 %v588, %v610
        %v619 = vmul.f32 %v597, %v606
        %v620 = vmul.f32 %v589, %v610
        %v621 = vmul.f32 %v598, %v606
        %v622 = vmul.f32 %v590, %v610
        %v623 = vmul.f32 %v599, %v606
        %v624 = vmul.f32 %v591, %v610
        %v625 = vmul.f32 %v600, %v606
        %v626 = vmul.f32 %v592, %v610
        %v627 = vmul.f32 %v601, %v606
        %v628 = vmul.f32 %v593, %v610
        %v629 = vpack.c.bf16 %v615, %v613
        %v630 = vpack.c.bf16 %v616, %v614
        %v631 = vpack.c.bf16 %v619, %v617
        %v632 = vpack.c.bf16 %v620, %v618
        %v633 = vpack.c.bf16 %v623, %v621
        %v634 = vpack.c.bf16 %v624, %v622
        %v635 = vpack.c.bf16 %v627, %v625
        %v636 = vpack.c.bf16 %v628, %v626
        %637 = vrot.lane.b32.xlu0 %v520, 16
        %v638 = vpop.permute.xlu0 %637
        %639 = vrot.lane.b32.xlu0 %v522, 16
        %v640 = vpop.permute.xlu0 %639
        %641 = vrot.lane.b32.xlu0 %v524, 16
        %v642 = vpop.permute.xlu0 %641
        %643 = vrot.lane.b32.xlu0 %v526, 16
        %v644 = vpop.permute.xlu0 %643
        %645 = vrot.lane.b32.xlu0 %v528, 16
        %v646 = vpop.permute.xlu0 %645
        %647 = vrot.lane.b32.xlu0 %v530, 16
        %v648 = vpop.permute.xlu0 %647
        %649 = vrot.lane.b32.xlu0 %v532, 16
        %v650 = vpop.permute.xlu0 %649
        %651 = vrot.lane.b32.xlu0 %v534, 16
        %v652 = vpop.permute.xlu0 %651
        %653 = vrot.lane.b32.xlu0 %v521, 16
        %v654 = vpop.permute.xlu0 %653
        %655 = vrot.lane.b32.xlu0 %v523, 16
        %v656 = vpop.permute.xlu0 %655
        %657 = vrot.lane.b32.xlu0 %v525, 16
        %v658 = vpop.permute.xlu0 %657
        %659 = vrot.lane.b32.xlu0 %v527, 16
        %v660 = vpop.permute.xlu0 %659
        %661 = vrot.lane.b32.xlu0 %v529, 16
        %v662 = vpop.permute.xlu0 %661
        %663 = vrot.lane.b32.xlu0 %v531, 16
        %v664 = vpop.permute.xlu0 %663
        %665 = vrot.lane.b32.xlu0 %v533, 16
        %v666 = vpop.permute.xlu0 %665
        %667 = vrot.lane.b32.xlu0 %v535, 16
        %v668 = vpop.permute.xlu0 %667
        %vm669 = vcmp.lt.s32.totalorder %v584, 16
        %v670 = vsel %vm669, %v638, %v654
        %v671 = vsel %vm669, %v640, %v656
        %v672 = vsel %vm669, %v642, %v658
        %v673 = vsel %vm669, %v644, %v660
        %v674 = vsel %vm669, %v646, %v662
        %v675 = vsel %vm669, %v648, %v664
        %v676 = vsel %vm669, %v650, %v666
        %v677 = vsel %vm669, %v652, %v668
        %v678 = vsel %vm669, %v654, %v638
        %v679 = vsel %vm669, %v656, %v640
        %v680 = vsel %vm669, %v658, %v642
        %v681 = vsel %vm669, %v660, %v644
        %v682 = vsel %vm669, %v662, %v646
        %v683 = vsel %vm669, %v664, %v648
        %v684 = vsel %vm669, %v666, %v650
        %v685 = vsel %vm669, %v668, %v652
        %v687 = vlaneseq
        %v688 = vshrl.u32 %v687, 7
        %v689 = vsub.s32 0, %v688
        %v690 = vrot.slane %v538, %v689
        %v691 = vlaneseq
        %v692 = vshrl.u32 %v691, 7
        %v693 = vsub.s32 1, %v692
        %v694 = vrot.slane %v538, %v693
        %v697 = vmul.f32 %v678, %v690
        %v698 = vmul.f32 %v670, %v694
        %v699 = vmul.f32 %v679, %v690
        %v700 = vmul.f32 %v671, %v694
        %v701 = vmul.f32 %v680, %v690
        %v702 = vmul.f32 %v672, %v694
        %v703 = vmul.f32 %v681, %v690
        %v704 = vmul.f32 %v673, %v694
        %v705 = vmul.f32 %v682, %v690
        %v706 = vmul.f32 %v674, %v694
        %v707 = vmul.f32 %v683, %v690
        %v708 = vmul.f32 %v675, %v694
        %v709 = vmul.f32 %v684, %v690
        %v710 = vmul.f32 %v676, %v694
        %v711 = vmul.f32 %v685, %v690
        %v712 = vmul.f32 %v677, %v694
        %v713 = vpack.c.bf16 %v699, %v697
        %v714 = vpack.c.bf16 %v700, %v698
        %v715 = vpack.c.bf16 %v703, %v701
        %v716 = vpack.c.bf16 %v704, %v702
        %v717 = vpack.c.bf16 %v707, %v705
        %v718 = vpack.c.bf16 %v708, %v706
        %v719 = vpack.c.bf16 %v711, %v709
        %v720 = vpack.c.bf16 %v712, %v710
        %721 = vrot.lane.b32.xlu0 %v520, 15
        %v722 = vpop.permute.xlu0 %721
        %723 = vrot.lane.b32.xlu0 %v522, 15
        %v724 = vpop.permute.xlu0 %723
        %725 = vrot.lane.b32.xlu0 %v524, 15
        %v726 = vpop.permute.xlu0 %725
        %727 = vrot.lane.b32.xlu0 %v526, 15
        %v728 = vpop.permute.xlu0 %727
        %729 = vrot.lane.b32.xlu0 %v528, 15
        %v730 = vpop.permute.xlu0 %729
        %731 = vrot.lane.b32.xlu0 %v530, 15
        %v732 = vpop.permute.xlu0 %731
        %733 = vrot.lane.b32.xlu0 %v532, 15
        %v734 = vpop.permute.xlu0 %733
        %735 = vrot.lane.b32.xlu0 %v534, 15
        %v736 = vpop.permute.xlu0 %735
        %737 = vrot.lane.b32.xlu0 %v521, 15
        %v738 = vpop.permute.xlu0 %737
        %739 = vrot.lane.b32.xlu0 %v523, 15
        %v740 = vpop.permute.xlu0 %739
        %741 = vrot.lane.b32.xlu0 %v525, 15
        %v742 = vpop.permute.xlu0 %741
        %743 = vrot.lane.b32.xlu0 %v527, 15
        %v744 = vpop.permute.xlu0 %743
        %745 = vrot.lane.b32.xlu0 %v529, 15
        %v746 = vpop.permute.xlu0 %745
        %747 = vrot.lane.b32.xlu0 %v531, 15
        %v748 = vpop.permute.xlu0 %747
        %749 = vrot.lane.b32.xlu0 %v533, 15
        %v750 = vpop.permute.xlu0 %749
        %751 = vrot.lane.b32.xlu0 %v535, 15
        %v752 = vpop.permute.xlu0 %751
        %vm753 = vcmp.lt.s32.totalorder %v584, 15
        %v754 = vsel %vm753, %v722, %v738
        %v755 = vsel %vm753, %v724, %v740
        %v756 = vsel %vm753, %v726, %v742
        %v757 = vsel %vm753, %v728, %v744
        %v758 = vsel %vm753, %v730, %v746
        %v759 = vsel %vm753, %v732, %v748
        %v760 = vsel %vm753, %v734, %v750
        %v761 = vsel %vm753, %v736, %v752
        %v762 = vsel %vm753, %v738, %v722
        %v763 = vsel %vm753, %v740, %v724
        %v764 = vsel %vm753, %v742, %v726
        %v765 = vsel %vm753, %v744, %v728
        %v766 = vsel %vm753, %v746, %v730
        %v767 = vsel %vm753, %v748, %v732
        %v768 = vsel %vm753, %v750, %v734
        %v769 = vsel %vm753, %v752, %v736
        %v771 = vlaneseq
        %v772 = vshrl.u32 %v771, 7
        %v773 = vsub.s32 0, %v772
        %v774 = vrot.slane %v540, %v773
        %v775 = vlaneseq
        %v776 = vshrl.u32 %v775, 7
        %v777 = vsub.s32 1, %v776
        %v778 = vrot.slane %v540, %v777
        %v781 = vmul.f32 %v762, %v774
        %v782 = vmul.f32 %v754, %v778
        %v783 = vmul.f32 %v763, %v774
        %v784 = vmul.f32 %v755, %v778
        %v785 = vmul.f32 %v764, %v774
        %v786 = vmul.f32 %v756, %v778
        %v787 = vmul.f32 %v765, %v774
        %v788 = vmul.f32 %v757, %v778
        %v789 = vmul.f32 %v766, %v774
        %v790 = vmul.f32 %v758, %v778
        %v791 = vmul.f32 %v767, %v774
        %v792 = vmul.f32 %v759, %v778
        %v793 = vmul.f32 %v768, %v774
        %v794 = vmul.f32 %v760, %v778
        %v795 = vmul.f32 %v769, %v774
        %v796 = vmul.f32 %v761, %v778
        %v797 = vpack.c.bf16 %v783, %v781
        %v798 = vpack.c.bf16 %v784, %v782
        %v799 = vpack.c.bf16 %v787, %v785
        %v800 = vpack.c.bf16 %v788, %v786
        %v801 = vpack.c.bf16 %v791, %v789
        %v802 = vpack.c.bf16 %v792, %v790
        %v803 = vpack.c.bf16 %v795, %v793
        %v804 = vpack.c.bf16 %v796, %v794
        %805 = vrot.lane.b32.xlu0 %v520, 1
        %v806 = vpop.permute.xlu0 %805
        %807 = vrot.lane.b32.xlu0 %v522, 1
        %v808 = vpop.permute.xlu0 %807
        %809 = vrot.lane.b32.xlu0 %v524, 1
        %v810 = vpop.permute.xlu0 %809
        %811 = vrot.lane.b32.xlu0 %v526, 1
        %v812 = vpop.permute.xlu0 %811
        %813 = vrot.lane.b32.xlu0 %v528, 1
        %v814 = vpop.permute.xlu0 %813
        %815 = vrot.lane.b32.xlu0 %v530, 1
        %v816 = vpop.permute.xlu0 %815
        %817 = vrot.lane.b32.xlu0 %v532, 1
        %v818 = vpop.permute.xlu0 %817
        %819 = vrot.lane.b32.xlu0 %v534, 1
        %v820 = vpop.permute.xlu0 %819
        %821 = vrot.lane.b32.xlu0 %v521, 1
        %v822 = vpop.permute.xlu0 %821
        %823 = vrot.lane.b32.xlu0 %v523, 1
        %v824 = vpop.permute.xlu0 %823
        %825 = vrot.lane.b32.xlu0 %v525, 1
        %v826 = vpop.permute.xlu0 %825
        %827 = vrot.lane.b32.xlu0 %v527, 1
        %v828 = vpop.permute.xlu0 %827
        %829 = vrot.lane.b32.xlu0 %v529, 1
        %v830 = vpop.permute.xlu0 %829
        %831 = vrot.lane.b32.xlu0 %v531, 1
        %v832 = vpop.permute.xlu0 %831
        %833 = vrot.lane.b32.xlu0 %v533, 1
        %v834 = vpop.permute.xlu0 %833
        %835 = vrot.lane.b32.xlu0 %v535, 1
        %v836 = vpop.permute.xlu0 %835
        %vm837 = vcmp.lt.s32.totalorder %v584, 1
        %v838 = vsel %vm837, %v806, %v822
        %v839 = vsel %vm837, %v808, %v824
        %v840 = vsel %vm837, %v810, %v826
        %v841 = vsel %vm837, %v812, %v828
        %v842 = vsel %vm837, %v814, %v830
        %v843 = vsel %vm837, %v816, %v832
        %v844 = vsel %vm837, %v818, %v834
        %v845 = vsel %vm837, %v820, %v836
        %v846 = vsel %vm837, %v822, %v806
        %v847 = vsel %vm837, %v824, %v808
        %v848 = vsel %vm837, %v826, %v810
        %v849 = vsel %vm837, %v828, %v812
        %v850 = vsel %vm837, %v830, %v814
        %v851 = vsel %vm837, %v832, %v816
        %v852 = vsel %vm837, %v834, %v818
        %v853 = vsel %vm837, %v836, %v820
        %v855 = vlaneseq
        %v856 = vshrl.u32 %v855, 7
        %v857 = vsub.s32 0, %v856
        %v858 = vrot.slane %v542, %v857
        %v859 = vlaneseq
        %v860 = vshrl.u32 %v859, 7
        %v861 = vsub.s32 1, %v860
        %v862 = vrot.slane %v542, %v861
        %v865 = vmul.f32 %v846, %v858
        %v866 = vmul.f32 %v838, %v862
        %v867 = vmul.f32 %v847, %v858
        %v868 = vmul.f32 %v839, %v862
        %v869 = vmul.f32 %v848, %v858
        %v870 = vmul.f32 %v840, %v862
        %v871 = vmul.f32 %v849, %v858
        %v872 = vmul.f32 %v841, %v862
        %v873 = vmul.f32 %v850, %v858
        %v874 = vmul.f32 %v842, %v862
        %v875 = vmul.f32 %v851, %v858
        %v876 = vmul.f32 %v843, %v862
        %v877 = vmul.f32 %v852, %v858
        %v878 = vmul.f32 %v844, %v862
        %v879 = vmul.f32 %v853, %v858
        %v880 = vmul.f32 %v845, %v862
        %v881 = vpack.c.bf16 %v867, %v865
        %v882 = vpack.c.bf16 %v868, %v866
        %v883 = vpack.c.bf16 %v871, %v869
        %v884 = vpack.c.bf16 %v872, %v870
        %v885 = vpack.c.bf16 %v875, %v873
        %v886 = vpack.c.bf16 %v876, %v874
        %v887 = vpack.c.bf16 %v879, %v877
        %v888 = vpack.c.bf16 %v880, %v878
        %v889 = vpack.c.bf16 %v522, %v520
        %v890 = vpack.c.bf16 %v523, %v521
        %v891 = vpack.c.bf16 %v526, %v524
        %v892 = vpack.c.bf16 %v527, %v525
        %v893 = vpack.c.bf16 %v530, %v528
        %v894 = vpack.c.bf16 %v531, %v529
        %v895 = vpack.c.bf16 %v534, %v532
        %v896 = vpack.c.bf16 %v535, %v533
        %897 = vrot.lane.b32.xlu0 %v520, 127
        %v898 = vpop.permute.xlu0 %897
        %899 = vrot.lane.b32.xlu0 %v522, 127
        %v900 = vpop.permute.xlu0 %899
        %901 = vrot.lane.b32.xlu0 %v524, 127
        %v902 = vpop.permute.xlu0 %901
        %903 = vrot.lane.b32.xlu0 %v526, 127
        %v904 = vpop.permute.xlu0 %903
        %905 = vrot.lane.b32.xlu0 %v528, 127
        %v906 = vpop.permute.xlu0 %905
        %907 = vrot.lane.b32.xlu0 %v530, 127
        %v908 = vpop.permute.xlu0 %907
        %909 = vrot.lane.b32.xlu0 %v532, 127
        %v910 = vpop.permute.xlu0 %909
        %911 = vrot.lane.b32.xlu0 %v534, 127
        %v912 = vpop.permute.xlu0 %911
        %913 = vrot.lane.b32.xlu0 %v521, 127
        %v914 = vpop.permute.xlu0 %913
        %915 = vrot.lane.b32.xlu0 %v523, 127
        %v916 = vpop.permute.xlu0 %915
        %917 = vrot.lane.b32.xlu0 %v525, 127
        %v918 = vpop.permute.xlu0 %917
        %919 = vrot.lane.b32.xlu0 %v527, 127
        %v920 = vpop.permute.xlu0 %919
        %921 = vrot.lane.b32.xlu0 %v529, 127
        %v922 = vpop.permute.xlu0 %921
        %923 = vrot.lane.b32.xlu0 %v531, 127
        %v924 = vpop.permute.xlu0 %923
        %925 = vrot.lane.b32.xlu0 %v533, 127
        %v926 = vpop.permute.xlu0 %925
        %927 = vrot.lane.b32.xlu0 %v535, 127
        %v928 = vpop.permute.xlu0 %927
        %vm929 = vcmp.lt.s32.totalorder %v584, 127
        %v930 = vsel %vm929, %v898, %v914
        %v931 = vsel %vm929, %v900, %v916
        %v932 = vsel %vm929, %v902, %v918
        %v933 = vsel %vm929, %v904, %v920
        %v934 = vsel %vm929, %v906, %v922
        %v935 = vsel %vm929, %v908, %v924
        %v936 = vsel %vm929, %v910, %v926
        %v937 = vsel %vm929, %v912, %v928
        %v938 = vsel %vm929, %v914, %v898
        %v939 = vsel %vm929, %v916, %v900
        %v940 = vsel %vm929, %v918, %v902
        %v941 = vsel %vm929, %v920, %v904
        %v942 = vsel %vm929, %v922, %v906
        %v943 = vsel %vm929, %v924, %v908
        %v944 = vsel %vm929, %v926, %v910
        %v945 = vsel %vm929, %v928, %v912
        %v947 = vlaneseq
        %v948 = vshrl.u32 %v947, 7
        %v949 = vsub.s32 0, %v948
        %v950 = vrot.slane %v544, %v949
        %v951 = vlaneseq
        %v952 = vshrl.u32 %v951, 7
        %v953 = vsub.s32 1, %v952
        %v954 = vrot.slane %v544, %v953
        %v957 = vmul.f32 %v930, %v950
        %v958 = vmul.f32 %v938, %v954
        %v959 = vmul.f32 %v931, %v950
        %v960 = vmul.f32 %v939, %v954
        %v961 = vmul.f32 %v932, %v950
        %v962 = vmul.f32 %v940, %v954
        %v963 = vmul.f32 %v933, %v950
        %v964 = vmul.f32 %v941, %v954
        %v965 = vmul.f32 %v934, %v950
        %v966 = vmul.f32 %v942, %v954
        %v967 = vmul.f32 %v935, %v950
        %v968 = vmul.f32 %v943, %v954
        %v969 = vmul.f32 %v936, %v950
        %v970 = vmul.f32 %v944, %v954
        %v971 = vmul.f32 %v937, %v950
        %v972 = vmul.f32 %v945, %v954
        %v973 = vpack.c.bf16 %v959, %v957
        %v974 = vpack.c.bf16 %v960, %v958
        %v975 = vpack.c.bf16 %v963, %v961
        %v976 = vpack.c.bf16 %v964, %v962
        %v977 = vpack.c.bf16 %v967, %v965
        %v978 = vpack.c.bf16 %v968, %v966
        %v979 = vpack.c.bf16 %v971, %v969
        %v980 = vpack.c.bf16 %v972, %v970
        %981 = vrot.lane.b32.xlu0 %v520, 113
        %v982 = vpop.permute.xlu0 %981
        %983 = vrot.lane.b32.xlu0 %v522, 113
        %v984 = vpop.permute.xlu0 %983
        %985 = vrot.lane.b32.xlu0 %v524, 113
        %v986 = vpop.permute.xlu0 %985
        %987 = vrot.lane.b32.xlu0 %v526, 113
        %v988 = vpop.permute.xlu0 %987
        %989 = vrot.lane.b32.xlu0 %v528, 113
        %v990 = vpop.permute.xlu0 %989
        %991 = vrot.lane.b32.xlu0 %v530, 113
        %v992 = vpop.permute.xlu0 %991
        %993 = vrot.lane.b32.xlu0 %v532, 113
        %v994 = vpop.permute.xlu0 %993
        %995 = vrot.lane.b32.xlu0 %v534, 113
        %v996 = vpop.permute.xlu0 %995
        %997 = vrot.lane.b32.xlu0 %v521, 113
        %v998 = vpop.permute.xlu0 %997
        %999 = vrot.lane.b32.xlu0 %v523, 113
        %v1000 = vpop.permute.xlu0 %999
        %1001 = vrot.lane.b32.xlu0 %v525, 113
        %v1002 = vpop.permute.xlu0 %1001
        %1003 = vrot.lane.b32.xlu0 %v527, 113
        %v1004 = vpop.permute.xlu0 %1003
        %1005 = vrot.lane.b32.xlu0 %v529, 113
        %v1006 = vpop.permute.xlu0 %1005
        %1007 = vrot.lane.b32.xlu0 %v531, 113
        %v1008 = vpop.permute.xlu0 %1007
        %1009 = vrot.lane.b32.xlu0 %v533, 113
        %v1010 = vpop.permute.xlu0 %1009
        %1011 = vrot.lane.b32.xlu0 %v535, 113
        %v1012 = vpop.permute.xlu0 %1011
        %vm1013 = vcmp.lt.s32.totalorder %v584, 113
        %v1014 = vsel %vm1013, %v982, %v998
        %v1015 = vsel %vm1013, %v984, %v1000
        %v1016 = vsel %vm1013, %v986, %v1002
        %v1017 = vsel %vm1013, %v988, %v1004
        %v1018 = vsel %vm1013, %v990, %v1006
        %v1019 = vsel %vm1013, %v992, %v1008
        %v1020 = vsel %vm1013, %v994, %v1010
        %v1021 = vsel %vm1013, %v996, %v1012
        %v1022 = vsel %vm1013, %v998, %v982
        %v1023 = vsel %vm1013, %v1000, %v984
        %v1024 = vsel %vm1013, %v1002, %v986
        %v1025 = vsel %vm1013, %v1004, %v988
        %v1026 = vsel %vm1013, %v1006, %v990
        %v1027 = vsel %vm1013, %v1008, %v992
        %v1028 = vsel %vm1013, %v1010, %v994
        %v1029 = vsel %vm1013, %v1012, %v996
        %v1031 = vlaneseq
        %v1032 = vshrl.u32 %v1031, 7
        %v1033 = vsub.s32 0, %v1032
        %v1034 = vrot.slane %v546, %v1033
        %v1035 = vlaneseq
        %v1036 = vshrl.u32 %v1035, 7
        %v1037 = vsub.s32 1, %v1036
        %v1038 = vrot.slane %v546, %v1037
        %v1041 = vmul.f32 %v1014, %v1034
        %v1042 = vmul.f32 %v1022, %v1038
        %v1043 = vmul.f32 %v1015, %v1034
        %v1044 = vmul.f32 %v1023, %v1038
        %v1045 = vmul.f32 %v1016, %v1034
        %v1046 = vmul.f32 %v1024, %v1038
        %v1047 = vmul.f32 %v1017, %v1034
        %v1048 = vmul.f32 %v1025, %v1038
        %v1049 = vmul.f32 %v1018, %v1034
        %v1050 = vmul.f32 %v1026, %v1038
        %v1051 = vmul.f32 %v1019, %v1034
        %v1052 = vmul.f32 %v1027, %v1038
        %v1053 = vmul.f32 %v1020, %v1034
        %v1054 = vmul.f32 %v1028, %v1038
        %v1055 = vmul.f32 %v1021, %v1034
        %v1056 = vmul.f32 %v1029, %v1038
        %v1057 = vpack.c.bf16 %v1043, %v1041
        %v1058 = vpack.c.bf16 %v1044, %v1042
        %v1059 = vpack.c.bf16 %v1047, %v1045
        %v1060 = vpack.c.bf16 %v1048, %v1046
        %v1061 = vpack.c.bf16 %v1051, %v1049
        %v1062 = vpack.c.bf16 %v1052, %v1050
        %v1063 = vpack.c.bf16 %v1055, %v1053
        %v1064 = vpack.c.bf16 %v1056, %v1054
        %1065 = vrot.lane.b32.xlu0 %v520, 112
        %v1066 = vpop.permute.xlu0 %1065
        %1067 = vrot.lane.b32.xlu0 %v522, 112
        %v1068 = vpop.permute.xlu0 %1067
        %1069 = vrot.lane.b32.xlu0 %v524, 112
        %v1070 = vpop.permute.xlu0 %1069
        %1071 = vrot.lane.b32.xlu0 %v526, 112
        %v1072 = vpop.permute.xlu0 %1071
        %1073 = vrot.lane.b32.xlu0 %v528, 112
        %v1074 = vpop.permute.xlu0 %1073
        %1075 = vrot.lane.b32.xlu0 %v530, 112
        %v1076 = vpop.permute.xlu0 %1075
        %1077 = vrot.lane.b32.xlu0 %v532, 112
        %v1078 = vpop.permute.xlu0 %1077
        %1079 = vrot.lane.b32.xlu0 %v534, 112
        %v1080 = vpop.permute.xlu0 %1079
        %1081 = vrot.lane.b32.xlu0 %v521, 112
        %v1082 = vpop.permute.xlu0 %1081
        %1083 = vrot.lane.b32.xlu0 %v523, 112
        %v1084 = vpop.permute.xlu0 %1083
        %1085 = vrot.lane.b32.xlu0 %v525, 112
        %v1086 = vpop.permute.xlu0 %1085
        %1087 = vrot.lane.b32.xlu0 %v527, 112
        %v1088 = vpop.permute.xlu0 %1087
        %1089 = vrot.lane.b32.xlu0 %v529, 112
        %v1090 = vpop.permute.xlu0 %1089
        %1091 = vrot.lane.b32.xlu0 %v531, 112
        %v1092 = vpop.permute.xlu0 %1091
        %1093 = vrot.lane.b32.xlu0 %v533, 112
        %v1094 = vpop.permute.xlu0 %1093
        %1095 = vrot.lane.b32.xlu0 %v535, 112
        %v1096 = vpop.permute.xlu0 %1095
        %vm1097 = vcmp.lt.s32.totalorder %v584, 112
        %v1098 = vsel %vm1097, %v1066, %v1082
        %v1099 = vsel %vm1097, %v1068, %v1084
        %v1100 = vsel %vm1097, %v1070, %v1086
        %v1101 = vsel %vm1097, %v1072, %v1088
        %v1102 = vsel %vm1097, %v1074, %v1090
        %v1103 = vsel %vm1097, %v1076, %v1092
        %v1104 = vsel %vm1097, %v1078, %v1094
        %v1105 = vsel %vm1097, %v1080, %v1096
        %v1106 = vsel %vm1097, %v1082, %v1066
        %v1107 = vsel %vm1097, %v1084, %v1068
        %v1108 = vsel %vm1097, %v1086, %v1070
        %v1109 = vsel %vm1097, %v1088, %v1072
        %v1110 = vsel %vm1097, %v1090, %v1074
        %v1111 = vsel %vm1097, %v1092, %v1076
        %v1112 = vsel %vm1097, %v1094, %v1078
        %v1113 = vsel %vm1097, %v1096, %v1080
        %v1115 = vlaneseq
        %v1116 = vshrl.u32 %v1115, 7
        %v1117 = vsub.s32 0, %v1116
        %v1118 = vrot.slane %v548, %v1117
        %v1119 = vlaneseq
        %v1120 = vshrl.u32 %v1119, 7
        %v1121 = vsub.s32 1, %v1120
        %v1122 = vrot.slane %v548, %v1121
        %v1125 = vmul.f32 %v1098, %v1118
        %v1126 = vmul.f32 %v1106, %v1122
        %v1127 = vmul.f32 %v1099, %v1118
        %v1128 = vmul.f32 %v1107, %v1122
        %v1129 = vmul.f32 %v1100, %v1118
        %v1130 = vmul.f32 %v1108, %v1122
        %v1131 = vmul.f32 %v1101, %v1118
        %v1132 = vmul.f32 %v1109, %v1122
        %v1133 = vmul.f32 %v1102, %v1118
        %v1134 = vmul.f32 %v1110, %v1122
        %v1135 = vmul.f32 %v1103, %v1118
        %v1136 = vmul.f32 %v1111, %v1122
        %v1137 = vmul.f32 %v1104, %v1118
        %v1138 = vmul.f32 %v1112, %v1122
        %v1139 = vmul.f32 %v1105, %v1118
        %v1140 = vmul.f32 %v1113, %v1122
        %v1141 = vpack.c.bf16 %v1127, %v1125
        %v1142 = vpack.c.bf16 %v1128, %v1126
        %v1143 = vpack.c.bf16 %v1131, %v1129
        %v1144 = vpack.c.bf16 %v1132, %v1130
        %v1145 = vpack.c.bf16 %v1135, %v1133
        %v1146 = vpack.c.bf16 %v1136, %v1134
        %v1147 = vpack.c.bf16 %v1139, %v1137
        %v1148 = vpack.c.bf16 %v1140, %v1138
        %1149 = vrot.lane.b32.xlu0 %v520, 111
        %v1150 = vpop.permute.xlu0 %1149
        %1151 = vrot.lane.b32.xlu0 %v522, 111
        %v1152 = vpop.permute.xlu0 %1151
        %1153 = vrot.lane.b32.xlu0 %v524, 111
        %v1154 = vpop.permute.xlu0 %1153
        %1155 = vrot.lane.b32.xlu0 %v526, 111
        %v1156 = vpop.permute.xlu0 %1155
        %1157 = vrot.lane.b32.xlu0 %v528, 111
        %v1158 = vpop.permute.xlu0 %1157
        %1159 = vrot.lane.b32.xlu0 %v530, 111
        %v1160 = vpop.permute.xlu0 %1159
        %1161 = vrot.lane.b32.xlu0 %v532, 111
        %v1162 = vpop.permute.xlu0 %1161
        %1163 = vrot.lane.b32.xlu0 %v534, 111
        %v1164 = vpop.permute.xlu0 %1163
        %1165 = vrot.lane.b32.xlu0 %v521, 111
        %v1166 = vpop.permute.xlu0 %1165
        %1167 = vrot.lane.b32.xlu0 %v523, 111
        %v1168 = vpop.permute.xlu0 %1167
        %1169 = vrot.lane.b32.xlu0 %v525, 111
        %v1170 = vpop.permute.xlu0 %1169
        %1171 = vrot.lane.b32.xlu0 %v527, 111
        %v1172 = vpop.permute.xlu0 %1171
        %1173 = vrot.lane.b32.xlu0 %v529, 111
        %v1174 = vpop.permute.xlu0 %1173
        %1175 = vrot.lane.b32.xlu0 %v531, 111
        %v1176 = vpop.permute.xlu0 %1175
        %1177 = vrot.lane.b32.xlu0 %v533, 111
        %v1178 = vpop.permute.xlu0 %1177
        %1179 = vrot.lane.b32.xlu0 %v535, 111
        %v1180 = vpop.permute.xlu0 %1179
        %vm1181 = vcmp.lt.s32.totalorder %v584, 111
        %v1182 = vsel %vm1181, %v1150, %v1166
        %v1183 = vsel %vm1181, %v1152, %v1168
        %v1184 = vsel %vm1181, %v1154, %v1170
        %v1185 = vsel %vm1181, %v1156, %v1172
        %v1186 = vsel %vm1181, %v1158, %v1174
        %v1187 = vsel %vm1181, %v1160, %v1176
        %v1188 = vsel %vm1181, %v1162, %v1178
        %v1189 = vsel %vm1181, %v1164, %v1180
        %v1190 = vsel %vm1181, %v1166, %v1150
        %v1191 = vsel %vm1181, %v1168, %v1152
        %v1192 = vsel %vm1181, %v1170, %v1154
        %v1193 = vsel %vm1181, %v1172, %v1156
        %v1194 = vsel %vm1181, %v1174, %v1158
        %v1195 = vsel %vm1181, %v1176, %v1160
        %v1196 = vsel %vm1181, %v1178, %v1162
        %v1197 = vsel %vm1181, %v1180, %v1164
        %v1199 = vlaneseq
        %v1200 = vshrl.u32 %v1199, 7
        %v1201 = vsub.s32 0, %v1200
        %v1202 = vrot.slane %v550, %v1201
        %v1203 = vlaneseq
        %v1204 = vshrl.u32 %v1203, 7
        %v1205 = vsub.s32 1, %v1204
        %v1206 = vrot.slane %v550, %v1205
        %v1209 = vmul.f32 %v1182, %v1202
        %v1210 = vmul.f32 %v1190, %v1206
        %v1211 = vmul.f32 %v1183, %v1202
        %v1212 = vmul.f32 %v1191, %v1206
        %v1213 = vmul.f32 %v1184, %v1202
        %v1214 = vmul.f32 %v1192, %v1206
        %v1215 = vmul.f32 %v1185, %v1202
        %v1216 = vmul.f32 %v1193, %v1206
        %v1217 = vmul.f32 %v1186, %v1202
        %v1218 = vmul.f32 %v1194, %v1206
        %v1219 = vmul.f32 %v1187, %v1202
        %v1220 = vmul.f32 %v1195, %v1206
        %v1221 = vmul.f32 %v1188, %v1202
        %v1222 = vmul.f32 %v1196, %v1206
        %v1223 = vmul.f32 %v1189, %v1202
        %v1224 = vmul.f32 %v1197, %v1206
        %v1225 = vpack.c.bf16 %v1211, %v1209
        %v1226 = vpack.c.bf16 %v1212, %v1210
        %v1227 = vpack.c.bf16 %v1215, %v1213
        %v1228 = vpack.c.bf16 %v1216, %v1214
        %v1229 = vpack.c.bf16 %v1219, %v1217
        %v1230 = vpack.c.bf16 %v1220, %v1218
        %v1231 = vpack.c.bf16 %v1223, %v1221
        %v1232 = vpack.c.bf16 %v1224, %v1222
        %v1233 = vld [vmem:[%s2] sm:$0xff]
        %v1234 = vld [vmem:[%s2 + $0x8] sm:$0xff]
        %v1235 = vld [vmem:[%s2 + $0x10] sm:$0xf]
        %v1236 = vld [vmem:[%s2 + $0x14] sm:$0xff]
        %v1237 = vld [vmem:[%s2 + $0x1c] sm:$0xff]
        %v1238 = vld [vmem:[%s2 + $0x24] sm:$0xf]
        %v1239 = vld [vmem:[%s2 + $0x28] sm:$0xff]
        %v1240 = vld [vmem:[%s2 + $0x30] sm:$0xff]
        %v1241 = vld [vmem:[%s2 + $0x38] sm:$0xf]
        %v1242 = vld [vmem:[%s2 + $0x3c] sm:$0xff]
        %v1243 = vld [vmem:[%s2 + $0x44] sm:$0xff]
        %v1244 = vld [vmem:[%s2 + $0x4c] sm:$0xf]
        %v1245 = vld [vmem:[%s2 + $0x50] sm:$0xff]
        %v1246 = vld [vmem:[%s2 + $0x58] sm:$0xff]
        %v1247 = vld [vmem:[%s2 + $0x60] sm:$0xf]
        %v1248 = vld [vmem:[%s2 + $0x64] sm:$0xff]
        %v1249 = vld [vmem:[%s2 + $0x6c] sm:$0xff]
        %v1250 = vld [vmem:[%s2 + $0x74] sm:$0xf]
        %v1251 = vld [vmem:[%s2 + $0x78] sm:$0xff]
        %v1252 = vld [vmem:[%s2 + $0x80] sm:$0xff]
        %v1253 = vld [vmem:[%s2 + $0x88] sm:$0xf]
        %v1254 = vld [vmem:[%s2 + $0x8c] sm:$0xff]
        %v1255 = vld [vmem:[%s2 + $0x94] sm:$0xff]
        %v1256 = vld [vmem:[%s2 + $0x9c] sm:$0xf]
        %v1257 = vld [vmem:[%s2 + $0xa0] sm:$0xff]
        %v1258 = vld [vmem:[%s2 + $0xa8] sm:$0xff]
        %v1259 = vld [vmem:[%s2 + $0xb0] sm:$0xf]
        %v1260 = vld [vmem:[%s2 + $0xb4] sm:$0xff]
        %v1261 = vld [vmem:[%s2 + $0xbc] sm:$0xff]
        %v1262 = vld [vmem:[%s2 + $0xc4] sm:$0xf]
        %v1263 = vld [vmem:[%s2 + $0xc8] sm:$0xff]
        %v1264 = vld [vmem:[%s2 + $0xd0] sm:$0xff]
        %v1265 = vld [vmem:[%s2 + $0xd8] sm:$0xf]
        %v1266 = vld [vmem:[%s2 + $0xdc] sm:$0xff]
        %v1267 = vld [vmem:[%s2 + $0xe4] sm:$0xff]
        %v1268 = vld [vmem:[%s2 + $0xec] sm:$0xf]
        %v1269 = vld [vmem:[%s2 + $0xf0] sm:$0xff]
        %v1270 = vld [vmem:[%s2 + $0xf8] sm:$0xff]
        %v1271 = vld [vmem:[%s2 + $0x100] sm:$0xf]
        %v1272 = vld [vmem:[%s2 + $0x104] sm:$0xff]
        %v1273 = vld [vmem:[%s2 + $0x10c] sm:$0xff]
        %v1274 = vld [vmem:[%s2 + $0x114] sm:$0xf]
        %v1275 = vld [vmem:[%s2 + $0x118] sm:$0xff]
        %v1276 = vld [vmem:[%s2 + $0x120] sm:$0xff]
        %v1277 = vld [vmem:[%s2 + $0x128] sm:$0xf]
        %v1278 = vld [vmem:[%s2 + $0x12c] sm:$0xff]
        %v1279 = vld [vmem:[%s2 + $0x134] sm:$0xff]
        %v1280 = vld [vmem:[%s2 + $0x13c] sm:$0xf]
        %v1281 = vld [vmem:[%s3] sm:$0xff]
        %v1282 = vld [vmem:[%s3 + $0x8] sm:$0xff]
        %v1283 = vld [vmem:[%s3 + $0x10] sm:$0xff]
        %v1284 = vld [vmem:[%s3 + $0x18] sm:$0xff]
        %v1285 = vld [vmem:[%s3 + $0x20] sm:$0xff]
        %v1286 = vld [vmem:[%s3 + $0x28] sm:$0xff]
        %v1287 = vld [vmem:[%s3 + $0x30] sm:$0xff]
        %v1288 = vld [vmem:[%s3 + $0x38] sm:$0xff]
        %v1289 = vld [vmem:[%s3 + $0x40] sm:$0xff]
        %v1290 = vld [vmem:[%s3 + $0x48] sm:$0xff]
        %v1291 = vld [vmem:[%s3 + $0x50] sm:$0xff]
        %v1292 = vld [vmem:[%s3 + $0x58] sm:$0xff]
        %v1293 = vld [vmem:[%s3 + $0x60] sm:$0xff]
        %v1294 = vld [vmem:[%s3 + $0x68] sm:$0xff]
        %v1295 = vld [vmem:[%s3 + $0x70] sm:$0xff]
        %v1296 = vld [vmem:[%s3 + $0x78] sm:$0xff]
        %1298 = vset.pattern.permute.xlu0 0
        %1299 = vperm.xlu0 %1298, %v1281
        %v1300 = vpop.permute.xlu0 %1299
        %1303 = vset.pattern.permute.xlu0 0
        %1304 = vperm.xlu0 %1303, %v1282
        %v1305 = vpop.permute.xlu0 %1304
        %1308 = vset.pattern.permute.xlu0 0
        %1309 = vperm.xlu0 %1308, %v1283
        %v1310 = vpop.permute.xlu0 %1309
        %1313 = vset.pattern.permute.xlu0 0
        %1314 = vperm.xlu0 %1313, %v1284
        %v1315 = vpop.permute.xlu0 %1314
        %1318 = vset.pattern.permute.xlu0 0
        %1319 = vperm.xlu0 %1318, %v1285
        %v1320 = vpop.permute.xlu0 %1319
        %1323 = vset.pattern.permute.xlu0 0
        %1324 = vperm.xlu0 %1323, %v1286
        %v1325 = vpop.permute.xlu0 %1324
        %1328 = vset.pattern.permute.xlu0 0
        %1329 = vperm.xlu0 %1328, %v1287
        %v1330 = vpop.permute.xlu0 %1329
        %1333 = vset.pattern.permute.xlu0 0
        %1334 = vperm.xlu0 %1333, %v1288
        %v1335 = vpop.permute.xlu0 %1334
        %1338 = vset.pattern.permute.xlu0 0
        %1339 = vperm.xlu0 %1338, %v1289
        %v1340 = vpop.permute.xlu0 %1339
        %1343 = vset.pattern.permute.xlu0 0
        %1344 = vperm.xlu0 %1343, %v1290
        %v1345 = vpop.permute.xlu0 %1344
        %1348 = vset.pattern.permute.xlu0 0
        %1349 = vperm.xlu0 %1348, %v1291
        %v1350 = vpop.permute.xlu0 %1349
        %1353 = vset.pattern.permute.xlu0 0
        %1354 = vperm.xlu0 %1353, %v1292
        %v1355 = vpop.permute.xlu0 %1354
        %1358 = vset.pattern.permute.xlu0 0
        %1359 = vperm.xlu0 %1358, %v1293
        %v1360 = vpop.permute.xlu0 %1359
        %1363 = vset.pattern.permute.xlu0 0
        %1364 = vperm.xlu0 %1363, %v1294
        %v1365 = vpop.permute.xlu0 %1364
        %1368 = vset.pattern.permute.xlu0 0
        %1369 = vperm.xlu0 %1368, %v1295
        %v1370 = vpop.permute.xlu0 %1369
        %1373 = vset.pattern.permute.xlu0 0
        %1374 = vperm.xlu0 %1373, %v1296
        %v1375 = vpop.permute.xlu0 %1374
        %v1425 = vunpack.c.l.b16 %v1233
        %v1426 = vunpack.c.h.b16 %v1233
        %v1427 = vunpack.c.l.b16 %v1234
        %v1428 = vunpack.c.h.b16 %v1234
        %v1429 = vunpack.c.l.b16 %v1235
        %v1430 = vunpack.c.l.b16 %v1236
        %v1431 = vunpack.c.h.b16 %v1236
        %v1432 = vunpack.c.l.b16 %v1237
        %v1433 = vunpack.c.h.b16 %v1237
        %v1434 = vunpack.c.l.b16 %v1238
        %v1435 = vunpack.c.l.b16 %v1239
        %v1436 = vunpack.c.h.b16 %v1239
        %v1437 = vunpack.c.l.b16 %v1240
        %v1438 = vunpack.c.h.b16 %v1240
        %v1439 = vunpack.c.l.b16 %v1241
        %v1440 = vunpack.c.l.b16 %v1242
        %v1441 = vunpack.c.h.b16 %v1242
        %v1442 = vunpack.c.l.b16 %v1243
        %v1443 = vunpack.c.h.b16 %v1243
        %v1444 = vunpack.c.l.b16 %v1244
        %v1445 = vunpack.c.l.b16 %v1245
        %v1446 = vunpack.c.h.b16 %v1245
        %v1447 = vunpack.c.l.b16 %v1246
        %v1448 = vunpack.c.h.b16 %v1246
        %v1449 = vunpack.c.l.b16 %v1247
        %v1450 = vunpack.c.l.b16 %v1248
        %v1451 = vunpack.c.h.b16 %v1248
        %v1452 = vunpack.c.l.b16 %v1249
        %v1453 = vunpack.c.h.b16 %v1249
        %v1454 = vunpack.c.l.b16 %v1250
        %v1455 = vunpack.c.l.b16 %v1251
        %v1456 = vunpack.c.h.b16 %v1251
        %v1457 = vunpack.c.l.b16 %v1252
        %v1458 = vunpack.c.h.b16 %v1252
        %v1459 = vunpack.c.l.b16 %v1253
        %v1460 = vunpack.c.l.b16 %v1254
        %v1461 = vunpack.c.h.b16 %v1254
        %v1462 = vunpack.c.l.b16 %v1255
        %v1463 = vunpack.c.h.b16 %v1255
        %v1464 = vunpack.c.l.b16 %v1256
        %v1465 = vunpack.c.l.b16 %v1257
        %v1466 = vunpack.c.h.b16 %v1257
        %v1467 = vunpack.c.l.b16 %v1258
        %v1468 = vunpack.c.h.b16 %v1258
        %v1469 = vunpack.c.l.b16 %v1259
        %v1470 = vunpack.c.l.b16 %v1260
        %v1471 = vunpack.c.h.b16 %v1260
        %v1472 = vunpack.c.l.b16 %v1261
        %v1473 = vunpack.c.h.b16 %v1261
        %v1474 = vunpack.c.l.b16 %v1262
        %v1475 = vunpack.c.l.b16 %v1263
        %v1476 = vunpack.c.h.b16 %v1263
        %v1477 = vunpack.c.l.b16 %v1264
        %v1478 = vunpack.c.h.b16 %v1264
        %v1479 = vunpack.c.l.b16 %v1265
        %v1480 = vunpack.c.l.b16 %v1266
        %v1481 = vunpack.c.h.b16 %v1266
        %v1482 = vunpack.c.l.b16 %v1267
        %v1483 = vunpack.c.h.b16 %v1267
        %v1484 = vunpack.c.l.b16 %v1268
        %v1485 = vunpack.c.l.b16 %v1269
        %v1486 = vunpack.c.h.b16 %v1269
        %v1487 = vunpack.c.l.b16 %v1270
        %v1488 = vunpack.c.h.b16 %v1270
        %v1489 = vunpack.c.l.b16 %v1271
        %v1490 = vunpack.c.l.b16 %v1272
        %v1491 = vunpack.c.h.b16 %v1272
        %v1492 = vunpack.c.l.b16 %v1273
        %v1493 = vunpack.c.h.b16 %v1273
        %v1494 = vunpack.c.l.b16 %v1274
        %v1495 = vunpack.c.l.b16 %v1275
        %v1496 = vunpack.c.h.b16 %v1275
        %v1497 = vunpack.c.l.b16 %v1276
        %v1498 = vunpack.c.h.b16 %v1276
        %v1499 = vunpack.c.l.b16 %v1277
        %v1500 = vunpack.c.l.b16 %v1278
        %v1501 = vunpack.c.h.b16 %v1278
        %v1502 = vunpack.c.l.b16 %v1279
        %v1503 = vunpack.c.h.b16 %v1279
        %v1504 = vunpack.c.l.b16 %v1280
        %v1505 = vpack.c.b16 %v1430, %v1425
        %v1506 = vpack.c.b16 %v1431, %v1426
        %v1507 = vpack.c.b16 %v1432, %v1427
        %v1508 = vpack.c.b16 %v1433, %v1428
        %v1509 = vpack.c.b16 %v1434, %v1429
        %v1510 = vpack.c.b16 %v1440, %v1435
        %v1511 = vpack.c.b16 %v1441, %v1436
        %v1512 = vpack.c.b16 %v1442, %v1437
        %v1513 = vpack.c.b16 %v1443, %v1438
        %v1514 = vpack.c.b16 %v1444, %v1439
        %v1515 = vpack.c.b16 %v1450, %v1445
        %v1516 = vpack.c.b16 %v1451, %v1446
        %v1517 = vpack.c.b16 %v1452, %v1447
        %v1518 = vpack.c.b16 %v1453, %v1448
        %v1519 = vpack.c.b16 %v1454, %v1449
        %v1520 = vpack.c.b16 %v1460, %v1455
        %v1521 = vpack.c.b16 %v1461, %v1456
        %v1522 = vpack.c.b16 %v1462, %v1457
        %v1523 = vpack.c.b16 %v1463, %v1458
        %v1524 = vpack.c.b16 %v1464, %v1459
        %v1525 = vpack.c.b16 %v1470, %v1465
        %v1526 = vpack.c.b16 %v1471, %v1466
        %v1527 = vpack.c.b16 %v1472, %v1467
        %v1528 = vpack.c.b16 %v1473, %v1468
        %v1529 = vpack.c.b16 %v1474, %v1469
        %v1530 = vpack.c.b16 %v1480, %v1475
        %v1531 = vpack.c.b16 %v1481, %v1476
        %v1532 = vpack.c.b16 %v1482, %v1477
        %v1533 = vpack.c.b16 %v1483, %v1478
        %v1534 = vpack.c.b16 %v1484, %v1479
        %v1535 = vpack.c.b16 %v1490, %v1485
        %v1536 = vpack.c.b16 %v1491, %v1486
        %v1537 = vpack.c.b16 %v1492, %v1487
        %v1538 = vpack.c.b16 %v1493, %v1488
        %v1539 = vpack.c.b16 %v1494, %v1489
        %v1540 = vpack.c.b16 %v1500, %v1495
        %v1541 = vpack.c.b16 %v1501, %v1496
        %v1542 = vpack.c.b16 %v1502, %v1497
        %v1543 = vpack.c.b16 %v1503, %v1498
        %v1544 = vpack.c.b16 %v1504, %v1499
        %vm1577 = vcmask 523264
        %v1579 = vsel %vm1577, %v1509, 0
        %v1582 = vsel %vm1577, %v1514, 0
        %v1585 = vsel %vm1577, %v1519, 0
        %v1588 = vsel %vm1577, %v1524, 0
        %v1591 = vsel %vm1577, %v1529, 0
        %v1594 = vsel %vm1577, %v1534, 0
        %v1597 = vsel %vm1577, %v1539, 0
        %v1600 = vsel %vm1577, %v1544, 0
        %1602 = vmatprep.subr.bf16.mxu0 %v630
        %1603 = vmatpush1.bf16.msra.mxu0 %v629
        %1604 = vmatprep.subr.bf16.mxu0 %v632
        %1605 = vmatpush1.bf16.msra.mxu0 %v631
        %1606 = vmatprep.subr.bf16.mxu0 %v634
        %1607 = vmatpush1.bf16.msra.mxu0 %v633
        %1608 = vmatprep.subr.bf16.mxu0 %v636
        %1609 = vmatpush1.bf16.msra.mxu0 %v635
        %1610 = vmatprep.subr.bf16.mxu0 %v714
        %1611 = vmatpush1.bf16.msra.mxu0 %v713
        %1612 = vmatprep.subr.bf16.mxu0 %v716
        %1613 = vmatpush1.bf16.msra.mxu0 %v715
        %1614 = vmatprep.subr.bf16.mxu0 %v718
        %1615 = vmatpush1.bf16.msra.mxu0 %v717
        %1616 = vmatprep.subr.bf16.mxu0 %v720
        %1617 = vmatpush1.bf16.msra.mxu0 %v719
        %1618 = vmatprep.subr.bf16.mxu0 %v798
        %1619 = vmatpush1.bf16.msra.mxu0 %v797
        %1620 = vmatprep.subr.bf16.mxu0 %v800
        %1621 = vmatpush1.bf16.msra.mxu0 %v799
        %1622 = vmatprep.subr.bf16.mxu0 %v802
        %1623 = vmatpush1.bf16.msra.mxu0 %v801
        %1624 = vmatprep.subr.bf16.mxu0 %v804
        %1625 = vmatpush1.bf16.msra.mxu0 %v803
        %1626 = vmatprep.subr.bf16.mxu0 %v882
        %1627 = vmatpush1.bf16.msra.mxu0 %v881
        %1628 = vmatprep.subr.bf16.mxu0 %v884
        %1629 = vmatpush1.bf16.msra.mxu0 %v883
        %1630 = vmatprep.subr.bf16.mxu0 %v886
        %1631 = vmatpush1.bf16.msra.mxu0 %v885
        %1632 = vmatprep.subr.bf16.mxu0 %v888
        %1633 = vmatpush1.bf16.msra.mxu0 %v887
        %1634 = vmatprep.mubr.bf16.mxu0 %v1506
        %1635 = vmatmul.mubr.bf16.gmra.mrb[0].mxu0 %v1505
        %v1636 = vpop.f32.mrb[0].mxu0
        %v1637 = vadd.f32 %v1300, %v1636
        %v1638 = vpop.f32.mrb[0].mxu0
        %v1639 = vadd.f32 %v1300, %v1638
        %v1640 = vpop.f32.mrb[0].mxu0
        %v1641 = vadd.f32 %v1305, %v1640
        %v1642 = vpop.f32.mrb[0].mxu0
        %v1643 = vadd.f32 %v1305, %v1642
        %1644 = vmatprep.mubr.bf16.mxu0 %v1511
        %1645 = vmatmul.mubr.bf16.gmra.mrb[0].mxu0 %v1510
        %v1646 = vpop.f32.mrb[0].mxu0
        %v1647 = vadd.f32 %v1310, %v1646
        %v1648 = vpop.f32.mrb[0].mxu0
        %v1649 = vadd.f32 %v1310, %v1648
        %v1650 = vpop.f32.mrb[0].mxu0
        %v1651 = vadd.f32 %v1315, %v1650
        %v1652 = vpop.f32.mrb[0].mxu0
        %v1653 = vadd.f32 %v1315, %v1652
        %1654 = vmatprep.mubr.bf16.mxu0 %v1516
        %1655 = vmatmul.mubr.bf16.gmra.mrb[0].mxu0 %v1515
        %v1656 = vpop.f32.mrb[0].mxu0
        %v1657 = vadd.f32 %v1320, %v1656
        %v1658 = vpop.f32.mrb[0].mxu0
        %v1659 = vadd.f32 %v1320, %v1658
        %v1660 = vpop.f32.mrb[0].mxu0
        %v1661 = vadd.f32 %v1325, %v1660
        %v1662 = vpop.f32.mrb[0].mxu0
        %v1663 = vadd.f32 %v1325, %v1662
        %1664 = vmatprep.mubr.bf16.mxu0 %v1521
        %1665 = vmatmul.mubr.bf16.gmra.mrb[0].mxu0 %v1520
        %v1666 = vpop.f32.mrb[0].mxu0
        %v1667 = vadd.f32 %v1330, %v1666
        %v1668 = vpop.f32.mrb[0].mxu0
        %v1669 = vadd.f32 %v1330, %v1668
        %v1670 = vpop.f32.mrb[0].mxu0
        %v1671 = vadd.f32 %v1335, %v1670
        %v1672 = vpop.f32.mrb[0].mxu0
        %v1673 = vadd.f32 %v1335, %v1672
        %1674 = vmatprep.mubr.bf16.mxu0 %v1526
        %1675 = vmatmul.mubr.bf16.gmra.mrb[0].mxu0 %v1525
        %v1676 = vpop.f32.mrb[0].mxu0
        %v1677 = vadd.f32 %v1340, %v1676
        %v1678 = vpop.f32.mrb[0].mxu0
        %v1679 = vadd.f32 %v1340, %v1678
        %v1680 = vpop.f32.mrb[0].mxu0
        %v1681 = vadd.f32 %v1345, %v1680
        %v1682 = vpop.f32.mrb[0].mxu0
        %v1683 = vadd.f32 %v1345, %v1682
        %1684 = vmatprep.mubr.bf16.mxu0 %v1531
        %1685 = vmatmul.mubr.bf16.gmra.mrb[0].mxu0 %v1530
        %v1686 = vpop.f32.mrb[0].mxu0
        %v1687 = vadd.f32 %v1350, %v1686
        %v1688 = vpop.f32.mrb[0].mxu0
        %v1689 = vadd.f32 %v1350, %v1688
        %v1690 = vpop.f32.mrb[0].mxu0
        %v1691 = vadd.f32 %v1355, %v1690
        %v1692 = vpop.f32.mrb[0].mxu0
        %v1693 = vadd.f32 %v1355, %v1692
        %1694 = vmatprep.mubr.bf16.mxu0 %v1536
        %1695 = vmatmul.mubr.bf16.gmra.mrb[0].mxu0 %v1535
        %v1696 = vpop.f32.mrb[0].mxu0
        %v1697 = vadd.f32 %v1360, %v1696
        %v1698 = vpop.f32.mrb[0].mxu0
        %v1699 = vadd.f32 %v1360, %v1698
        %v1700 = vpop.f32.mrb[0].mxu0
        %v1701 = vadd.f32 %v1365, %v1700
        %v1702 = vpop.f32.mrb[0].mxu0
        %v1703 = vadd.f32 %v1365, %v1702
        %1704 = vmatprep.mubr.bf16.mxu0 %v1541
        %1705 = vmatmul.mubr.bf16.gmra.mrb[0].mxu0 %v1540
        %v1706 = vpop.f32.mrb[0].mxu0
        %v1707 = vadd.f32 %v1370, %v1706
        %v1708 = vpop.f32.mrb[0].mxu0
        %v1709 = vadd.f32 %v1370, %v1708
        %v1710 = vpop.f32.mrb[0].mxu0
        %v1711 = vadd.f32 %v1375, %v1710
        %v1712 = vpop.f32.mrb[0].mxu0
        %v1713 = vadd.f32 %v1375, %v1712
        %1714 = vdwg.mxu0
        %1715 = vmatprep.subr.bf16.mxu0 %v890
        %1716 = vmatpush1.bf16.msra.mxu0 %v889
        %1717 = vmatprep.subr.bf16.mxu0 %v892
        %1718 = vmatpush1.bf16.msra.mxu0 %v891
        %1719 = vmatprep.subr.bf16.mxu0 %v894
        %1720 = vmatpush1.bf16.msra.mxu0 %v893
        %1721 = vmatprep.subr.bf16.mxu0 %v896
        %1722 = vmatpush1.bf16.msra.mxu0 %v895
        %1723 = vmatprep.subr.bf16.mxu0 %v974
        %1724 = vmatpush1.bf16.msra.mxu0 %v973
        %1725 = vmatprep.subr.bf16.mxu0 %v976
        %1726 = vmatpush1.bf16.msra.mxu0 %v975
        %1727 = vmatprep.subr.bf16.mxu0 %v978
        %1728 = vmatpush1.bf16.msra.mxu0 %v977
        %1729 = vmatprep.subr.bf16.mxu0 %v980
        %1730 = vmatpush1.bf16.msra.mxu0 %v979
        %1731 = vmatprep.subr.bf16.mxu0 %v1058
        %1732 = vmatpush1.bf16.msra.mxu0 %v1057
        %1733 = vmatprep.subr.bf16.mxu0 %v1060
        %1734 = vmatpush1.bf16.msra.mxu0 %v1059
        %1735 = vmatprep.subr.bf16.mxu0 %v1062
        %1736 = vmatpush1.bf16.msra.mxu0 %v1061
        %1737 = vmatprep.subr.bf16.mxu0 %v1064
        %1738 = vmatpush1.bf16.msra.mxu0 %v1063
        %1739 = vmatprep.subr.bf16.mxu0 %v1142
        %1740 = vmatpush1.bf16.msra.mxu0 %v1141
        %1741 = vmatprep.subr.bf16.mxu0 %v1144
        %1742 = vmatpush1.bf16.msra.mxu0 %v1143
        %1743 = vmatprep.subr.bf16.mxu0 %v1146
        %1744 = vmatpush1.bf16.msra.mxu0 %v1145
        %1745 = vmatprep.subr.bf16.mxu0 %v1148
        %1746 = vmatpush1.bf16.msra.mxu0 %v1147
        %1747 = vmatprep.mubr.bf16.mxu0 %v1508
        %1748 = vmatmul.mubr.bf16.gmra.mrb[0].mxu0 %v1507
        %v1749 = vpop.f32.mrb[0].mxu0
        %v1750 = vadd.f32 %v1637, %v1749
        %v1751 = vpop.f32.mrb[0].mxu0
        %v1752 = vadd.f32 %v1639, %v1751
        %v1753 = vpop.f32.mrb[0].mxu0
        %v1754 = vadd.f32 %v1641, %v1753
        %v1755 = vpop.f32.mrb[0].mxu0
        %v1756 = vadd.f32 %v1643, %v1755
        %1757 = vmatprep.mubr.bf16.mxu0 %v1513
        %1758 = vmatmul.mubr.bf16.gmra.mrb[0].mxu0 %v1512
        %v1759 = vpop.f32.mrb[0].mxu0
        %v1760 = vadd.f32 %v1647, %v1759
        %v1761 = vpop.f32.mrb[0].mxu0
        %v1762 = vadd.f32 %v1649, %v1761
        %v1763 = vpop.f32.mrb[0].mxu0
        %v1764 = vadd.f32 %v1651, %v1763
        %v1765 = vpop.f32.mrb[0].mxu0
        %v1766 = vadd.f32 %v1653, %v1765
        %1767 = vmatprep.mubr.bf16.mxu0 %v1518
        %1768 = vmatmul.mubr.bf16.gmra.mrb[0].mxu0 %v1517
        %v1769 = vpop.f32.mrb[0].mxu0
        %v1770 = vadd.f32 %v1657, %v1769
        %v1771 = vpop.f32.mrb[0].mxu0
        %v1772 = vadd.f32 %v1659, %v1771
        %v1773 = vpop.f32.mrb[0].mxu0
        %v1774 = vadd.f32 %v1661, %v1773
        %v1775 = vpop.f32.mrb[0].mxu0
        %v1776 = vadd.f32 %v1663, %v1775
        %1777 = vmatprep.mubr.bf16.mxu0 %v1523
        %1778 = vmatmul.mubr.bf16.gmra.mrb[0].mxu0 %v1522
        %v1779 = vpop.f32.mrb[0].mxu0
        %v1780 = vadd.f32 %v1667, %v1779
        %v1781 = vpop.f32.mrb[0].mxu0
        %v1782 = vadd.f32 %v1669, %v1781
        %v1783 = vpop.f32.mrb[0].mxu0
        %v1784 = vadd.f32 %v1671, %v1783
        %v1785 = vpop.f32.mrb[0].mxu0
        %v1786 = vadd.f32 %v1673, %v1785
        %1787 = vmatprep.mubr.bf16.mxu0 %v1528
        %1788 = vmatmul.mubr.bf16.gmra.mrb[0].mxu0 %v1527
        %v1789 = vpop.f32.mrb[0].mxu0
        %v1790 = vadd.f32 %v1677, %v1789
        %v1791 = vpop.f32.mrb[0].mxu0
        %v1792 = vadd.f32 %v1679, %v1791
        %v1793 = vpop.f32.mrb[0].mxu0
        %v1794 = vadd.f32 %v1681, %v1793
        %v1795 = vpop.f32.mrb[0].mxu0
        %v1796 = vadd.f32 %v1683, %v1795
        %1797 = vmatprep.mubr.bf16.mxu0 %v1533
        %1798 = vmatmul.mubr.bf16.gmra.mrb[0].mxu0 %v1532
        %v1799 = vpop.f32.mrb[0].mxu0
        %v1800 = vadd.f32 %v1687, %v1799
        %v1801 = vpop.f32.mrb[0].mxu0
        %v1802 = vadd.f32 %v1689, %v1801
        %v1803 = vpop.f32.mrb[0].mxu0
        %v1804 = vadd.f32 %v1691, %v1803
        %v1805 = vpop.f32.mrb[0].mxu0
        %v1806 = vadd.f32 %v1693, %v1805
        %1807 = vmatprep.mubr.bf16.mxu0 %v1538
        %1808 = vmatmul.mubr.bf16.gmra.mrb[0].mxu0 %v1537
        %v1809 = vpop.f32.mrb[0].mxu0
        %v1810 = vadd.f32 %v1697, %v1809
        %v1811 = vpop.f32.mrb[0].mxu0
        %v1812 = vadd.f32 %v1699, %v1811
        %v1813 = vpop.f32.mrb[0].mxu0
        %v1814 = vadd.f32 %v1701, %v1813
        %v1815 = vpop.f32.mrb[0].mxu0
        %v1816 = vadd.f32 %v1703, %v1815
        %1817 = vmatprep.mubr.bf16.mxu0 %v1543
        %1818 = vmatmul.mubr.bf16.gmra.mrb[0].mxu0 %v1542
        %v1819 = vpop.f32.mrb[0].mxu0
        %v1820 = vadd.f32 %v1707, %v1819
        %v1821 = vpop.f32.mrb[0].mxu0
        %v1822 = vadd.f32 %v1709, %v1821
        %v1823 = vpop.f32.mrb[0].mxu0
        %v1824 = vadd.f32 %v1711, %v1823
        %v1825 = vpop.f32.mrb[0].mxu0
        %v1826 = vadd.f32 %v1713, %v1825
        %1827 = vdwg.mxu0
        %1828 = vmatprep.subr.bf16.mxu0 %v1226
        %1829 = vmatpush1.bf16.msra.mxu0 %v1225
        %1830 = vmatprep.subr.bf16.mxu0 %v1228
        %1831 = vmatpush1.bf16.msra.mxu0 %v1227
        %1832 = vmatprep.subr.bf16.mxu0 %v1230
        %1833 = vmatpush1.bf16.msra.mxu0 %v1229
        %1834 = vmatprep.subr.bf16.mxu0 %v1232
        %1835 = vmatpush1.bf16.msra.mxu0 %v1231
        %1836 = vmatprep.subr.bf16.mxu0 0
        %1837 = vmatpush1.bf16.msra.mxu0 0
        %1838 = vmatprep.subr.bf16.mxu0 0
        %1839 = vmatpush1.bf16.msra.mxu0 0
        %1840 = vmatprep.subr.bf16.mxu0 0
        %1841 = vmatpush1.bf16.msra.mxu0 0
        %1842 = vmatprep.subr.bf16.mxu0 0
        %1843 = vmatpush1.bf16.msra.mxu0 0
        %1844 = vmatprep.subr.bf16.mxu0 0
        %1845 = vmatpush1.bf16.msra.mxu0 0
        %1846 = vmatprep.subr.bf16.mxu0 0
        %1847 = vmatpush1.bf16.msra.mxu0 0
        %1848 = vmatprep.subr.bf16.mxu0 0
        %1849 = vmatpush1.bf16.msra.mxu0 0
        %1850 = vmatprep.subr.bf16.mxu0 0
        %1851 = vmatpush1.bf16.msra.mxu0 0
        %1852 = vmatprep.subr.bf16.mxu0 0
        %1853 = vmatpush1.bf16.msra.mxu0 0
        %1854 = vmatprep.subr.bf16.mxu0 0
        %1855 = vmatpush1.bf16.msra.mxu0 0
        %1856 = vmatprep.subr.bf16.mxu0 0
        %1857 = vmatpush1.bf16.msra.mxu0 0
        %1858 = vmatprep.subr.bf16.mxu0 0
        %1859 = vmatpush1.bf16.msra.mxu0 0
        %1860 = vmatprep.mubr.bf16.mxu0 0
        %1861 = vmatmul.mubr.bf16.gmra.mrb[0].mxu0 %v1579
        %v1862 = vpop.f32.mrb[0].mxu0
        %v1863 = vadd.f32 %v1750, %v1862
        %v1864 = vpop.f32.mrb[0].mxu0
        %v1865 = vadd.f32 %v1752, %v1864
        %v1866 = vpop.f32.mrb[0].mxu0
        %v1867 = vadd.f32 %v1754, %v1866
        %v1868 = vpop.f32.mrb[0].mxu0
        %v1869 = vadd.f32 %v1756, %v1868
        %1870 = vmatprep.mubr.bf16.mxu0 0
        %1871 = vmatmul.mubr.bf16.gmra.mrb[0].mxu0 %v1582
        %v1872 = vpop.f32.mrb[0].mxu0
        %v1873 = vadd.f32 %v1760, %v1872
        %v1874 = vpop.f32.mrb[0].mxu0
        %v1875 = vadd.f32 %v1762, %v1874
        %v1876 = vpop.f32.mrb[0].mxu0
        %v1877 = vadd.f32 %v1764, %v1876
        %v1878 = vpop.f32.mrb[0].mxu0
        %v1879 = vadd.f32 %v1766, %v1878
        %1880 = vmatprep.mubr.bf16.mxu0 0
        %1881 = vmatmul.mubr.bf16.gmra.mrb[0].mxu0 %v1585
        %v1882 = vpop.f32.mrb[0].mxu0
        %v1883 = vadd.f32 %v1770, %v1882
        %v1884 = vpop.f32.mrb[0].mxu0
        %v1885 = vadd.f32 %v1772, %v1884
        %v1886 = vpop.f32.mrb[0].mxu0
        %v1887 = vadd.f32 %v1774, %v1886
        %v1888 = vpop.f32.mrb[0].mxu0
        %v1889 = vadd.f32 %v1776, %v1888
        %1890 = vmatprep.mubr.bf16.mxu0 0
        %1891 = vmatmul.mubr.bf16.gmra.mrb[0].mxu0 %v1588
        %v1892 = vpop.f32.mrb[0].mxu0
        %v1893 = vadd.f32 %v1780, %v1892
        %v1894 = vpop.f32.mrb[0].mxu0
        %v1895 = vadd.f32 %v1782, %v1894
        %v1896 = vpop.f32.mrb[0].mxu0
        %v1897 = vadd.f32 %v1784, %v1896
        %v1898 = vpop.f32.mrb[0].mxu0
        %v1899 = vadd.f32 %v1786, %v1898
        %1900 = vmatprep.mubr.bf16.mxu0 0
        %1901 = vmatmul.mubr.bf16.gmra.mrb[0].mxu0 %v1591
        %v1902 = vpop.f32.mrb[0].mxu0
        %v1903 = vadd.f32 %v1790, %v1902
        %v1904 = vpop.f32.mrb[0].mxu0
        %v1905 = vadd.f32 %v1792, %v1904
        %v1906 = vpop.f32.mrb[0].mxu0
        %v1907 = vadd.f32 %v1794, %v1906
        %v1908 = vpop.f32.mrb[0].mxu0
        %v1909 = vadd.f32 %v1796, %v1908
        %1910 = vmatprep.mubr.bf16.mxu0 0
        %1911 = vmatmul.mubr.bf16.gmra.mrb[0].mxu0 %v1594
        %v1912 = vpop.f32.mrb[0].mxu0
        %v1913 = vadd.f32 %v1800, %v1912
        %v1914 = vpop.f32.mrb[0].mxu0
        %v1915 = vadd.f32 %v1802, %v1914
        %v1916 = vpop.f32.mrb[0].mxu0
        %v1917 = vadd.f32 %v1804, %v1916
        %v1918 = vpop.f32.mrb[0].mxu0
        %v1919 = vadd.f32 %v1806, %v1918
        %1920 = vmatprep.mubr.bf16.mxu0 0
        %1921 = vmatmul.mubr.bf16.gmra.mrb[0].mxu0 %v1597
        %v1922 = vpop.f32.mrb[0].mxu0
        %v1923 = vadd.f32 %v1810, %v1922
        %v1924 = vpop.f32.mrb[0].mxu0
        %v1925 = vadd.f32 %v1812, %v1924
        %v1926 = vpop.f32.mrb[0].mxu0
        %v1927 = vadd.f32 %v1814, %v1926
        %v1928 = vpop.f32.mrb[0].mxu0
        %v1929 = vadd.f32 %v1816, %v1928
        %1930 = vmatprep.mubr.bf16.mxu0 0
        %1931 = vmatmul.mubr.bf16.gmra.mrb[0].mxu0 %v1600
        %v1932 = vpop.f32.mrb[0].mxu0
        %v1933 = vadd.f32 %v1820, %v1932
        %v1934 = vpop.f32.mrb[0].mxu0
        %v1935 = vadd.f32 %v1822, %v1934
        %v1936 = vpop.f32.mrb[0].mxu0
        %v1937 = vadd.f32 %v1824, %v1936
        %v1938 = vpop.f32.mrb[0].mxu0
        %v1939 = vadd.f32 %v1826, %v1938
        %1940 = vdwg.mxu0
        %v1941 = vmax.f32 %v1863, 0.0
        %v1942 = vmax.f32 %v1865, 0.0
        %v1943 = vmax.f32 %v1867, 0.0
        %v1944 = vmax.f32 %v1869, 0.0
        %v1945 = vmax.f32 %v1873, 0.0
        %v1946 = vmax.f32 %v1875, 0.0
        %v1947 = vmax.f32 %v1877, 0.0
        %v1948 = vmax.f32 %v1879, 0.0
        %v1949 = vmax.f32 %v1883, 0.0
        %v1950 = vmax.f32 %v1885, 0.0
        %v1951 = vmax.f32 %v1887, 0.0
        %v1952 = vmax.f32 %v1889, 0.0
        %v1953 = vmax.f32 %v1893, 0.0
        %v1954 = vmax.f32 %v1895, 0.0
        %v1955 = vmax.f32 %v1897, 0.0
        %v1956 = vmax.f32 %v1899, 0.0
        %v1957 = vmax.f32 %v1903, 0.0
        %v1958 = vmax.f32 %v1905, 0.0
        %v1959 = vmax.f32 %v1907, 0.0
        %v1960 = vmax.f32 %v1909, 0.0
        %v1961 = vmax.f32 %v1913, 0.0
        %v1962 = vmax.f32 %v1915, 0.0
        %v1963 = vmax.f32 %v1917, 0.0
        %v1964 = vmax.f32 %v1919, 0.0
        %v1965 = vmax.f32 %v1923, 0.0
        %v1966 = vmax.f32 %v1925, 0.0
        %v1967 = vmax.f32 %v1927, 0.0
        %v1968 = vmax.f32 %v1929, 0.0
        %v1969 = vmax.f32 %v1933, 0.0
        %v1970 = vmax.f32 %v1935, 0.0
        %v1971 = vmax.f32 %v1937, 0.0
        %v1972 = vmax.f32 %v1939, 0.0
        %1973 = vrot.lane.b32.xlu0 %v1941, 17
        %v1974 = vpop.permute.xlu0 %1973
        %1975 = vrot.lane.b32.xlu0 %v1943, 17
        %v1976 = vpop.permute.xlu0 %1975
        %1977 = vrot.lane.b32.xlu0 %v1945, 17
        %v1978 = vpop.permute.xlu0 %1977
        %1979 = vrot.lane.b32.xlu0 %v1947, 17
        %v1980 = vpop.permute.xlu0 %1979
        %1981 = vrot.lane.b32.xlu0 %v1949, 17
        %v1982 = vpop.permute.xlu0 %1981
        %1983 = vrot.lane.b32.xlu0 %v1951, 17
        %v1984 = vpop.permute.xlu0 %1983
        %1985 = vrot.lane.b32.xlu0 %v1953, 17
        %v1986 = vpop.permute.xlu0 %1985
        %1987 = vrot.lane.b32.xlu0 %v1955, 17
        %v1988 = vpop.permute.xlu0 %1987
        %1989 = vrot.lane.b32.xlu0 %v1957, 17
        %v1990 = vpop.permute.xlu0 %1989
        %1991 = vrot.lane.b32.xlu0 %v1959, 17
        %v1992 = vpop.permute.xlu0 %1991
        %1993 = vrot.lane.b32.xlu0 %v1961, 17
        %v1994 = vpop.permute.xlu0 %1993
        %1995 = vrot.lane.b32.xlu0 %v1963, 17
        %v1996 = vpop.permute.xlu0 %1995
        %1997 = vrot.lane.b32.xlu0 %v1965, 17
        %v1998 = vpop.permute.xlu0 %1997
        %1999 = vrot.lane.b32.xlu0 %v1967, 17
        %v2000 = vpop.permute.xlu0 %1999
        %2001 = vrot.lane.b32.xlu0 %v1969, 17
        %v2002 = vpop.permute.xlu0 %2001
        %2003 = vrot.lane.b32.xlu0 %v1971, 17
        %v2004 = vpop.permute.xlu0 %2003
        %2005 = vrot.lane.b32.xlu0 %v1942, 17
        %v2006 = vpop.permute.xlu0 %2005
        %2007 = vrot.lane.b32.xlu0 %v1944, 17
        %v2008 = vpop.permute.xlu0 %2007
        %2009 = vrot.lane.b32.xlu0 %v1946, 17
        %v2010 = vpop.permute.xlu0 %2009
        %2011 = vrot.lane.b32.xlu0 %v1948, 17
        %v2012 = vpop.permute.xlu0 %2011
        %2013 = vrot.lane.b32.xlu0 %v1950, 17
        %v2014 = vpop.permute.xlu0 %2013
        %2015 = vrot.lane.b32.xlu0 %v1952, 17
        %v2016 = vpop.permute.xlu0 %2015
        %2017 = vrot.lane.b32.xlu0 %v1954, 17
        %v2018 = vpop.permute.xlu0 %2017
        %2019 = vrot.lane.b32.xlu0 %v1956, 17
        %v2020 = vpop.permute.xlu0 %2019
        %2021 = vrot.lane.b32.xlu0 %v1958, 17
        %v2022 = vpop.permute.xlu0 %2021
        %2023 = vrot.lane.b32.xlu0 %v1960, 17
        %v2024 = vpop.permute.xlu0 %2023
        %2025 = vrot.lane.b32.xlu0 %v1962, 17
        %v2026 = vpop.permute.xlu0 %2025
        %2027 = vrot.lane.b32.xlu0 %v1964, 17
        %v2028 = vpop.permute.xlu0 %2027
        %2029 = vrot.lane.b32.xlu0 %v1966, 17
        %v2030 = vpop.permute.xlu0 %2029
        %2031 = vrot.lane.b32.xlu0 %v1968, 17
        %v2032 = vpop.permute.xlu0 %2031
        %2033 = vrot.lane.b32.xlu0 %v1970, 17
        %v2034 = vpop.permute.xlu0 %2033
        %2035 = vrot.lane.b32.xlu0 %v1972, 17
        %v2036 = vpop.permute.xlu0 %2035
        %v2037 = vsel %vm585, %v1974, %v2006
        %v2038 = vsel %vm585, %v1976, %v2008
        %v2039 = vsel %vm585, %v1978, %v2010
        %v2040 = vsel %vm585, %v1980, %v2012
        %v2041 = vsel %vm585, %v1982, %v2014
        %v2042 = vsel %vm585, %v1984, %v2016
        %v2043 = vsel %vm585, %v1986, %v2018
        %v2044 = vsel %vm585, %v1988, %v2020
        %v2045 = vsel %vm585, %v1990, %v2022
        %v2046 = vsel %vm585, %v1992, %v2024
        %v2047 = vsel %vm585, %v1994, %v2026
        %v2048 = vsel %vm585, %v1996, %v2028
        %v2049 = vsel %vm585, %v1998, %v2030
        %v2050 = vsel %vm585, %v2000, %v2032
        %v2051 = vsel %vm585, %v2002, %v2034
        %v2052 = vsel %vm585, %v2004, %v2036
        %v2053 = vsel %vm585, %v2006, %v1974
        %v2054 = vsel %vm585, %v2008, %v1976
        %v2055 = vsel %vm585, %v2010, %v1978
        %v2056 = vsel %vm585, %v2012, %v1980
        %v2057 = vsel %vm585, %v2014, %v1982
        %v2058 = vsel %vm585, %v2016, %v1984
        %v2059 = vsel %vm585, %v2018, %v1986
        %v2060 = vsel %vm585, %v2020, %v1988
        %v2061 = vsel %vm585, %v2022, %v1990
        %v2062 = vsel %vm585, %v2024, %v1992
        %v2063 = vsel %vm585, %v2026, %v1994
        %v2064 = vsel %vm585, %v2028, %v1996
        %v2065 = vsel %vm585, %v2030, %v1998
        %v2066 = vsel %vm585, %v2032, %v2000
        %v2067 = vsel %vm585, %v2034, %v2002
        %v2068 = vsel %vm585, %v2036, %v2004
        %v2069 = vmul.f32 %v2053, %v606
        %v2070 = vmul.f32 %v2037, %v610
        %v2071 = vmul.f32 %v2054, %v606
        %v2072 = vmul.f32 %v2038, %v610
        %v2073 = vmul.f32 %v2055, %v606
        %v2074 = vmul.f32 %v2039, %v610
        %v2075 = vmul.f32 %v2056, %v606
        %v2076 = vmul.f32 %v2040, %v610
        %v2077 = vmul.f32 %v2057, %v606
        %v2078 = vmul.f32 %v2041, %v610
        %v2079 = vmul.f32 %v2058, %v606
        %v2080 = vmul.f32 %v2042, %v610
        %v2081 = vmul.f32 %v2059, %v606
        %v2082 = vmul.f32 %v2043, %v610
        %v2083 = vmul.f32 %v2060, %v606
        %v2084 = vmul.f32 %v2044, %v610
        %v2085 = vmul.f32 %v2061, %v606
        %v2086 = vmul.f32 %v2045, %v610
        %v2087 = vmul.f32 %v2062, %v606
        %v2088 = vmul.f32 %v2046, %v610
        %v2089 = vmul.f32 %v2063, %v606
        %v2090 = vmul.f32 %v2047, %v610
        %v2091 = vmul.f32 %v2064, %v606
        %v2092 = vmul.f32 %v2048, %v610
        %v2093 = vmul.f32 %v2065, %v606
        %v2094 = vmul.f32 %v2049, %v610
        %v2095 = vmul.f32 %v2066, %v606
        %v2096 = vmul.f32 %v2050, %v610
        %v2097 = vmul.f32 %v2067, %v606
        %v2098 = vmul.f32 %v2051, %v610
        %v2099 = vmul.f32 %v2068, %v606
        %v2100 = vmul.f32 %v2052, %v610
        %v2101 = vpack.c.bf16 %v2071, %v2069
        %v2102 = vpack.c.bf16 %v2072, %v2070
        %v2103 = vpack.c.bf16 %v2075, %v2073
        %v2104 = vpack.c.bf16 %v2076, %v2074
        %v2105 = vpack.c.bf16 %v2079, %v2077
        %v2106 = vpack.c.bf16 %v2080, %v2078
        %v2107 = vpack.c.bf16 %v2083, %v2081
        %v2108 = vpack.c.bf16 %v2084, %v2082
        %v2109 = vpack.c.bf16 %v2087, %v2085
        %v2110 = vpack.c.bf16 %v2088, %v2086
        %v2111 = vpack.c.bf16 %v2091, %v2089
        %v2112 = vpack.c.bf16 %v2092, %v2090
        %v2113 = vpack.c.bf16 %v2095, %v2093
        %v2114 = vpack.c.bf16 %v2096, %v2094
        %v2115 = vpack.c.bf16 %v2099, %v2097
        %v2116 = vpack.c.bf16 %v2100, %v2098
        %2117 = vrot.lane.b32.xlu0 %v1941, 16
        %v2118 = vpop.permute.xlu0 %2117
        %2119 = vrot.lane.b32.xlu0 %v1943, 16
        %v2120 = vpop.permute.xlu0 %2119
        %2121 = vrot.lane.b32.xlu0 %v1945, 16
        %v2122 = vpop.permute.xlu0 %2121
        %2123 = vrot.lane.b32.xlu0 %v1947, 16
        %v2124 = vpop.permute.xlu0 %2123
        %2125 = vrot.lane.b32.xlu0 %v1949, 16
        %v2126 = vpop.permute.xlu0 %2125
        %2127 = vrot.lane.b32.xlu0 %v1951, 16
        %v2128 = vpop.permute.xlu0 %2127
        %2129 = vrot.lane.b32.xlu0 %v1953, 16
        %v2130 = vpop.permute.xlu0 %2129
        %2131 = vrot.lane.b32.xlu0 %v1955, 16
        %v2132 = vpop.permute.xlu0 %2131
        %2133 = vrot.lane.b32.xlu0 %v1957, 16
        %v2134 = vpop.permute.xlu0 %2133
        %2135 = vrot.lane.b32.xlu0 %v1959, 16
        %v2136 = vpop.permute.xlu0 %2135
        %2137 = vrot.lane.b32.xlu0 %v1961, 16
        %v2138 = vpop.permute.xlu0 %2137
        %2139 = vrot.lane.b32.xlu0 %v1963, 16
        %v2140 = vpop.permute.xlu0 %2139
        %2141 = vrot.lane.b32.xlu0 %v1965, 16
        %v2142 = vpop.permute.xlu0 %2141
        %2143 = vrot.lane.b32.xlu0 %v1967, 16
        %v2144 = vpop.permute.xlu0 %2143
        %2145 = vrot.lane.b32.xlu0 %v1969, 16
        %v2146 = vpop.permute.xlu0 %2145
        %2147 = vrot.lane.b32.xlu0 %v1971, 16
        %v2148 = vpop.permute.xlu0 %2147
        %2149 = vrot.lane.b32.xlu0 %v1942, 16
        %v2150 = vpop.permute.xlu0 %2149
        %2151 = vrot.lane.b32.xlu0 %v1944, 16
        %v2152 = vpop.permute.xlu0 %2151
        %2153 = vrot.lane.b32.xlu0 %v1946, 16
        %v2154 = vpop.permute.xlu0 %2153
        %2155 = vrot.lane.b32.xlu0 %v1948, 16
        %v2156 = vpop.permute.xlu0 %2155
        %2157 = vrot.lane.b32.xlu0 %v1950, 16
        %v2158 = vpop.permute.xlu0 %2157
        %2159 = vrot.lane.b32.xlu0 %v1952, 16
        %v2160 = vpop.permute.xlu0 %2159
        %2161 = vrot.lane.b32.xlu0 %v1954, 16
        %v2162 = vpop.permute.xlu0 %2161
        %2163 = vrot.lane.b32.xlu0 %v1956, 16
        %v2164 = vpop.permute.xlu0 %2163
        %2165 = vrot.lane.b32.xlu0 %v1958, 16
        %v2166 = vpop.permute.xlu0 %2165
        %2167 = vrot.lane.b32.xlu0 %v1960, 16
        %v2168 = vpop.permute.xlu0 %2167
        %2169 = vrot.lane.b32.xlu0 %v1962, 16
        %v2170 = vpop.permute.xlu0 %2169
        %2171 = vrot.lane.b32.xlu0 %v1964, 16
        %v2172 = vpop.permute.xlu0 %2171
        %2173 = vrot.lane.b32.xlu0 %v1966, 16
        %v2174 = vpop.permute.xlu0 %2173
        %2175 = vrot.lane.b32.xlu0 %v1968, 16
        %v2176 = vpop.permute.xlu0 %2175
        %2177 = vrot.lane.b32.xlu0 %v1970, 16
        %v2178 = vpop.permute.xlu0 %2177
        %2179 = vrot.lane.b32.xlu0 %v1972, 16
        %v2180 = vpop.permute.xlu0 %2179
        %v2181 = vsel %vm669, %v2118, %v2150
        %v2182 = vsel %vm669, %v2120, %v2152
        %v2183 = vsel %vm669, %v2122, %v2154
        %v2184 = vsel %vm669, %v2124, %v2156
        %v2185 = vsel %vm669, %v2126, %v2158
        %v2186 = vsel %vm669, %v2128, %v2160
        %v2187 = vsel %vm669, %v2130, %v2162
        %v2188 = vsel %vm669, %v2132, %v2164
        %v2189 = vsel %vm669, %v2134, %v2166
        %v2190 = vsel %vm669, %v2136, %v2168
        %v2191 = vsel %vm669, %v2138, %v2170
        %v2192 = vsel %vm669, %v2140, %v2172
        %v2193 = vsel %vm669, %v2142, %v2174
        %v2194 = vsel %vm669, %v2144, %v2176
        %v2195 = vsel %vm669, %v2146, %v2178
        %v2196 = vsel %vm669, %v2148, %v2180
        %v2197 = vsel %vm669, %v2150, %v2118
        %v2198 = vsel %vm669, %v2152, %v2120
        %v2199 = vsel %vm669, %v2154, %v2122
        %v2200 = vsel %vm669, %v2156, %v2124
        %v2201 = vsel %vm669, %v2158, %v2126
        %v2202 = vsel %vm669, %v2160, %v2128
        %v2203 = vsel %vm669, %v2162, %v2130
        %v2204 = vsel %vm669, %v2164, %v2132
        %v2205 = vsel %vm669, %v2166, %v2134
        %v2206 = vsel %vm669, %v2168, %v2136
        %v2207 = vsel %vm669, %v2170, %v2138
        %v2208 = vsel %vm669, %v2172, %v2140
        %v2209 = vsel %vm669, %v2174, %v2142
        %v2210 = vsel %vm669, %v2176, %v2144
        %v2211 = vsel %vm669, %v2178, %v2146
        %v2212 = vsel %vm669, %v2180, %v2148
        %v2213 = vmul.f32 %v2197, %v690
        %v2214 = vmul.f32 %v2181, %v694
        %v2215 = vmul.f32 %v2198, %v690
        %v2216 = vmul.f32 %v2182, %v694
        %v2217 = vmul.f32 %v2199, %v690
        %v2218 = vmul.f32 %v2183, %v694
        %v2219 = vmul.f32 %v2200, %v690
        %v2220 = vmul.f32 %v2184, %v694
        %v2221 = vmul.f32 %v2201, %v690
        %v2222 = vmul.f32 %v2185, %v694
        %v2223 = vmul.f32 %v2202, %v690
        %v2224 = vmul.f32 %v2186, %v694
        %v2225 = vmul.f32 %v2203, %v690
        %v2226 = vmul.f32 %v2187, %v694
        %v2227 = vmul.f32 %v2204, %v690
        %v2228 = vmul.f32 %v2188, %v694
        %v2229 = vmul.f32 %v2205, %v690
        %v2230 = vmul.f32 %v2189, %v694
        %v2231 = vmul.f32 %v2206, %v690
        %v2232 = vmul.f32 %v2190, %v694
        %v2233 = vmul.f32 %v2207, %v690
        %v2234 = vmul.f32 %v2191, %v694
        %v2235 = vmul.f32 %v2208, %v690
        %v2236 = vmul.f32 %v2192, %v694
        %v2237 = vmul.f32 %v2209, %v690
        %v2238 = vmul.f32 %v2193, %v694
        %v2239 = vmul.f32 %v2210, %v690
        %v2240 = vmul.f32 %v2194, %v694
        %v2241 = vmul.f32 %v2211, %v690
        %v2242 = vmul.f32 %v2195, %v694
        %v2243 = vmul.f32 %v2212, %v690
        %v2244 = vmul.f32 %v2196, %v694
        %v2245 = vpack.c.bf16 %v2215, %v2213
        %v2246 = vpack.c.bf16 %v2216, %v2214
        %v2247 = vpack.c.bf16 %v2219, %v2217
        %v2248 = vpack.c.bf16 %v2220, %v2218
        %v2249 = vpack.c.bf16 %v2223, %v2221
        %v2250 = vpack.c.bf16 %v2224, %v2222
        %v2251 = vpack.c.bf16 %v2227, %v2225
        %v2252 = vpack.c.bf16 %v2228, %v2226
        %v2253 = vpack.c.bf16 %v2231, %v2229
        %v2254 = vpack.c.bf16 %v2232, %v2230
        %v2255 = vpack.c.bf16 %v2235, %v2233
        %v2256 = vpack.c.bf16 %v2236, %v2234
        %v2257 = vpack.c.bf16 %v2239, %v2237
        %v2258 = vpack.c.bf16 %v2240, %v2238
        %v2259 = vpack.c.bf16 %v2243, %v2241
        %v2260 = vpack.c.bf16 %v2244, %v2242
        %2261 = vrot.lane.b32.xlu0 %v1941, 15
        %v2262 = vpop.permute.xlu0 %2261
        %2263 = vrot.lane.b32.xlu0 %v1943, 15
        %v2264 = vpop.permute.xlu0 %2263
        %2265 = vrot.lane.b32.xlu0 %v1945, 15
        %v2266 = vpop.permute.xlu0 %2265
        %2267 = vrot.lane.b32.xlu0 %v1947, 15
        %v2268 = vpop.permute.xlu0 %2267
        %2269 = vrot.lane.b32.xlu0 %v1949, 15
        %v2270 = vpop.permute.xlu0 %2269
        %2271 = vrot.lane.b32.xlu0 %v1951, 15
        %v2272 = vpop.permute.xlu0 %2271
        %2273 = vrot.lane.b32.xlu0 %v1953, 15
        %v2274 = vpop.permute.xlu0 %2273
        %2275 = vrot.lane.b32.xlu0 %v1955, 15
        %v2276 = vpop.permute.xlu0 %2275
        %2277 = vrot.lane.b32.xlu0 %v1957, 15
        %v2278 = vpop.permute.xlu0 %2277
        %2279 = vrot.lane.b32.xlu0 %v1959, 15
        %v2280 = vpop.permute.xlu0 %2279
        %2281 = vrot.lane.b32.xlu0 %v1961, 15
        %v2282 = vpop.permute.xlu0 %2281
        %2283 = vrot.lane.b32.xlu0 %v1963, 15
        %v2284 = vpop.permute.xlu0 %2283
        %2285 = vrot.lane.b32.xlu0 %v1965, 15
        %v2286 = vpop.permute.xlu0 %2285
        %2287 = vrot.lane.b32.xlu0 %v1967, 15
        %v2288 = vpop.permute.xlu0 %2287
        %2289 = vrot.lane.b32.xlu0 %v1969, 15
        %v2290 = vpop.permute.xlu0 %2289
        %2291 = vrot.lane.b32.xlu0 %v1971, 15
        %v2292 = vpop.permute.xlu0 %2291
        %2293 = vrot.lane.b32.xlu0 %v1942, 15
        %v2294 = vpop.permute.xlu0 %2293
        %2295 = vrot.lane.b32.xlu0 %v1944, 15
        %v2296 = vpop.permute.xlu0 %2295
        %2297 = vrot.lane.b32.xlu0 %v1946, 15
        %v2298 = vpop.permute.xlu0 %2297
        %2299 = vrot.lane.b32.xlu0 %v1948, 15
        %v2300 = vpop.permute.xlu0 %2299
        %2301 = vrot.lane.b32.xlu0 %v1950, 15
        %v2302 = vpop.permute.xlu0 %2301
        %2303 = vrot.lane.b32.xlu0 %v1952, 15
        %v2304 = vpop.permute.xlu0 %2303
        %2305 = vrot.lane.b32.xlu0 %v1954, 15
        %v2306 = vpop.permute.xlu0 %2305
        %2307 = vrot.lane.b32.xlu0 %v1956, 15
        %v2308 = vpop.permute.xlu0 %2307
        %2309 = vrot.lane.b32.xlu0 %v1958, 15
        %v2310 = vpop.permute.xlu0 %2309
        %2311 = vrot.lane.b32.xlu0 %v1960, 15
        %v2312 = vpop.permute.xlu0 %2311
        %2313 = vrot.lane.b32.xlu0 %v1962, 15
        %v2314 = vpop.permute.xlu0 %2313
        %2315 = vrot.lane.b32.xlu0 %v1964, 15
        %v2316 = vpop.permute.xlu0 %2315
        %2317 = vrot.lane.b32.xlu0 %v1966, 15
        %v2318 = vpop.permute.xlu0 %2317
        %2319 = vrot.lane.b32.xlu0 %v1968, 15
        %v2320 = vpop.permute.xlu0 %2319
        %2321 = vrot.lane.b32.xlu0 %v1970, 15
        %v2322 = vpop.permute.xlu0 %2321
        %2323 = vrot.lane.b32.xlu0 %v1972, 15
        %v2324 = vpop.permute.xlu0 %2323
        %v2325 = vsel %vm753, %v2262, %v2294
        %v2326 = vsel %vm753, %v2264, %v2296
        %v2327 = vsel %vm753, %v2266, %v2298
        %v2328 = vsel %vm753, %v2268, %v2300
        %v2329 = vsel %vm753, %v2270, %v2302
        %v2330 = vsel %vm753, %v2272, %v2304
        %v2331 = vsel %vm753, %v2274, %v2306
        %v2332 = vsel %vm753, %v2276, %v2308
        %v2333 = vsel %vm753, %v2278, %v2310
        %v2334 = vsel %vm753, %v2280, %v2312
        %v2335 = vsel %vm753, %v2282, %v2314
        %v2336 = vsel %vm753, %v2284, %v2316
        %v2337 = vsel %vm753, %v2286, %v2318
        %v2338 = vsel %vm753, %v2288, %v2320
        %v2339 = vsel %vm753, %v2290, %v2322
        %v2340 = vsel %vm753, %v2292, %v2324
        %v2341 = vsel %vm753, %v2294, %v2262
        %v2342 = vsel %vm753, %v2296, %v2264
        %v2343 = vsel %vm753, %v2298, %v2266
        %v2344 = vsel %vm753, %v2300, %v2268
        %v2345 = vsel %vm753, %v2302, %v2270
        %v2346 = vsel %vm753, %v2304, %v2272
        %v2347 = vsel %vm753, %v2306, %v2274
        %v2348 = vsel %vm753, %v2308, %v2276
        %v2349 = vsel %vm753, %v2310, %v2278
        %v2350 = vsel %vm753, %v2312, %v2280
        %v2351 = vsel %vm753, %v2314, %v2282
        %v2352 = vsel %vm753, %v2316, %v2284
        %v2353 = vsel %vm753, %v2318, %v2286
        %v2354 = vsel %vm753, %v2320, %v2288
        %v2355 = vsel %vm753, %v2322, %v2290
        %v2356 = vsel %vm753, %v2324, %v2292
        %v2357 = vmul.f32 %v2341, %v774
        %v2358 = vmul.f32 %v2325, %v778
        %v2359 = vmul.f32 %v2342, %v774
        %v2360 = vmul.f32 %v2326, %v778
        %v2361 = vmul.f32 %v2343, %v774
        %v2362 = vmul.f32 %v2327, %v778
        %v2363 = vmul.f32 %v2344, %v774
        %v2364 = vmul.f32 %v2328, %v778
        %v2365 = vmul.f32 %v2345, %v774
        %v2366 = vmul.f32 %v2329, %v778
        %v2367 = vmul.f32 %v2346, %v774
        %v2368 = vmul.f32 %v2330, %v778
        %v2369 = vmul.f32 %v2347, %v774
        %v2370 = vmul.f32 %v2331, %v778
        %v2371 = vmul.f32 %v2348, %v774
        %v2372 = vmul.f32 %v2332, %v778
        %v2373 = vmul.f32 %v2349, %v774
        %v2374 = vmul.f32 %v2333, %v778
        %v2375 = vmul.f32 %v2350, %v774
        %v2376 = vmul.f32 %v2334, %v778
        %v2377 = vmul.f32 %v2351, %v774
        %v2378 = vmul.f32 %v2335, %v778
        %v2379 = vmul.f32 %v2352, %v774
        %v2380 = vmul.f32 %v2336, %v778
        %v2381 = vmul.f32 %v2353, %v774
        %v2382 = vmul.f32 %v2337, %v778
        %v2383 = vmul.f32 %v2354, %v774
        %v2384 = vmul.f32 %v2338, %v778
        %v2385 = vmul.f32 %v2355, %v774
        %v2386 = vmul.f32 %v2339, %v778
        %v2387 = vmul.f32 %v2356, %v774
        %v2388 = vmul.f32 %v2340, %v778
        %v2389 = vpack.c.bf16 %v2359, %v2357
        %v2390 = vpack.c.bf16 %v2360, %v2358
        %v2391 = vpack.c.bf16 %v2363, %v2361
        %v2392 = vpack.c.bf16 %v2364, %v2362
        %v2393 = vpack.c.bf16 %v2367, %v2365
        %v2394 = vpack.c.bf16 %v2368, %v2366
        %v2395 = vpack.c.bf16 %v2371, %v2369
        %v2396 = vpack.c.bf16 %v2372, %v2370
        %v2397 = vpack.c.bf16 %v2375, %v2373
        %v2398 = vpack.c.bf16 %v2376, %v2374
        %v2399 = vpack.c.bf16 %v2379, %v2377
        %v2400 = vpack.c.bf16 %v2380, %v2378
        %v2401 = vpack.c.bf16 %v2383, %v2381
        %v2402 = vpack.c.bf16 %v2384, %v2382
        %v2403 = vpack.c.bf16 %v2387, %v2385
        %v2404 = vpack.c.bf16 %v2388, %v2386
        %2405 = vrot.lane.b32.xlu0 %v1941, 1
        %v2406 = vpop.permute.xlu0 %2405
        %2407 = vrot.lane.b32.xlu0 %v1943, 1
        %v2408 = vpop.permute.xlu0 %2407
        %2409 = vrot.lane.b32.xlu0 %v1945, 1
        %v2410 = vpop.permute.xlu0 %2409
        %2411 = vrot.lane.b32.xlu0 %v1947, 1
        %v2412 = vpop.permute.xlu0 %2411
        %2413 = vrot.lane.b32.xlu0 %v1949, 1
        %v2414 = vpop.permute.xlu0 %2413
        %2415 = vrot.lane.b32.xlu0 %v1951, 1
        %v2416 = vpop.permute.xlu0 %2415
        %2417 = vrot.lane.b32.xlu0 %v1953, 1
        %v2418 = vpop.permute.xlu0 %2417
        %2419 = vrot.lane.b32.xlu0 %v1955, 1
        %v2420 = vpop.permute.xlu0 %2419
        %2421 = vrot.lane.b32.xlu0 %v1957, 1
        %v2422 = vpop.permute.xlu0 %2421
        %2423 = vrot.lane.b32.xlu0 %v1959, 1
        %v2424 = vpop.permute.xlu0 %2423
        %2425 = vrot.lane.b32.xlu0 %v1961, 1
        %v2426 = vpop.permute.xlu0 %2425
        %2427 = vrot.lane.b32.xlu0 %v1963, 1
        %v2428 = vpop.permute.xlu0 %2427
        %2429 = vrot.lane.b32.xlu0 %v1965, 1
        %v2430 = vpop.permute.xlu0 %2429
        %2431 = vrot.lane.b32.xlu0 %v1967, 1
        %v2432 = vpop.permute.xlu0 %2431
        %2433 = vrot.lane.b32.xlu0 %v1969, 1
        %v2434 = vpop.permute.xlu0 %2433
        %2435 = vrot.lane.b32.xlu0 %v1971, 1
        %v2436 = vpop.permute.xlu0 %2435
        %2437 = vrot.lane.b32.xlu0 %v1942, 1
        %v2438 = vpop.permute.xlu0 %2437
        %2439 = vrot.lane.b32.xlu0 %v1944, 1
        %v2440 = vpop.permute.xlu0 %2439
        %2441 = vrot.lane.b32.xlu0 %v1946, 1
        %v2442 = vpop.permute.xlu0 %2441
        %2443 = vrot.lane.b32.xlu0 %v1948, 1
        %v2444 = vpop.permute.xlu0 %2443
        %2445 = vrot.lane.b32.xlu0 %v1950, 1
        %v2446 = vpop.permute.xlu0 %2445
        %2447 = vrot.lane.b32.xlu0 %v1952, 1
        %v2448 = vpop.permute.xlu0 %2447
        %2449 = vrot.lane.b32.xlu0 %v1954, 1
        %v2450 = vpop.permute.xlu0 %2449
        %2451 = vrot.lane.b32.xlu0 %v1956, 1
        %v2452 = vpop.permute.xlu0 %2451
        %2453 = vrot.lane.b32.xlu0 %v1958, 1
        %v2454 = vpop.permute.xlu0 %2453
        %2455 = vrot.lane.b32.xlu0 %v1960, 1
        %v2456 = vpop.permute.xlu0 %2455
        %2457 = vrot.lane.b32.xlu0 %v1962, 1
        %v2458 = vpop.permute.xlu0 %2457
        %2459 = vrot.lane.b32.xlu0 %v1964, 1
        %v2460 = vpop.permute.xlu0 %2459
        %2461 = vrot.lane.b32.xlu0 %v1966, 1
        %v2462 = vpop.permute.xlu0 %2461
        %2463 = vrot.lane.b32.xlu0 %v1968, 1
        %v2464 = vpop.permute.xlu0 %2463
        %2465 = vrot.lane.b32.xlu0 %v1970, 1
        %v2466 = vpop.permute.xlu0 %2465
        %2467 = vrot.lane.b32.xlu0 %v1972, 1
        %v2468 = vpop.permute.xlu0 %2467
        %v2469 = vsel %vm837, %v2406, %v2438
        %v2470 = vsel %vm837, %v2408, %v2440
        %v2471 = vsel %vm837, %v2410, %v2442
        %v2472 = vsel %vm837, %v2412, %v2444
        %v2473 = vsel %vm837, %v2414, %v2446
        %v2474 = vsel %vm837, %v2416, %v2448
        %v2475 = vsel %vm837, %v2418, %v2450
        %v2476 = vsel %vm837, %v2420, %v2452
        %v2477 = vsel %vm837, %v2422, %v2454
        %v2478 = vsel %vm837, %v2424, %v2456
        %v2479 = vsel %vm837, %v2426, %v2458
        %v2480 = vsel %vm837, %v2428, %v2460
        %v2481 = vsel %vm837, %v2430, %v2462
        %v2482 = vsel %vm837, %v2432, %v2464
        %v2483 = vsel %vm837, %v2434, %v2466
        %v2484 = vsel %vm837, %v2436, %v2468
        %v2485 = vsel %vm837, %v2438, %v2406
        %v2486 = vsel %vm837, %v2440, %v2408
        %v2487 = vsel %vm837, %v2442, %v2410
        %v2488 = vsel %vm837, %v2444, %v2412
        %v2489 = vsel %vm837, %v2446, %v2414
        %v2490 = vsel %vm837, %v2448, %v2416
        %v2491 = vsel %vm837, %v2450, %v2418
        %v2492 = vsel %vm837, %v2452, %v2420
        %v2493 = vsel %vm837, %v2454, %v2422
        %v2494 = vsel %vm837, %v2456, %v2424
        %v2495 = vsel %vm837, %v2458, %v2426
        %v2496 = vsel %vm837, %v2460, %v2428
        %v2497 = vsel %vm837, %v2462, %v2430
        %v2498 = vsel %vm837, %v2464, %v2432
        %v2499 = vsel %vm837, %v2466, %v2434
        %v2500 = vsel %vm837, %v2468, %v2436
        %v2501 = vmul.f32 %v2485, %v858
        %v2502 = vmul.f32 %v2469, %v862
        %v2503 = vmul.f32 %v2486, %v858
        %v2504 = vmul.f32 %v2470, %v862
        %v2505 = vmul.f32 %v2487, %v858
        %v2506 = vmul.f32 %v2471, %v862
        %v2507 = vmul.f32 %v2488, %v858
        %v2508 = vmul.f32 %v2472, %v862
        %v2509 = vmul.f32 %v2489, %v858
        %v2510 = vmul.f32 %v2473, %v862
        %v2511 = vmul.f32 %v2490, %v858
        %v2512 = vmul.f32 %v2474, %v862
        %v2513 = vmul.f32 %v2491, %v858
        %v2514 = vmul.f32 %v2475, %v862
        %v2515 = vmul.f32 %v2492, %v858
        %v2516 = vmul.f32 %v2476, %v862
        %v2517 = vmul.f32 %v2493, %v858
        %v2518 = vmul.f32 %v2477, %v862
        %v2519 = vmul.f32 %v2494, %v858
        %v2520 = vmul.f32 %v2478, %v862
        %v2521 = vmul.f32 %v2495, %v858
        %v2522 = vmul.f32 %v2479, %v862
        %v2523 = vmul.f32 %v2496, %v858
        %v2524 = vmul.f32 %v2480, %v862
        %v2525 = vmul.f32 %v2497, %v858
        %v2526 = vmul.f32 %v2481, %v862
        %v2527 = vmul.f32 %v2498, %v858
        %v2528 = vmul.f32 %v2482, %v862
        %v2529 = vmul.f32 %v2499, %v858
        %v2530 = vmul.f32 %v2483, %v862
        %v2531 = vmul.f32 %v2500, %v858
        %v2532 = vmul.f32 %v2484, %v862
        %v2533 = vpack.c.bf16 %v2503, %v2501
        %v2534 = vpack.c.bf16 %v2504, %v2502
        %v2535 = vpack.c.bf16 %v2507, %v2505
        %v2536 = vpack.c.bf16 %v2508, %v2506
        %v2537 = vpack.c.bf16 %v2511, %v2509
        %v2538 = vpack.c.bf16 %v2512, %v2510
        %v2539 = vpack.c.bf16 %v2515, %v2513
        %v2540 = vpack.c.bf16 %v2516, %v2514
        %v2541 = vpack.c.bf16 %v2519, %v2517
        %v2542 = vpack.c.bf16 %v2520, %v2518
        %v2543 = vpack.c.bf16 %v2523, %v2521
        %v2544 = vpack.c.bf16 %v2524, %v2522
        %v2545 = vpack.c.bf16 %v2527, %v2525
        %v2546 = vpack.c.bf16 %v2528, %v2526
        %v2547 = vpack.c.bf16 %v2531, %v2529
        %v2548 = vpack.c.bf16 %v2532, %v2530
        %v2549 = vpack.c.bf16 %v1943, %v1941
        %v2550 = vpack.c.bf16 %v1944, %v1942
        %v2551 = vpack.c.bf16 %v1947, %v1945
        %v2552 = vpack.c.bf16 %v1948, %v1946
        %v2553 = vpack.c.bf16 %v1951, %v1949
        %v2554 = vpack.c.bf16 %v1952, %v1950
        %v2555 = vpack.c.bf16 %v1955, %v1953
        %v2556 = vpack.c.bf16 %v1956, %v1954
        %v2557 = vpack.c.bf16 %v1959, %v1957
        %v2558 = vpack.c.bf16 %v1960, %v1958
        %v2559 = vpack.c.bf16 %v1963, %v1961
        %v2560 = vpack.c.bf16 %v1964, %v1962
        %v2561 = vpack.c.bf16 %v1967, %v1965
        %v2562 = vpack.c.bf16 %v1968, %v1966
        %v2563 = vpack.c.bf16 %v1971, %v1969
        %v2564 = vpack.c.bf16 %v1972, %v1970
        %2565 = vrot.lane.b32.xlu0 %v1941, 127
        %v2566 = vpop.permute.xlu0 %2565
        %2567 = vrot.lane.b32.xlu0 %v1943, 127
        %v2568 = vpop.permute.xlu0 %2567
        %2569 = vrot.lane.b32.xlu0 %v1945, 127
        %v2570 = vpop.permute.xlu0 %2569
        %2571 = vrot.lane.b32.xlu0 %v1947, 127
        %v2572 = vpop.permute.xlu0 %2571
        %2573 = vrot.lane.b32.xlu0 %v1949, 127
        %v2574 = vpop.permute.xlu0 %2573
        %2575 = vrot.lane.b32.xlu0 %v1951, 127
        %v2576 = vpop.permute.xlu0 %2575
        %2577 = vrot.lane.b32.xlu0 %v1953, 127
        %v2578 = vpop.permute.xlu0 %2577
        %2579 = vrot.lane.b32.xlu0 %v1955, 127
        %v2580 = vpop.permute.xlu0 %2579
        %2581 = vrot.lane.b32.xlu0 %v1957, 127
        %v2582 = vpop.permute.xlu0 %2581
        %2583 = vrot.lane.b32.xlu0 %v1959, 127
        %v2584 = vpop.permute.xlu0 %2583
        %2585 = vrot.lane.b32.xlu0 %v1961, 127
        %v2586 = vpop.permute.xlu0 %2585
        %2587 = vrot.lane.b32.xlu0 %v1963, 127
        %v2588 = vpop.permute.xlu0 %2587
        %2589 = vrot.lane.b32.xlu0 %v1965, 127
        %v2590 = vpop.permute.xlu0 %2589
        %2591 = vrot.lane.b32.xlu0 %v1967, 127
        %v2592 = vpop.permute.xlu0 %2591
        %2593 = vrot.lane.b32.xlu0 %v1969, 127
        %v2594 = vpop.permute.xlu0 %2593
        %2595 = vrot.lane.b32.xlu0 %v1971, 127
        %v2596 = vpop.permute.xlu0 %2595
        %2597 = vrot.lane.b32.xlu0 %v1942, 127
        %v2598 = vpop.permute.xlu0 %2597
        %2599 = vrot.lane.b32.xlu0 %v1944, 127
        %v2600 = vpop.permute.xlu0 %2599
        %2601 = vrot.lane.b32.xlu0 %v1946, 127
        %v2602 = vpop.permute.xlu0 %2601
        %2603 = vrot.lane.b32.xlu0 %v1948, 127
        %v2604 = vpop.permute.xlu0 %2603
        %2605 = vrot.lane.b32.xlu0 %v1950, 127
        %v2606 = vpop.permute.xlu0 %2605
        %2607 = vrot.lane.b32.xlu0 %v1952, 127
        %v2608 = vpop.permute.xlu0 %2607
        %2609 = vrot.lane.b32.xlu0 %v1954, 127
        %v2610 = vpop.permute.xlu0 %2609
        %2611 = vrot.lane.b32.xlu0 %v1956, 127
        %v2612 = vpop.permute.xlu0 %2611
        %2613 = vrot.lane.b32.xlu0 %v1958, 127
        %v2614 = vpop.permute.xlu0 %2613
        %2615 = vrot.lane.b32.xlu0 %v1960, 127
        %v2616 = vpop.permute.xlu0 %2615
        %2617 = vrot.lane.b32.xlu0 %v1962, 127
        %v2618 = vpop.permute.xlu0 %2617
        %2619 = vrot.lane.b32.xlu0 %v1964, 127
        %v2620 = vpop.permute.xlu0 %2619
        %2621 = vrot.lane.b32.xlu0 %v1966, 127
        %v2622 = vpop.permute.xlu0 %2621
        %2623 = vrot.lane.b32.xlu0 %v1968, 127
        %v2624 = vpop.permute.xlu0 %2623
        %2625 = vrot.lane.b32.xlu0 %v1970, 127
        %v2626 = vpop.permute.xlu0 %2625
        %2627 = vrot.lane.b32.xlu0 %v1972, 127
        %v2628 = vpop.permute.xlu0 %2627
        %v2629 = vsel %vm929, %v2566, %v2598
        %v2630 = vsel %vm929, %v2568, %v2600
        %v2631 = vsel %vm929, %v2570, %v2602
        %v2632 = vsel %vm929, %v2572, %v2604
        %v2633 = vsel %vm929, %v2574, %v2606
        %v2634 = vsel %vm929, %v2576, %v2608
        %v2635 = vsel %vm929, %v2578, %v2610
        %v2636 = vsel %vm929, %v2580, %v2612
        %v2637 = vsel %vm929, %v2582, %v2614
        %v2638 = vsel %vm929, %v2584, %v2616
        %v2639 = vsel %vm929, %v2586, %v2618
        %v2640 = vsel %vm929, %v2588, %v2620
        %v2641 = vsel %vm929, %v2590, %v2622
        %v2642 = vsel %vm929, %v2592, %v2624
        %v2643 = vsel %vm929, %v2594, %v2626
        %v2644 = vsel %vm929, %v2596, %v2628
        %v2645 = vsel %vm929, %v2598, %v2566
        %v2646 = vsel %vm929, %v2600, %v2568
        %v2647 = vsel %vm929, %v2602, %v2570
        %v2648 = vsel %vm929, %v2604, %v2572
        %v2649 = vsel %vm929, %v2606, %v2574
        %v2650 = vsel %vm929, %v2608, %v2576
        %v2651 = vsel %vm929, %v2610, %v2578
        %v2652 = vsel %vm929, %v2612, %v2580
        %v2653 = vsel %vm929, %v2614, %v2582
        %v2654 = vsel %vm929, %v2616, %v2584
        %v2655 = vsel %vm929, %v2618, %v2586
        %v2656 = vsel %vm929, %v2620, %v2588
        %v2657 = vsel %vm929, %v2622, %v2590
        %v2658 = vsel %vm929, %v2624, %v2592
        %v2659 = vsel %vm929, %v2626, %v2594
        %v2660 = vsel %vm929, %v2628, %v2596
        %v2661 = vmul.f32 %v2629, %v950
        %v2662 = vmul.f32 %v2645, %v954
        %v2663 = vmul.f32 %v2630, %v950
        %v2664 = vmul.f32 %v2646, %v954
        %v2665 = vmul.f32 %v2631, %v950
        %v2666 = vmul.f32 %v2647, %v954
        %v2667 = vmul.f32 %v2632, %v950
        %v2668 = vmul.f32 %v2648, %v954
        %v2669 = vmul.f32 %v2633, %v950
        %v2670 = vmul.f32 %v2649, %v954
        %v2671 = vmul.f32 %v2634, %v950
        %v2672 = vmul.f32 %v2650, %v954
        %v2673 = vmul.f32 %v2635, %v950
        %v2674 = vmul.f32 %v2651, %v954
        %v2675 = vmul.f32 %v2636, %v950
        %v2676 = vmul.f32 %v2652, %v954
        %v2677 = vmul.f32 %v2637, %v950
        %v2678 = vmul.f32 %v2653, %v954
        %v2679 = vmul.f32 %v2638, %v950
        %v2680 = vmul.f32 %v2654, %v954
        %v2681 = vmul.f32 %v2639, %v950
        %v2682 = vmul.f32 %v2655, %v954
        %v2683 = vmul.f32 %v2640, %v950
        %v2684 = vmul.f32 %v2656, %v954
        %v2685 = vmul.f32 %v2641, %v950
        %v2686 = vmul.f32 %v2657, %v954
        %v2687 = vmul.f32 %v2642, %v950
        %v2688 = vmul.f32 %v2658, %v954
        %v2689 = vmul.f32 %v2643, %v950
        %v2690 = vmul.f32 %v2659, %v954
        %v2691 = vmul.f32 %v2644, %v950
        %v2692 = vmul.f32 %v2660, %v954
        %v2693 = vpack.c.bf16 %v2663, %v2661
        %v2694 = vpack.c.bf16 %v2664, %v2662
        %v2695 = vpack.c.bf16 %v2667, %v2665
        %v2696 = vpack.c.bf16 %v2668, %v2666
        %v2697 = vpack.c.bf16 %v2671, %v2669
        %v2698 = vpack.c.bf16 %v2672, %v2670
        %v2699 = vpack.c.bf16 %v2675, %v2673
        %v2700 = vpack.c.bf16 %v2676, %v2674
        %v2701 = vpack.c.bf16 %v2679, %v2677
        %v2702 = vpack.c.bf16 %v2680, %v2678
        %v2703 = vpack.c.bf16 %v2683, %v2681
        %v2704 = vpack.c.bf16 %v2684, %v2682
        %v2705 = vpack.c.bf16 %v2687, %v2685
        %v2706 = vpack.c.bf16 %v2688, %v2686
        %v2707 = vpack.c.bf16 %v2691, %v2689
        %v2708 = vpack.c.bf16 %v2692, %v2690
        %2709 = vrot.lane.b32.xlu0 %v1941, 113
        %v2710 = vpop.permute.xlu0 %2709
        %2711 = vrot.lane.b32.xlu0 %v1943, 113
        %v2712 = vpop.permute.xlu0 %2711
        %2713 = vrot.lane.b32.xlu0 %v1945, 113
        %v2714 = vpop.permute.xlu0 %2713
        %2715 = vrot.lane.b32.xlu0 %v1947, 113
        %v2716 = vpop.permute.xlu0 %2715
        %2717 = vrot.lane.b32.xlu0 %v1949, 113
        %v2718 = vpop.permute.xlu0 %2717
        %2719 = vrot.lane.b32.xlu0 %v1951, 113
        %v2720 = vpop.permute.xlu0 %2719
        %2721 = vrot.lane.b32.xlu0 %v1953, 113
        %v2722 = vpop.permute.xlu0 %2721
        %2723 = vrot.lane.b32.xlu0 %v1955, 113
        %v2724 = vpop.permute.xlu0 %2723
        %2725 = vrot.lane.b32.xlu0 %v1957, 113
        %v2726 = vpop.permute.xlu0 %2725
        %2727 = vrot.lane.b32.xlu0 %v1959, 113
        %v2728 = vpop.permute.xlu0 %2727
        %2729 = vrot.lane.b32.xlu0 %v1961, 113
        %v2730 = vpop.permute.xlu0 %2729
        %2731 = vrot.lane.b32.xlu0 %v1963, 113
        %v2732 = vpop.permute.xlu0 %2731
        %2733 = vrot.lane.b32.xlu0 %v1965, 113
        %v2734 = vpop.permute.xlu0 %2733
        %2735 = vrot.lane.b32.xlu0 %v1967, 113
        %v2736 = vpop.permute.xlu0 %2735
        %2737 = vrot.lane.b32.xlu0 %v1969, 113
        %v2738 = vpop.permute.xlu0 %2737
        %2739 = vrot.lane.b32.xlu0 %v1971, 113
        %v2740 = vpop.permute.xlu0 %2739
        %2741 = vrot.lane.b32.xlu0 %v1942, 113
        %v2742 = vpop.permute.xlu0 %2741
        %2743 = vrot.lane.b32.xlu0 %v1944, 113
        %v2744 = vpop.permute.xlu0 %2743
        %2745 = vrot.lane.b32.xlu0 %v1946, 113
        %v2746 = vpop.permute.xlu0 %2745
        %2747 = vrot.lane.b32.xlu0 %v1948, 113
        %v2748 = vpop.permute.xlu0 %2747
        %2749 = vrot.lane.b32.xlu0 %v1950, 113
        %v2750 = vpop.permute.xlu0 %2749
        %2751 = vrot.lane.b32.xlu0 %v1952, 113
        %v2752 = vpop.permute.xlu0 %2751
        %2753 = vrot.lane.b32.xlu0 %v1954, 113
        %v2754 = vpop.permute.xlu0 %2753
        %2755 = vrot.lane.b32.xlu0 %v1956, 113
        %v2756 = vpop.permute.xlu0 %2755
        %2757 = vrot.lane.b32.xlu0 %v1958, 113
        %v2758 = vpop.permute.xlu0 %2757
        %2759 = vrot.lane.b32.xlu0 %v1960, 113
        %v2760 = vpop.permute.xlu0 %2759
        %2761 = vrot.lane.b32.xlu0 %v1962, 113
        %v2762 = vpop.permute.xlu0 %2761
        %2763 = vrot.lane.b32.xlu0 %v1964, 113
        %v2764 = vpop.permute.xlu0 %2763
        %2765 = vrot.lane.b32.xlu0 %v1966, 113
        %v2766 = vpop.permute.xlu0 %2765
        %2767 = vrot.lane.b32.xlu0 %v1968, 113
        %v2768 = vpop.permute.xlu0 %2767
        %2769 = vrot.lane.b32.xlu0 %v1970, 113
        %v2770 = vpop.permute.xlu0 %2769
        %2771 = vrot.lane.b32.xlu0 %v1972, 113
        %v2772 = vpop.permute.xlu0 %2771
        %v2773 = vsel %vm1013, %v2710, %v2742
        %v2774 = vsel %vm1013, %v2712, %v2744
        %v2775 = vsel %vm1013, %v2714, %v2746
        %v2776 = vsel %vm1013, %v2716, %v2748
        %v2777 = vsel %vm1013, %v2718, %v2750
        %v2778 = vsel %vm1013, %v2720, %v2752
        %v2779 = vsel %vm1013, %v2722, %v2754
        %v2780 = vsel %vm1013, %v2724, %v2756
        %v2781 = vsel %vm1013, %v2726, %v2758
        %v2782 = vsel %vm1013, %v2728, %v2760
        %v2783 = vsel %vm1013, %v2730, %v2762
        %v2784 = vsel %vm1013, %v2732, %v2764
        %v2785 = vsel %vm1013, %v2734, %v2766
        %v2786 = vsel %vm1013, %v2736, %v2768
        %v2787 = vsel %vm1013, %v2738, %v2770
        %v2788 = vsel %vm1013, %v2740, %v2772
        %v2789 = vsel %vm1013, %v2742, %v2710
        %v2790 = vsel %vm1013, %v2744, %v2712
        %v2791 = vsel %vm1013, %v2746, %v2714
        %v2792 = vsel %vm1013, %v2748, %v2716
        %v2793 = vsel %vm1013, %v2750, %v2718
        %v2794 = vsel %vm1013, %v2752, %v2720
        %v2795 = vsel %vm1013, %v2754, %v2722
        %v2796 = vsel %vm1013, %v2756, %v2724
        %v2797 = vsel %vm1013, %v2758, %v2726
        %v2798 = vsel %vm1013, %v2760, %v2728
        %v2799 = vsel %vm1013, %v2762, %v2730
        %v2800 = vsel %vm1013, %v2764, %v2732
        %v2801 = vsel %vm1013, %v2766, %v2734
        %v2802 = vsel %vm1013, %v2768, %v2736
        %v2803 = vsel %vm1013, %v2770, %v2738
        %v2804 = vsel %vm1013, %v2772, %v2740
        %v2805 = vmul.f32 %v2773, %v1034
        %v2806 = vmul.f32 %v2789, %v1038
        %v2807 = vmul.f32 %v2774, %v1034
        %v2808 = vmul.f32 %v2790, %v1038
        %v2809 = vmul.f32 %v2775, %v1034
        %v2810 = vmul.f32 %v2791, %v1038
        %v2811 = vmul.f32 %v2776, %v1034
        %v2812 = vmul.f32 %v2792, %v1038
        %v2813 = vmul.f32 %v2777, %v1034
        %v2814 = vmul.f32 %v2793, %v1038
        %v2815 = vmul.f32 %v2778, %v1034
        %v2816 = vmul.f32 %v2794, %v1038
        %v2817 = vmul.f32 %v2779, %v1034
        %v2818 = vmul.f32 %v2795, %v1038
        %v2819 = vmul.f32 %v2780, %v1034
        %v2820 = vmul.f32 %v2796, %v1038
        %v2821 = vmul.f32 %v2781, %v1034
        %v2822 = vmul.f32 %v2797, %v1038
        %v2823 = vmul.f32 %v2782, %v1034
        %v2824 = vmul.f32 %v2798, %v1038
        %v2825 = vmul.f32 %v2783, %v1034
        %v2826 = vmul.f32 %v2799, %v1038
        %v2827 = vmul.f32 %v2784, %v1034
        %v2828 = vmul.f32 %v2800, %v1038
        %v2829 = vmul.f32 %v2785, %v1034
        %v2830 = vmul.f32 %v2801, %v1038
        %v2831 = vmul.f32 %v2786, %v1034
        %v2832 = vmul.f32 %v2802, %v1038
        %v2833 = vmul.f32 %v2787, %v1034
        %v2834 = vmul.f32 %v2803, %v1038
        %v2835 = vmul.f32 %v2788, %v1034
        %v2836 = vmul.f32 %v2804, %v1038
        %v2837 = vpack.c.bf16 %v2807, %v2805
        %v2838 = vpack.c.bf16 %v2808, %v2806
        %v2839 = vpack.c.bf16 %v2811, %v2809
        %v2840 = vpack.c.bf16 %v2812, %v2810
        %v2841 = vpack.c.bf16 %v2815, %v2813
        %v2842 = vpack.c.bf16 %v2816, %v2814
        %v2843 = vpack.c.bf16 %v2819, %v2817
        %v2844 = vpack.c.bf16 %v2820, %v2818
        %v2845 = vpack.c.bf16 %v2823, %v2821
        %v2846 = vpack.c.bf16 %v2824, %v2822
        %v2847 = vpack.c.bf16 %v2827, %v2825
        %v2848 = vpack.c.bf16 %v2828, %v2826
        %v2849 = vpack.c.bf16 %v2831, %v2829
        %v2850 = vpack.c.bf16 %v2832, %v2830
        %v2851 = vpack.c.bf16 %v2835, %v2833
        %v2852 = vpack.c.bf16 %v2836, %v2834
        %2853 = vrot.lane.b32.xlu0 %v1941, 112
        %v2854 = vpop.permute.xlu0 %2853
        %2855 = vrot.lane.b32.xlu0 %v1943, 112
        %v2856 = vpop.permute.xlu0 %2855
        %2857 = vrot.lane.b32.xlu0 %v1945, 112
        %v2858 = vpop.permute.xlu0 %2857
        %2859 = vrot.lane.b32.xlu0 %v1947, 112
        %v2860 = vpop.permute.xlu0 %2859
        %2861 = vrot.lane.b32.xlu0 %v1949, 112
        %v2862 = vpop.permute.xlu0 %2861
        %2863 = vrot.lane.b32.xlu0 %v1951, 112
        %v2864 = vpop.permute.xlu0 %2863
        %2865 = vrot.lane.b32.xlu0 %v1953, 112
        %v2866 = vpop.permute.xlu0 %2865
        %2867 = vrot.lane.b32.xlu0 %v1955, 112
        %v2868 = vpop.permute.xlu0 %2867
        %2869 = vrot.lane.b32.xlu0 %v1957, 112
        %v2870 = vpop.permute.xlu0 %2869
        %2871 = vrot.lane.b32.xlu0 %v1959, 112
        %v2872 = vpop.permute.xlu0 %2871
        %2873 = vrot.lane.b32.xlu0 %v1961, 112
        %v2874 = vpop.permute.xlu0 %2873
        %2875 = vrot.lane.b32.xlu0 %v1963, 112
        %v2876 = vpop.permute.xlu0 %2875
        %2877 = vrot.lane.b32.xlu0 %v1965, 112
        %v2878 = vpop.permute.xlu0 %2877
        %2879 = vrot.lane.b32.xlu0 %v1967, 112
        %v2880 = vpop.permute.xlu0 %2879
        %2881 = vrot.lane.b32.xlu0 %v1969, 112
        %v2882 = vpop.permute.xlu0 %2881
        %2883 = vrot.lane.b32.xlu0 %v1971, 112
        %v2884 = vpop.permute.xlu0 %2883
        %2885 = vrot.lane.b32.xlu0 %v1942, 112
        %v2886 = vpop.permute.xlu0 %2885
        %2887 = vrot.lane.b32.xlu0 %v1944, 112
        %v2888 = vpop.permute.xlu0 %2887
        %2889 = vrot.lane.b32.xlu0 %v1946, 112
        %v2890 = vpop.permute.xlu0 %2889
        %2891 = vrot.lane.b32.xlu0 %v1948, 112
        %v2892 = vpop.permute.xlu0 %2891
        %2893 = vrot.lane.b32.xlu0 %v1950, 112
        %v2894 = vpop.permute.xlu0 %2893
        %2895 = vrot.lane.b32.xlu0 %v1952, 112
        %v2896 = vpop.permute.xlu0 %2895
        %2897 = vrot.lane.b32.xlu0 %v1954, 112
        %v2898 = vpop.permute.xlu0 %2897
        %2899 = vrot.lane.b32.xlu0 %v1956, 112
        %v2900 = vpop.permute.xlu0 %2899
        %2901 = vrot.lane.b32.xlu0 %v1958, 112
        %v2902 = vpop.permute.xlu0 %2901
        %2903 = vrot.lane.b32.xlu0 %v1960, 112
        %v2904 = vpop.permute.xlu0 %2903
        %2905 = vrot.lane.b32.xlu0 %v1962, 112
        %v2906 = vpop.permute.xlu0 %2905
        %2907 = vrot.lane.b32.xlu0 %v1964, 112
        %v2908 = vpop.permute.xlu0 %2907
        %2909 = vrot.lane.b32.xlu0 %v1966, 112
        %v2910 = vpop.permute.xlu0 %2909
        %2911 = vrot.lane.b32.xlu0 %v1968, 112
        %v2912 = vpop.permute.xlu0 %2911
        %2913 = vrot.lane.b32.xlu0 %v1970, 112
        %v2914 = vpop.permute.xlu0 %2913
        %2915 = vrot.lane.b32.xlu0 %v1972, 112
        %v2916 = vpop.permute.xlu0 %2915
        %v2917 = vsel %vm1097, %v2854, %v2886
        %v2918 = vsel %vm1097, %v2856, %v2888
        %v2919 = vsel %vm1097, %v2858, %v2890
        %v2920 = vsel %vm1097, %v2860, %v2892
        %v2921 = vsel %vm1097, %v2862, %v2894
        %v2922 = vsel %vm1097, %v2864, %v2896
        %v2923 = vsel %vm1097, %v2866, %v2898
        %v2924 = vsel %vm1097, %v2868, %v2900
        %v2925 = vsel %vm1097, %v2870, %v2902
        %v2926 = vsel %vm1097, %v2872, %v2904
        %v2927 = vsel %vm1097, %v2874, %v2906
        %v2928 = vsel %vm1097, %v2876, %v2908
        %v2929 = vsel %vm1097, %v2878, %v2910
        %v2930 = vsel %vm1097, %v2880, %v2912
        %v2931 = vsel %vm1097, %v2882, %v2914
        %v2932 = vsel %vm1097, %v2884, %v2916
        %v2933 = vsel %vm1097, %v2886, %v2854
        %v2934 = vsel %vm1097, %v2888, %v2856
        %v2935 = vsel %vm1097, %v2890, %v2858
        %v2936 = vsel %vm1097, %v2892, %v2860
        %v2937 = vsel %vm1097, %v2894, %v2862
        %v2938 = vsel %vm1097, %v2896, %v2864
        %v2939 = vsel %vm1097, %v2898, %v2866
        %v2940 = vsel %vm1097, %v2900, %v2868
        %v2941 = vsel %vm1097, %v2902, %v2870
        %v2942 = vsel %vm1097, %v2904, %v2872
        %v2943 = vsel %vm1097, %v2906, %v2874
        %v2944 = vsel %vm1097, %v2908, %v2876
        %v2945 = vsel %vm1097, %v2910, %v2878
        %v2946 = vsel %vm1097, %v2912, %v2880
        %v2947 = vsel %vm1097, %v2914, %v2882
        %v2948 = vsel %vm1097, %v2916, %v2884
        %v2949 = vmul.f32 %v2917, %v1118
        %v2950 = vmul.f32 %v2933, %v1122
        %v2951 = vmul.f32 %v2918, %v1118
        %v2952 = vmul.f32 %v2934, %v1122
        %v2953 = vmul.f32 %v2919, %v1118
        %v2954 = vmul.f32 %v2935, %v1122
        %v2955 = vmul.f32 %v2920, %v1118
        %v2956 = vmul.f32 %v2936, %v1122
        %v2957 = vmul.f32 %v2921, %v1118
        %v2958 = vmul.f32 %v2937, %v1122
        %v2959 = vmul.f32 %v2922, %v1118
        %v2960 = vmul.f32 %v2938, %v1122
        %v2961 = vmul.f32 %v2923, %v1118
        %v2962 = vmul.f32 %v2939, %v1122
        %v2963 = vmul.f32 %v2924, %v1118
        %v2964 = vmul.f32 %v2940, %v1122
        %v2965 = vmul.f32 %v2925, %v1118
        %v2966 = vmul.f32 %v2941, %v1122
        %v2967 = vmul.f32 %v2926, %v1118
        %v2968 = vmul.f32 %v2942, %v1122
        %v2969 = vmul.f32 %v2927, %v1118
        %v2970 = vmul.f32 %v2943, %v1122
        %v2971 = vmul.f32 %v2928, %v1118
        %v2972 = vmul.f32 %v2944, %v1122
        %v2973 = vmul.f32 %v2929, %v1118
        %v2974 = vmul.f32 %v2945, %v1122
        %v2975 = vmul.f32 %v2930, %v1118
        %v2976 = vmul.f32 %v2946, %v1122
        %v2977 = vmul.f32 %v2931, %v1118
        %v2978 = vmul.f32 %v2947, %v1122
        %v2979 = vmul.f32 %v2932, %v1118
        %v2980 = vmul.f32 %v2948, %v1122
        %v2981 = vpack.c.bf16 %v2951, %v2949
        %v2982 = vpack.c.bf16 %v2952, %v2950
        %v2983 = vpack.c.bf16 %v2955, %v2953
        %v2984 = vpack.c.bf16 %v2956, %v2954
        %v2985 = vpack.c.bf16 %v2959, %v2957
        %v2986 = vpack.c.bf16 %v2960, %v2958
        %v2987 = vpack.c.bf16 %v2963, %v2961
        %v2988 = vpack.c.bf16 %v2964, %v2962
        %v2989 = vpack.c.bf16 %v2967, %v2965
        %v2990 = vpack.c.bf16 %v2968, %v2966
        %v2991 = vpack.c.bf16 %v2971, %v2969
        %v2992 = vpack.c.bf16 %v2972, %v2970
        %v2993 = vpack.c.bf16 %v2975, %v2973
        %v2994 = vpack.c.bf16 %v2976, %v2974
        %v2995 = vpack.c.bf16 %v2979, %v2977
        %v2996 = vpack.c.bf16 %v2980, %v2978
        %2997 = vrot.lane.b32.xlu0 %v1941, 111
        %v2998 = vpop.permute.xlu0 %2997
        %2999 = vrot.lane.b32.xlu0 %v1943, 111
        %v3000 = vpop.permute.xlu0 %2999
        %3001 = vrot.lane.b32.xlu0 %v1945, 111
        %v3002 = vpop.permute.xlu0 %3001
        %3003 = vrot.lane.b32.xlu0 %v1947, 111
        %v3004 = vpop.permute.xlu0 %3003
        %3005 = vrot.lane.b32.xlu0 %v1949, 111
        %v3006 = vpop.permute.xlu0 %3005
        %3007 = vrot.lane.b32.xlu0 %v1951, 111
        %v3008 = vpop.permute.xlu0 %3007
        %3009 = vrot.lane.b32.xlu0 %v1953, 111
        %v3010 = vpop.permute.xlu0 %3009
        %3011 = vrot.lane.b32.xlu0 %v1955, 111
        %v3012 = vpop.permute.xlu0 %3011
        %3013 = vrot.lane.b32.xlu0 %v1957, 111
        %v3014 = vpop.permute.xlu0 %3013
        %3015 = vrot.lane.b32.xlu0 %v1959, 111
        %v3016 = vpop.permute.xlu0 %3015
        %3017 = vrot.lane.b32.xlu0 %v1961, 111
        %v3018 = vpop.permute.xlu0 %3017
        %3019 = vrot.lane.b32.xlu0 %v1963, 111
        %v3020 = vpop.permute.xlu0 %3019
        %3021 = vrot.lane.b32.xlu0 %v1965, 111
        %v3022 = vpop.permute.xlu0 %3021
        %3023 = vrot.lane.b32.xlu0 %v1967, 111
        %v3024 = vpop.permute.xlu0 %3023
        %3025 = vrot.lane.b32.xlu0 %v1969, 111
        %v3026 = vpop.permute.xlu0 %3025
        %3027 = vrot.lane.b32.xlu0 %v1971, 111
        %v3028 = vpop.permute.xlu0 %3027
        %3029 = vrot.lane.b32.xlu0 %v1942, 111
        %v3030 = vpop.permute.xlu0 %3029
        %3031 = vrot.lane.b32.xlu0 %v1944, 111
        %v3032 = vpop.permute.xlu0 %3031
        %3033 = vrot.lane.b32.xlu0 %v1946, 111
        %v3034 = vpop.permute.xlu0 %3033
        %3035 = vrot.lane.b32.xlu0 %v1948, 111
        %v3036 = vpop.permute.xlu0 %3035
        %3037 = vrot.lane.b32.xlu0 %v1950, 111
        %v3038 = vpop.permute.xlu0 %3037
        %3039 = vrot.lane.b32.xlu0 %v1952, 111
        %v3040 = vpop.permute.xlu0 %3039
        %3041 = vrot.lane.b32.xlu0 %v1954, 111
        %v3042 = vpop.permute.xlu0 %3041
        %3043 = vrot.lane.b32.xlu0 %v1956, 111
        %v3044 = vpop.permute.xlu0 %3043
        %3045 = vrot.lane.b32.xlu0 %v1958, 111
        %v3046 = vpop.permute.xlu0 %3045
        %3047 = vrot.lane.b32.xlu0 %v1960, 111
        %v3048 = vpop.permute.xlu0 %3047
        %3049 = vrot.lane.b32.xlu0 %v1962, 111
        %v3050 = vpop.permute.xlu0 %3049
        %3051 = vrot.lane.b32.xlu0 %v1964, 111
        %v3052 = vpop.permute.xlu0 %3051
        %3053 = vrot.lane.b32.xlu0 %v1966, 111
        %v3054 = vpop.permute.xlu0 %3053
        %3055 = vrot.lane.b32.xlu0 %v1968, 111
        %v3056 = vpop.permute.xlu0 %3055
        %3057 = vrot.lane.b32.xlu0 %v1970, 111
        %v3058 = vpop.permute.xlu0 %3057
        %3059 = vrot.lane.b32.xlu0 %v1972, 111
        %v3060 = vpop.permute.xlu0 %3059
        %v3061 = vsel %vm1181, %v2998, %v3030
        %v3062 = vsel %vm1181, %v3000, %v3032
        %v3063 = vsel %vm1181, %v3002, %v3034
        %v3064 = vsel %vm1181, %v3004, %v3036
        %v3065 = vsel %vm1181, %v3006, %v3038
        %v3066 = vsel %vm1181, %v3008, %v3040
        %v3067 = vsel %vm1181, %v3010, %v3042
        %v3068 = vsel %vm1181, %v3012, %v3044
        %v3069 = vsel %vm1181, %v3014, %v3046
        %v3070 = vsel %vm1181, %v3016, %v3048
        %v3071 = vsel %vm1181, %v3018, %v3050
        %v3072 = vsel %vm1181, %v3020, %v3052
        %v3073 = vsel %vm1181, %v3022, %v3054
        %v3074 = vsel %vm1181, %v3024, %v3056
        %v3075 = vsel %vm1181, %v3026, %v3058
        %v3076 = vsel %vm1181, %v3028, %v3060
        %v3077 = vsel %vm1181, %v3030, %v2998
        %v3078 = vsel %vm1181, %v3032, %v3000
        %v3079 = vsel %vm1181, %v3034, %v3002
        %v3080 = vsel %vm1181, %v3036, %v3004
        %v3081 = vsel %vm1181, %v3038, %v3006
        %v3082 = vsel %vm1181, %v3040, %v3008
        %v3083 = vsel %vm1181, %v3042, %v3010
        %v3084 = vsel %vm1181, %v3044, %v3012
        %v3085 = vsel %vm1181, %v3046, %v3014
        %v3086 = vsel %vm1181, %v3048, %v3016
        %v3087 = vsel %vm1181, %v3050, %v3018
        %v3088 = vsel %vm1181, %v3052, %v3020
        %v3089 = vsel %vm1181, %v3054, %v3022
        %v3090 = vsel %vm1181, %v3056, %v3024
        %v3091 = vsel %vm1181, %v3058, %v3026
        %v3092 = vsel %vm1181, %v3060, %v3028
        %v3093 = vmul.f32 %v3061, %v1202
        %v3094 = vmul.f32 %v3077, %v1206
        %v3095 = vmul.f32 %v3062, %v1202
        %v3096 = vmul.f32 %v3078, %v1206
        %v3097 = vmul.f32 %v3063, %v1202
        %v3098 = vmul.f32 %v3079, %v1206
        %v3099 = vmul.f32 %v3064, %v1202
        %v3100 = vmul.f32 %v3080, %v1206
        %v3101 = vmul.f32 %v3065, %v1202
        %v3102 = vmul.f32 %v3081, %v1206
        %v3103 = vmul.f32 %v3066, %v1202
        %v3104 = vmul.f32 %v3082, %v1206
        %v3105 = vmul.f32 %v3067, %v1202
        %v3106 = vmul.f32 %v3083, %v1206
        %v3107 = vmul.f32 %v3068, %v1202
        %v3108 = vmul.f32 %v3084, %v1206
        %v3109 = vmul.f32 %v3069, %v1202
        %v3110 = vmul.f32 %v3085, %v1206
        %v3111 = vmul.f32 %v3070, %v1202
        %v3112 = vmul.f32 %v3086, %v1206
        %v3113 = vmul.f32 %v3071, %v1202
        %v3114 = vmul.f32 %v3087, %v1206
        %v3115 = vmul.f32 %v3072, %v1202
        %v3116 = vmul.f32 %v3088, %v1206
        %v3117 = vmul.f32 %v3073, %v1202
        %v3118 = vmul.f32 %v3089, %v1206
        %v3119 = vmul.f32 %v3074, %v1202
        %v3120 = vmul.f32 %v3090, %v1206
        %v3121 = vmul.f32 %v3075, %v1202
        %v3122 = vmul.f32 %v3091, %v1206
        %v3123 = vmul.f32 %v3076, %v1202
        %v3124 = vmul.f32 %v3092, %v1206
        %v3125 = vpack.c.bf16 %v3095, %v3093
        %v3126 = vpack.c.bf16 %v3096, %v3094
        %v3127 = vpack.c.bf16 %v3099, %v3097
        %v3128 = vpack.c.bf16 %v3100, %v3098
        %v3129 = vpack.c.bf16 %v3103, %v3101
        %v3130 = vpack.c.bf16 %v3104, %v3102
        %v3131 = vpack.c.bf16 %v3107, %v3105
        %v3132 = vpack.c.bf16 %v3108, %v3106
        %v3133 = vpack.c.bf16 %v3111, %v3109
        %v3134 = vpack.c.bf16 %v3112, %v3110
        %v3135 = vpack.c.bf16 %v3115, %v3113
        %v3136 = vpack.c.bf16 %v3116, %v3114
        %v3137 = vpack.c.bf16 %v3119, %v3117
        %v3138 = vpack.c.bf16 %v3120, %v3118
        %v3139 = vpack.c.bf16 %v3123, %v3121
        %v3140 = vpack.c.bf16 %v3124, %v3122
        %v3141 = vld [vmem:[%s4] sm:$0xff]
        %v3142 = vld [vmem:[%s4 + $0x8] sm:$0xff]
        %v3143 = vld [vmem:[%s4 + $0x10] sm:$0xff]
        %v3144 = vld [vmem:[%s4 + $0x18] sm:$0xff]
        %v3145 = vld [vmem:[%s4 + $0x20] sm:$0xf]
        %v3146 = vld [vmem:[%s4 + $0x24] sm:$0xff]
        %v3147 = vld [vmem:[%s4 + $0x2c] sm:$0xff]
        %v3148 = vld [vmem:[%s4 + $0x34] sm:$0xff]
        %v3149 = vld [vmem:[%s4 + $0x3c] sm:$0xff]
        %v3150 = vld [vmem:[%s4 + $0x44] sm:$0xf]
        %v3151 = vld [vmem:[%s4 + $0x48] sm:$0xff]
        %v3152 = vld [vmem:[%s4 + $0x50] sm:$0xff]
        %v3153 = vld [vmem:[%s4 + $0x58] sm:$0xff]
        %v3154 = vld [vmem:[%s4 + $0x60] sm:$0xff]
        %v3155 = vld [vmem:[%s4 + $0x68] sm:$0xf]
        %v3156 = vld [vmem:[%s4 + $0x6c] sm:$0xff]
        %v3157 = vld [vmem:[%s4 + $0x74] sm:$0xff]
        %v3158 = vld [vmem:[%s4 + $0x7c] sm:$0xff]
        %v3159 = vld [vmem:[%s4 + $0x84] sm:$0xff]
        %v3160 = vld [vmem:[%s4 + $0x8c] sm:$0xf]
        %v3161 = vld [vmem:[%s4 + $0x90] sm:$0xff]
        %v3162 = vld [vmem:[%s4 + $0x98] sm:$0xff]
        %v3163 = vld [vmem:[%s4 + $0xa0] sm:$0xff]
        %v3164 = vld [vmem:[%s4 + $0xa8] sm:$0xff]
        %v3165 = vld [vmem:[%s4 + $0xb0] sm:$0xf]
        %v3166 = vld [vmem:[%s4 + $0xb4] sm:$0xff]
        %v3167 = vld [vmem:[%s4 + $0xbc] sm:$0xff]
        %v3168 = vld [vmem:[%s4 + $0xc4] sm:$0xff]
        %v3169 = vld [vmem:[%s4 + $0xcc] sm:$0xff]
        %v3170 = vld [vmem:[%s4 + $0xd4] sm:$0xf]
        %v3171 = vld [vmem:[%s4 + $0xd8] sm:$0xff]
        %v3172 = vld [vmem:[%s4 + $0xe0] sm:$0xff]
        %v3173 = vld [vmem:[%s4 + $0xe8] sm:$0xff]
        %v3174 = vld [vmem:[%s4 + $0xf0] sm:$0xff]
        %v3175 = vld [vmem:[%s4 + $0xf8] sm:$0xf]
        %v3176 = vld [vmem:[%s4 + $0xfc] sm:$0xff]
        %v3177 = vld [vmem:[%s4 + $0x104] sm:$0xff]
        %v3178 = vld [vmem:[%s4 + $0x10c] sm:$0xff]
        %v3179 = vld [vmem:[%s4 + $0x114] sm:$0xff]
        %v3180 = vld [vmem:[%s4 + $0x11c] sm:$0xf]
        %v3181 = vld [vmem:[%s4 + $0x120] sm:$0xff]
        %v3182 = vld [vmem:[%s4 + $0x128] sm:$0xff]
        %v3183 = vld [vmem:[%s4 + $0x130] sm:$0xff]
        %v3184 = vld [vmem:[%s4 + $0x138] sm:$0xff]
        %v3185 = vld [vmem:[%s4 + $0x140] sm:$0xf]
        %v3186 = vld [vmem:[%s4 + $0x144] sm:$0xff]
        %v3187 = vld [vmem:[%s4 + $0x14c] sm:$0xff]
        %v3188 = vld [vmem:[%s4 + $0x154] sm:$0xff]
        %v3189 = vld [vmem:[%s4 + $0x15c] sm:$0xff]
        %v3190 = vld [vmem:[%s4 + $0x164] sm:$0xf]
        %v3191 = vld [vmem:[%s4 + $0x168] sm:$0xff]
        %v3192 = vld [vmem:[%s4 + $0x170] sm:$0xff]
        %v3193 = vld [vmem:[%s4 + $0x178] sm:$0xff]
        %v3194 = vld [vmem:[%s4 + $0x180] sm:$0xff]
        %v3195 = vld [vmem:[%s4 + $0x188] sm:$0xf]
        %v3196 = vld [vmem:[%s4 + $0x18c] sm:$0xff]
        %v3197 = vld [vmem:[%s4 + $0x194] sm:$0xff]
        %v3198 = vld [vmem:[%s4 + $0x19c] sm:$0xff]
        %v3199 = vld [vmem:[%s4 + $0x1a4] sm:$0xff]
        %v3200 = vld [vmem:[%s4 + $0x1ac] sm:$0xf]
        %v3201 = vld [vmem:[%s4 + $0x1b0] sm:$0xff]
        %v3202 = vld [vmem:[%s4 + $0x1b8] sm:$0xff]
        %v3203 = vld [vmem:[%s4 + $0x1c0] sm:$0xff]
        %v3204 = vld [vmem:[%s4 + $0x1c8] sm:$0xff]
        %v3205 = vld [vmem:[%s4 + $0x1d0] sm:$0xf]
        %v3206 = vld [vmem:[%s4 + $0x1d4] sm:$0xff]
        %v3207 = vld [vmem:[%s4 + $0x1dc] sm:$0xff]
        %v3208 = vld [vmem:[%s4 + $0x1e4] sm:$0xff]
        %v3209 = vld [vmem:[%s4 + $0x1ec] sm:$0xff]
        %v3210 = vld [vmem:[%s4 + $0x1f4] sm:$0xf]
        %v3211 = vld [vmem:[%s4 + $0x1f8] sm:$0xff]
        %v3212 = vld [vmem:[%s4 + $0x200] sm:$0xff]
        %v3213 = vld [vmem:[%s4 + $0x208] sm:$0xff]
        %v3214 = vld [vmem:[%s4 + $0x210] sm:$0xff]
        %v3215 = vld [vmem:[%s4 + $0x218] sm:$0xf]
        %v3216 = vld [vmem:[%s4 + $0x21c] sm:$0xff]
        %v3217 = vld [vmem:[%s4 + $0x224] sm:$0xff]
        %v3218 = vld [vmem:[%s4 + $0x22c] sm:$0xff]
        %v3219 = vld [vmem:[%s4 + $0x234] sm:$0xff]
        %v3220 = vld [vmem:[%s4 + $0x23c] sm:$0xf]
        %v3221 = vld [vmem:[%s5] sm:$0xff]
        %v3222 = vld [vmem:[%s5 + $0x8] sm:$0xff]
        %v3223 = vld [vmem:[%s5 + $0x10] sm:$0xff]
        %v3224 = vld [vmem:[%s5 + $0x18] sm:$0xff]
        %v3225 = vld [vmem:[%s5 + $0x20] sm:$0xff]
        %v3226 = vld [vmem:[%s5 + $0x28] sm:$0xff]
        %v3227 = vld [vmem:[%s5 + $0x30] sm:$0xff]
        %v3228 = vld [vmem:[%s5 + $0x38] sm:$0xff]
        %v3229 = vld [vmem:[%s5 + $0x40] sm:$0xff]
        %v3230 = vld [vmem:[%s5 + $0x48] sm:$0xff]
        %v3231 = vld [vmem:[%s5 + $0x50] sm:$0xff]
        %v3232 = vld [vmem:[%s5 + $0x58] sm:$0xff]
        %v3233 = vld [vmem:[%s5 + $0x60] sm:$0xff]
        %v3234 = vld [vmem:[%s5 + $0x68] sm:$0xff]
        %v3235 = vld [vmem:[%s5 + $0x70] sm:$0xff]
        %v3236 = vld [vmem:[%s5 + $0x78] sm:$0xff]
        %3238 = vset.pattern.permute.xlu0 0
        %3239 = vperm.xlu0 %3238, %v3221
        %v3240 = vpop.permute.xlu0 %3239
        %3243 = vset.pattern.permute.xlu0 0
        %3244 = vperm.xlu0 %3243, %v3222
        %v3245 = vpop.permute.xlu0 %3244
        %3248 = vset.pattern.permute.xlu0 0
        %3249 = vperm.xlu0 %3248, %v3223
        %v3250 = vpop.permute.xlu0 %3249
        %3253 = vset.pattern.permute.xlu0 0
        %3254 = vperm.xlu0 %3253, %v3224
        %v3255 = vpop.permute.xlu0 %3254
        %3258 = vset.pattern.permute.xlu0 0
        %3259 = vperm.xlu0 %3258, %v3225
        %v3260 = vpop.permute.xlu0 %3259
        %3263 = vset.pattern.permute.xlu0 0
        %3264 = vperm.xlu0 %3263, %v3226
        %v3265 = vpop.permute.xlu0 %3264
        %3268 = vset.pattern.permute.xlu0 0
        %3269 = vperm.xlu0 %3268, %v3227
        %v3270 = vpop.permute.xlu0 %3269
        %3273 = vset.pattern.permute.xlu0 0
        %3274 = vperm.xlu0 %3273, %v3228
        %v3275 = vpop.permute.xlu0 %3274
        %3278 = vset.pattern.permute.xlu0 0
        %3279 = vperm.xlu0 %3278, %v3229
        %v3280 = vpop.permute.xlu0 %3279
        %3283 = vset.pattern.permute.xlu0 0
        %3284 = vperm.xlu0 %3283, %v3230
        %v3285 = vpop.permute.xlu0 %3284
        %3288 = vset.pattern.permute.xlu0 0
        %3289 = vperm.xlu0 %3288, %v3231
        %v3290 = vpop.permute.xlu0 %3289
        %3293 = vset.pattern.permute.xlu0 0
        %3294 = vperm.xlu0 %3293, %v3232
        %v3295 = vpop.permute.xlu0 %3294
        %3298 = vset.pattern.permute.xlu0 0
        %3299 = vperm.xlu0 %3298, %v3233
        %v3300 = vpop.permute.xlu0 %3299
        %3303 = vset.pattern.permute.xlu0 0
        %3304 = vperm.xlu0 %3303, %v3234
        %v3305 = vpop.permute.xlu0 %3304
        %3308 = vset.pattern.permute.xlu0 0
        %3309 = vperm.xlu0 %3308, %v3235
        %v3310 = vpop.permute.xlu0 %3309
        %3313 = vset.pattern.permute.xlu0 0
        %3314 = vperm.xlu0 %3313, %v3236
        %v3315 = vpop.permute.xlu0 %3314
        %v3397 = vunpack.c.l.b16 %v3141
        %v3398 = vunpack.c.h.b16 %v3141
        %v3399 = vunpack.c.l.b16 %v3142
        %v3400 = vunpack.c.h.b16 %v3142
        %v3401 = vunpack.c.l.b16 %v3143
        %v3402 = vunpack.c.h.b16 %v3143
        %v3403 = vunpack.c.l.b16 %v3144
        %v3404 = vunpack.c.h.b16 %v3144
        %v3405 = vunpack.c.l.b16 %v3145
        %v3406 = vunpack.c.l.b16 %v3146
        %v3407 = vunpack.c.h.b16 %v3146
        %v3408 = vunpack.c.l.b16 %v3147
        %v3409 = vunpack.c.h.b16 %v3147
        %v3410 = vunpack.c.l.b16 %v3148
        %v3411 = vunpack.c.h.b16 %v3148
        %v3412 = vunpack.c.l.b16 %v3149
        %v3413 = vunpack.c.h.b16 %v3149
        %v3414 = vunpack.c.l.b16 %v3150
        %v3415 = vunpack.c.l.b16 %v3151
        %v3416 = vunpack.c.h.b16 %v3151
        %v3417 = vunpack.c.l.b16 %v3152
        %v3418 = vunpack.c.h.b16 %v3152
        %v3419 = vunpack.c.l.b16 %v3153
        %v3420 = vunpack.c.h.b16 %v3153
        %v3421 = vunpack.c.l.b16 %v3154
        %v3422 = vunpack.c.h.b16 %v3154
        %v3423 = vunpack.c.l.b16 %v3155
        %v3424 = vunpack.c.l.b16 %v3156
        %v3425 = vunpack.c.h.b16 %v3156
        %v3426 = vunpack.c.l.b16 %v3157
        %v3427 = vunpack.c.h.b16 %v3157
        %v3428 = vunpack.c.l.b16 %v3158
        %v3429 = vunpack.c.h.b16 %v3158
        %v3430 = vunpack.c.l.b16 %v3159
        %v3431 = vunpack.c.h.b16 %v3159
        %v3432 = vunpack.c.l.b16 %v3160
        %v3433 = vunpack.c.l.b16 %v3161
        %v3434 = vunpack.c.h.b16 %v3161
        %v3435 = vunpack.c.l.b16 %v3162
        %v3436 = vunpack.c.h.b16 %v3162
        %v3437 = vunpack.c.l.b16 %v3163
        %v3438 = vunpack.c.h.b16 %v3163
        %v3439 = vunpack.c.l.b16 %v3164
        %v3440 = vunpack.c.h.b16 %v3164
        %v3441 = vunpack.c.l.b16 %v3165
        %v3442 = vunpack.c.l.b16 %v3166
        %v3443 = vunpack.c.h.b16 %v3166
        %v3444 = vunpack.c.l.b16 %v3167
        %v3445 = vunpack.c.h.b16 %v3167
        %v3446 = vunpack.c.l.b16 %v3168
        %v3447 = vunpack.c.h.b16 %v3168
        %v3448 = vunpack.c.l.b16 %v3169
        %v3449 = vunpack.c.h.b16 %v3169
        %v3450 = vunpack.c.l.b16 %v3170
        %v3451 = vunpack.c.l.b16 %v3171
        %v3452 = vunpack.c.h.b16 %v3171
        %v3453 = vunpack.c.l.b16 %v3172
        %v3454 = vunpack.c.h.b16 %v3172
        %v3455 = vunpack.c.l.b16 %v3173
        %v3456 = vunpack.c.h.b16 %v3173
        %v3457 = vunpack.c.l.b16 %v3174
        %v3458 = vunpack.c.h.b16 %v3174
        %v3459 = vunpack.c.l.b16 %v3175
        %v3460 = vunpack.c.l.b16 %v3176
        %v3461 = vunpack.c.h.b16 %v3176
        %v3462 = vunpack.c.l.b16 %v3177
        %v3463 = vunpack.c.h.b16 %v3177
        %v3464 = vunpack.c.l.b16 %v3178
        %v3465 = vunpack.c.h.b16 %v3178
        %v3466 = vunpack.c.l.b16 %v3179
        %v3467 = vunpack.c.h.b16 %v3179
        %v3468 = vunpack.c.l.b16 %v3180
        %v3469 = vunpack.c.l.b16 %v3181
        %v3470 = vunpack.c.h.b16 %v3181
        %v3471 = vunpack.c.l.b16 %v3182
        %v3472 = vunpack.c.h.b16 %v3182
        %v3473 = vunpack.c.l.b16 %v3183
        %v3474 = vunpack.c.h.b16 %v3183
        %v3475 = vunpack.c.l.b16 %v3184
        %v3476 = vunpack.c.h.b16 %v3184
        %v3477 = vunpack.c.l.b16 %v3185
        %v3478 = vunpack.c.l.b16 %v3186
        %v3479 = vunpack.c.h.b16 %v3186
        %v3480 = vunpack.c.l.b16 %v3187
        %v3481 = vunpack.c.h.b16 %v3187
        %v3482 = vunpack.c.l.b16 %v3188
        %v3483 = vunpack.c.h.b16 %v3188
        %v3484 = vunpack.c.l.b16 %v3189
        %v3485 = vunpack.c.h.b16 %v3189
        %v3486 = vunpack.c.l.b16 %v3190
        %v3487 = vunpack.c.l.b16 %v3191
        %v3488 = vunpack.c.h.b16 %v3191
        %v3489 = vunpack.c.l.b16 %v3192
        %v3490 = vunpack.c.h.b16 %v3192
        %v3491 = vunpack.c.l.b16 %v3193
        %v3492 = vunpack.c.h.b16 %v3193
        %v3493 = vunpack.c.l.b16 %v3194
        %v3494 = vunpack.c.h.b16 %v3194
        %v3495 = vunpack.c.l.b16 %v3195
        %v3496 = vunpack.c.l.b16 %v3196
        %v3497 = vunpack.c.h.b16 %v3196
        %v3498 = vunpack.c.l.b16 %v3197
        %v3499 = vunpack.c.h.b16 %v3197
        %v3500 = vunpack.c.l.b16 %v3198
        %v3501 = vunpack.c.h.b16 %v3198
        %v3502 = vunpack.c.l.b16 %v3199
        %v3503 = vunpack.c.h.b16 %v3199
        %v3504 = vunpack.c.l.b16 %v3200
        %v3505 = vunpack.c.l.b16 %v3201
        %v3506 = vunpack.c.h.b16 %v3201
        %v3507 = vunpack.c.l.b16 %v3202
        %v3508 = vunpack.c.h.b16 %v3202
        %v3509 = vunpack.c.l.b16 %v3203
        %v3510 = vunpack.c.h.b16 %v3203
        %v3511 = vunpack.c.l.b16 %v3204
        %v3512 = vunpack.c.h.b16 %v3204
        %v3513 = vunpack.c.l.b16 %v3205
        %v3514 = vunpack.c.l.b16 %v3206
        %v3515 = vunpack.c.h.b16 %v3206
        %v3516 = vunpack.c.l.b16 %v3207
        %v3517 = vunpack.c.h.b16 %v3207
        %v3518 = vunpack.c.l.b16 %v3208
        %v3519 = vunpack.c.h.b16 %v3208
        %v3520 = vunpack.c.l.b16 %v3209
        %v3521 = vunpack.c.h.b16 %v3209
        %v3522 = vunpack.c.l.b16 %v3210
        %v3523 = vunpack.c.l.b16 %v3211
        %v3524 = vunpack.c.h.b16 %v3211
        %v3525 = vunpack.c.l.b16 %v3212
        %v3526 = vunpack.c.h.b16 %v3212
        %v3527 = vunpack.c.l.b16 %v3213
        %v3528 = vunpack.c.h.b16 %v3213
        %v3529 = vunpack.c.l.b16 %v3214
        %v3530 = vunpack.c.h.b16 %v3214
        %v3531 = vunpack.c.l.b16 %v3215
        %v3532 = vunpack.c.l.b16 %v3216
        %v3533 = vunpack.c.h.b16 %v3216
        %v3534 = vunpack.c.l.b16 %v3217
        %v3535 = vunpack.c.h.b16 %v3217
        %v3536 = vunpack.c.l.b16 %v3218
        %v3537 = vunpack.c.h.b16 %v3218
        %v3538 = vunpack.c.l.b16 %v3219
        %v3539 = vunpack.c.h.b16 %v3219
        %v3540 = vunpack.c.l.b16 %v3220
        %v3541 = vpack.c.b16 %v3406, %v3397
        %v3542 = vpack.c.b16 %v3407, %v3398
        %v3543 = vpack.c.b16 %v3408, %v3399
        %v3544 = vpack.c.b16 %v3409, %v3400
        %v3545 = vpack.c.b16 %v3410, %v3401
        %v3546 = vpack.c.b16 %v3411, %v3402
        %v3547 = vpack.c.b16 %v3412, %v3403
        %v3548 = vpack.c.b16 %v3413, %v3404
        %v3549 = vpack.c.b16 %v3414, %v3405
        %v3550 = vpack.c.b16 %v3424, %v3415
        %v3551 = vpack.c.b16 %v3425, %v3416
        %v3552 = vpack.c.b16 %v3426, %v3417
        %v3553 = vpack.c.b16 %v3427, %v3418
        %v3554 = vpack.c.b16 %v3428, %v3419
        %v3555 = vpack.c.b16 %v3429, %v3420
        %v3556 = vpack.c.b16 %v3430, %v3421
        %v3557 = vpack.c.b16 %v3431, %v3422
        %v3558 = vpack.c.b16 %v3432, %v3423
        %v3559 = vpack.c.b16 %v3442, %v3433
        %v3560 = vpack.c.b16 %v3443, %v3434
        %v3561 = vpack.c.b16 %v3444, %v3435
        %v3562 = vpack.c.b16 %v3445, %v3436
        %v3563 = vpack.c.b16 %v3446, %v3437
        %v3564 = vpack.c.b16 %v3447, %v3438
        %v3565 = vpack.c.b16 %v3448, %v3439
        %v3566 = vpack.c.b16 %v3449, %v3440
        %v3567 = vpack.c.b16 %v3450, %v3441
        %v3568 = vpack.c.b16 %v3460, %v3451
        %v3569 = vpack.c.b16 %v3461, %v3452
        %v3570 = vpack.c.b16 %v3462, %v3453
        %v3571 = vpack.c.b16 %v3463, %v3454
        %v3572 = vpack.c.b16 %v3464, %v3455
        %v3573 = vpack.c.b16 %v3465, %v3456
        %v3574 = vpack.c.b16 %v3466, %v3457
        %v3575 = vpack.c.b16 %v3467, %v3458
        %v3576 = vpack.c.b16 %v3468, %v3459
        %v3577 = vpack.c.b16 %v3478, %v3469
        %v3578 = vpack.c.b16 %v3479, %v3470
        %v3579 = vpack.c.b16 %v3480, %v3471
        %v3580 = vpack.c.b16 %v3481, %v3472
        %v3581 = vpack.c.b16 %v3482, %v3473
        %v3582 = vpack.c.b16 %v3483, %v3474
        %v3583 = vpack.c.b16 %v3484, %v3475
        %v3584 = vpack.c.b16 %v3485, %v3476
        %v3585 = vpack.c.b16 %v3486, %v3477
        %v3586 = vpack.c.b16 %v3496, %v3487
        %v3587 = vpack.c.b16 %v3497, %v3488
        %v3588 = vpack.c.b16 %v3498, %v3489
        %v3589 = vpack.c.b16 %v3499, %v3490
        %v3590 = vpack.c.b16 %v3500, %v3491
        %v3591 = vpack.c.b16 %v3501, %v3492
        %v3592 = vpack.c.b16 %v3502, %v3493
        %v3593 = vpack.c.b16 %v3503, %v3494
        %v3594 = vpack.c.b16 %v3504, %v3495
        %v3595 = vpack.c.b16 %v3514, %v3505
        %v3596 = vpack.c.b16 %v3515, %v3506
        %v3597 = vpack.c.b16 %v3516, %v3507
        %v3598 = vpack.c.b16 %v3517, %v3508
        %v3599 = vpack.c.b16 %v3518, %v3509
        %v3600 = vpack.c.b16 %v3519, %v3510
        %v3601 = vpack.c.b16 %v3520, %v3511
        %v3602 = vpack.c.b16 %v3521, %v3512
        %v3603 = vpack.c.b16 %v3522, %v3513
        %v3604 = vpack.c.b16 %v3532, %v3523
        %v3605 = vpack.c.b16 %v3533, %v3524
        %v3606 = vpack.c.b16 %v3534, %v3525
        %v3607 = vpack.c.b16 %v3535, %v3526
        %v3608 = vpack.c.b16 %v3536, %v3527
        %v3609 = vpack.c.b16 %v3537, %v3528
        %v3610 = vpack.c.b16 %v3538, %v3529
        %v3611 = vpack.c.b16 %v3539, %v3530
        %v3612 = vpack.c.b16 %v3540, %v3531
        %3685 = vmatprep.subr.bf16.mxu0 %v2102
        %3686 = vmatpush1.bf16.msra.mxu0 %v2101
        %3687 = vmatprep.subr.bf16.mxu0 %v2104
        %3688 = vmatpush1.bf16.msra.mxu0 %v2103
        %3689 = vmatprep.subr.bf16.mxu0 %v2106
        %3690 = vmatpush1.bf16.msra.mxu0 %v2105
        %3691 = vmatprep.subr.bf16.mxu0 %v2108
        %3692 = vmatpush1.bf16.msra.mxu0 %v2107
        %3693 = vmatprep.subr.bf16.mxu0 %v2110
        %3694 = vmatpush1.bf16.msra.mxu0 %v2109
        %3695 = vmatprep.subr.bf16.mxu0 %v2112
        %3696 = vmatpush1.bf16.msra.mxu0 %v2111
        %3697 = vmatprep.subr.bf16.mxu0 %v2114
        %3698 = vmatpush1.bf16.msra.mxu0 %v2113
        %3699 = vmatprep.subr.bf16.mxu0 %v2116
        %3700 = vmatpush1.bf16.msra.mxu0 %v2115
        %3701 = vmatprep.subr.bf16.mxu0 %v2246
        %3702 = vmatpush1.bf16.msra.mxu0 %v2245
        %3703 = vmatprep.subr.bf16.mxu0 %v2248
        %3704 = vmatpush1.bf16.msra.mxu0 %v2247
        %3705 = vmatprep.subr.bf16.mxu0 %v2250
        %3706 = vmatpush1.bf16.msra.mxu0 %v2249
        %3707 = vmatprep.subr.bf16.mxu0 %v2252
        %3708 = vmatpush1.bf16.msra.mxu0 %v2251
        %3709 = vmatprep.subr.bf16.mxu0 %v2254
        %3710 = vmatpush1.bf16.msra.mxu0 %v2253
        %3711 = vmatprep.subr.bf16.mxu0 %v2256
        %3712 = vmatpush1.bf16.msra.mxu0 %v2255
        %3713 = vmatprep.subr.bf16.mxu0 %v2258
        %3714 = vmatpush1.bf16.msra.mxu0 %v2257
        %3715 = vmatprep.subr.bf16.mxu0 %v2260
        %3716 = vmatpush1.bf16.msra.mxu0 %v2259
        %3717 = vmatprep.mubr.bf16.mxu0 %v3542
        %3718 = vmatmul.mubr.bf16.gmra.mrb[0].mxu0 %v3541
        %v3719 = vpop.f32.mrb[0].mxu0
        %v3720 = vadd.f32 %v3240, %v3719
        %v3721 = vpop.f32.mrb[0].mxu0
        %v3722 = vadd.f32 %v3240, %v3721
        %v3723 = vpop.f32.mrb[0].mxu0
        %v3724 = vadd.f32 %v3245, %v3723
        %v3725 = vpop.f32.mrb[0].mxu0
        %v3726 = vadd.f32 %v3245, %v3725
        %3727 = vmatprep.mubr.bf16.mxu0 %v3551
        %3728 = vmatmul.mubr.bf16.gmra.mrb[0].mxu0 %v3550
        %v3729 = vpop.f32.mrb[0].mxu0
        %v3730 = vadd.f32 %v3250, %v3729
        %v3731 = vpop.f32.mrb[0].mxu0
        %v3732 = vadd.f32 %v3250, %v3731
        %v3733 = vpop.f32.mrb[0].mxu0
        %v3734 = vadd.f32 %v3255, %v3733
        %v3735 = vpop.f32.mrb[0].mxu0
        %v3736 = vadd.f32 %v3255, %v3735
        %3737 = vmatprep.mubr.bf16.mxu0 %v3560
        %3738 = vmatmul.mubr.bf16.gmra.mrb[0].mxu0 %v3559
        %v3739 = vpop.f32.mrb[0].mxu0
        %v3740 = vadd.f32 %v3260, %v3739
        %v3741 = vpop.f32.mrb[0].mxu0
        %v3742 = vadd.f32 %v3260, %v3741
        %v3743 = vpop.f32.mrb[0].mxu0
        %v3744 = vadd.f32 %v3265, %v3743
        %v3745 = vpop.f32.mrb[0].mxu0
        %v3746 = vadd.f32 %v3265, %v3745
        %3747 = vmatprep.mubr.bf16.mxu0 %v3569
        %3748 = vmatmul.mubr.bf16.gmra.mrb[0].mxu0 %v3568
        %v3749 = vpop.f32.mrb[0].mxu0
        %v3750 = vadd.f32 %v3270, %v3749
        %v3751 = vpop.f32.mrb[0].mxu0
        %v3752 = vadd.f32 %v3270, %v3751
        %v3753 = vpop.f32.mrb[0].mxu0
        %v3754 = vadd.f32 %v3275, %v3753
        %v3755 = vpop.f32.mrb[0].mxu0
        %v3756 = vadd.f32 %v3275, %v3755
        %3757 = vmatprep.mubr.bf16.mxu0 %v3578
        %3758 = vmatmul.mubr.bf16.gmra.mrb[0].mxu0 %v3577
        %v3759 = vpop.f32.mrb[0].mxu0
        %v3760 = vadd.f32 %v3280, %v3759
        %v3761 = vpop.f32.mrb[0].mxu0
        %v3762 = vadd.f32 %v3280, %v3761
        %v3763 = vpop.f32.mrb[0].mxu0
        %v3764 = vadd.f32 %v3285, %v3763
        %v3765 = vpop.f32.mrb[0].mxu0
        %v3766 = vadd.f32 %v3285, %v3765
        %3767 = vmatprep.mubr.bf16.mxu0 %v3587
        %3768 = vmatmul.mubr.bf16.gmra.mrb[0].mxu0 %v3586
        %v3769 = vpop.f32.mrb[0].mxu0
        %v3770 = vadd.f32 %v3290, %v3769
        %v3771 = vpop.f32.mrb[0].mxu0
        %v3772 = vadd.f32 %v3290, %v3771
        %v3773 = vpop.f32.mrb[0].mxu0
        %v3774 = vadd.f32 %v3295, %v3773
        %v3775 = vpop.f32.mrb[0].mxu0
        %v3776 = vadd.f32 %v3295, %v3775
        %3777 = vmatprep.mubr.bf16.mxu0 %v3596
        %3778 = vmatmul.mubr.bf16.gmra.mrb[0].mxu0 %v3595
        %v3779 = vpop.f32.mrb[0].mxu0
        %v3780 = vadd.f32 %v3300, %v3779
        %v3781 = vpop.f32.mrb[0].mxu0
        %v3782 = vadd.f32 %v3300, %v3781
        %v3783 = vpop.f32.mrb[0].mxu0
        %v3784 = vadd.f32 %v3305, %v3783
        %v3785 = vpop.f32.mrb[0].mxu0
        %v3786 = vadd.f32 %v3305, %v3785
        %3787 = vmatprep.mubr.bf16.mxu0 %v3605
        %3788 = vmatmul.mubr.bf16.gmra.mrb[0].mxu0 %v3604
        %v3789 = vpop.f32.mrb[0].mxu0
        %v3790 = vadd.f32 %v3310, %v3789
        %v3791 = vpop.f32.mrb[0].mxu0
        %v3792 = vadd.f32 %v3310, %v3791
        %v3793 = vpop.f32.mrb[0].mxu0
        %v3794 = vadd.f32 %v3315, %v3793
        %v3795 = vpop.f32.mrb[0].mxu0
        %v3796 = vadd.f32 %v3315, %v3795
        %3797 = vdwg.mxu0
        %3798 = vmatprep.subr.bf16.mxu0 %v2390
        %3799 = vmatpush1.bf16.msra.mxu0 %v2389
        %3800 = vmatprep.subr.bf16.mxu0 %v2392
        %3801 = vmatpush1.bf16.msra.mxu0 %v2391
        %3802 = vmatprep.subr.bf16.mxu0 %v2394
        %3803 = vmatpush1.bf16.msra.mxu0 %v2393
        %3804 = vmatprep.subr.bf16.mxu0 %v2396
        %3805 = vmatpush1.bf16.msra.mxu0 %v2395
        %3806 = vmatprep.subr.bf16.mxu0 %v2398
        %3807 = vmatpush1.bf16.msra.mxu0 %v2397
        %3808 = vmatprep.subr.bf16.mxu0 %v2400
        %3809 = vmatpush1.bf16.msra.mxu0 %v2399
        %3810 = vmatprep.subr.bf16.mxu0 %v2402
        %3811 = vmatpush1.bf16.msra.mxu0 %v2401
        %3812 = vmatprep.subr.bf16.mxu0 %v2404
        %3813 = vmatpush1.bf16.msra.mxu0 %v2403
        %3814 = vmatprep.subr.bf16.mxu0 %v2534
        %3815 = vmatpush1.bf16.msra.mxu0 %v2533
        %3816 = vmatprep.subr.bf16.mxu0 %v2536
        %3817 = vmatpush1.bf16.msra.mxu0 %v2535
        %3818 = vmatprep.subr.bf16.mxu0 %v2538
        %3819 = vmatpush1.bf16.msra.mxu0 %v2537
        %3820 = vmatprep.subr.bf16.mxu0 %v2540
        %3821 = vmatpush1.bf16.msra.mxu0 %v2539
        %3822 = vmatprep.subr.bf16.mxu0 %v2542
        %3823 = vmatpush1.bf16.msra.mxu0 %v2541
        %3824 = vmatprep.subr.bf16.mxu0 %v2544
        %3825 = vmatpush1.bf16.msra.mxu0 %v2543
        %3826 = vmatprep.subr.bf16.mxu0 %v2546
        %3827 = vmatpush1.bf16.msra.mxu0 %v2545
        %3828 = vmatprep.subr.bf16.mxu0 %v2548
        %3829 = vmatpush1.bf16.msra.mxu0 %v2547
        %3830 = vmatprep.mubr.bf16.mxu0 %v3544
        %3831 = vmatmul.mubr.bf16.gmra.mrb[0].mxu0 %v3543
        %v3832 = vpop.f32.mrb[0].mxu0
        %v3833 = vadd.f32 %v3720, %v3832
        %v3834 = vpop.f32.mrb[0].mxu0
        %v3835 = vadd.f32 %v3722, %v3834
        %v3836 = vpop.f32.mrb[0].mxu0
        %v3837 = vadd.f32 %v3724, %v3836
        %v3838 = vpop.f32.mrb[0].mxu0
        %v3839 = vadd.f32 %v3726, %v3838
        %3840 = vmatprep.mubr.bf16.mxu0 %v3553
        %3841 = vmatmul.mubr.bf16.gmra.mrb[0].mxu0 %v3552
        %v3842 = vpop.f32.mrb[0].mxu0
        %v3843 = vadd.f32 %v3730, %v3842
        %v3844 = vpop.f32.mrb[0].mxu0
        %v3845 = vadd.f32 %v3732, %v3844
        %v3846 = vpop.f32.mrb[0].mxu0
        %v3847 = vadd.f32 %v3734, %v3846
        %v3848 = vpop.f32.mrb[0].mxu0
        %v3849 = vadd.f32 %v3736, %v3848
        %3850 = vmatprep.mubr.bf16.mxu0 %v3562
        %3851 = vmatmul.mubr.bf16.gmra.mrb[0].mxu0 %v3561
        %v3852 = vpop.f32.mrb[0].mxu0
        %v3853 = vadd.f32 %v3740, %v3852
        %v3854 = vpop.f32.mrb[0].mxu0
        %v3855 = vadd.f32 %v3742, %v3854
        %v3856 = vpop.f32.mrb[0].mxu0
        %v3857 = vadd.f32 %v3744, %v3856
        %v3858 = vpop.f32.mrb[0].mxu0
        %v3859 = vadd.f32 %v3746, %v3858
        %3860 = vmatprep.mubr.bf16.mxu0 %v3571
        %3861 = vmatmul.mubr.bf16.gmra.mrb[0].mxu0 %v3570
        %v3862 = vpop.f32.mrb[0].mxu0
        %v3863 = vadd.f32 %v3750, %v3862
        %v3864 = vpop.f32.mrb[0].mxu0
        %v3865 = vadd.f32 %v3752, %v3864
        %v3866 = vpop.f32.mrb[0].mxu0
        %v3867 = vadd.f32 %v3754, %v3866
        %v3868 = vpop.f32.mrb[0].mxu0
        %v3869 = vadd.f32 %v3756, %v3868
        %3870 = vmatprep.mubr.bf16.mxu0 %v3580
        %3871 = vmatmul.mubr.bf16.gmra.mrb[0].mxu0 %v3579
        %v3872 = vpop.f32.mrb[0].mxu0
        %v3873 = vadd.f32 %v3760, %v3872
        %v3874 = vpop.f32.mrb[0].mxu0
        %v3875 = vadd.f32 %v3762, %v3874
        %v3876 = vpop.f32.mrb[0].mxu0
        %v3877 = vadd.f32 %v3764, %v3876
        %v3878 = vpop.f32.mrb[0].mxu0
        %v3879 = vadd.f32 %v3766, %v3878
        %3880 = vmatprep.mubr.bf16.mxu0 %v3589
        %3881 = vmatmul.mubr.bf16.gmra.mrb[0].mxu0 %v3588
        %v3882 = vpop.f32.mrb[0].mxu0
        %v3883 = vadd.f32 %v3770, %v3882
        %v3884 = vpop.f32.mrb[0].mxu0
        %v3885 = vadd.f32 %v3772, %v3884
        %v3886 = vpop.f32.mrb[0].mxu0
        %v3887 = vadd.f32 %v3774, %v3886
        %v3888 = vpop.f32.mrb[0].mxu0
        %v3889 = vadd.f32 %v3776, %v3888
        %3890 = vmatprep.mubr.bf16.mxu0 %v3598
        %3891 = vmatmul.mubr.bf16.gmra.mrb[0].mxu0 %v3597
        %v3892 = vpop.f32.mrb[0].mxu0
        %v3893 = vadd.f32 %v3780, %v3892
        %v3894 = vpop.f32.mrb[0].mxu0
        %v3895 = vadd.f32 %v3782, %v3894
        %v3896 = vpop.f32.mrb[0].mxu0
        %v3897 = vadd.f32 %v3784, %v3896
        %v3898 = vpop.f32.mrb[0].mxu0
        %v3899 = vadd.f32 %v3786, %v3898
        %3900 = vmatprep.mubr.bf16.mxu0 %v3607
        %3901 = vmatmul.mubr.bf16.gmra.mrb[0].mxu0 %v3606
        %v3902 = vpop.f32.mrb[0].mxu0
        %v3903 = vadd.f32 %v3790, %v3902
        %v3904 = vpop.f32.mrb[0].mxu0
        %v3905 = vadd.f32 %v3792, %v3904
        %v3906 = vpop.f32.mrb[0].mxu0
        %v3907 = vadd.f32 %v3794, %v3906
        %v3908 = vpop.f32.mrb[0].mxu0
        %v3909 = vadd.f32 %v3796, %v3908
        %3910 = vdwg.mxu0
        %3911 = vmatprep.subr.bf16.mxu0 %v2550
        %3912 = vmatpush1.bf16.msra.mxu0 %v2549
        %3913 = vmatprep.subr.bf16.mxu0 %v2552
        %3914 = vmatpush1.bf16.msra.mxu0 %v2551
        %3915 = vmatprep.subr.bf16.mxu0 %v2554
        %3916 = vmatpush1.bf16.msra.mxu0 %v2553
        %3917 = vmatprep.subr.bf16.mxu0 %v2556
        %3918 = vmatpush1.bf16.msra.mxu0 %v2555
        %3919 = vmatprep.subr.bf16.mxu0 %v2558
        %3920 = vmatpush1.bf16.msra.mxu0 %v2557
        %3921 = vmatprep.subr.bf16.mxu0 %v2560
        %3922 = vmatpush1.bf16.msra.mxu0 %v2559
        %3923 = vmatprep.subr.bf16.mxu0 %v2562
        %3924 = vmatpush1.bf16.msra.mxu0 %v2561
        %3925 = vmatprep.subr.bf16.mxu0 %v2564
        %3926 = vmatpush1.bf16.msra.mxu0 %v2563
        %3927 = vmatprep.subr.bf16.mxu0 %v2694
        %3928 = vmatpush1.bf16.msra.mxu0 %v2693
        %3929 = vmatprep.subr.bf16.mxu0 %v2696
        %3930 = vmatpush1.bf16.msra.mxu0 %v2695
        %3931 = vmatprep.subr.bf16.mxu0 %v2698
        %3932 = vmatpush1.bf16.msra.mxu0 %v2697
        %3933 = vmatprep.subr.bf16.mxu0 %v2700
        %3934 = vmatpush1.bf16.msra.mxu0 %v2699
        %3935 = vmatprep.subr.bf16.mxu0 %v2702
        %3936 = vmatpush1.bf16.msra.mxu0 %v2701
        %3937 = vmatprep.subr.bf16.mxu0 %v2704
        %3938 = vmatpush1.bf16.msra.mxu0 %v2703
        %3939 = vmatprep.subr.bf16.mxu0 %v2706
        %3940 = vmatpush1.bf16.msra.mxu0 %v2705
        %3941 = vmatprep.subr.bf16.mxu0 %v2708
        %3942 = vmatpush1.bf16.msra.mxu0 %v2707
        %3943 = vmatprep.mubr.bf16.mxu0 %v3546
        %3944 = vmatmul.mubr.bf16.gmra.mrb[0].mxu0 %v3545
        %v3945 = vpop.f32.mrb[0].mxu0
        %v3946 = vadd.f32 %v3833, %v3945
        %v3947 = vpop.f32.mrb[0].mxu0
        %v3948 = vadd.f32 %v3835, %v3947
        %v3949 = vpop.f32.mrb[0].mxu0
        %v3950 = vadd.f32 %v3837, %v3949
        %v3951 = vpop.f32.mrb[0].mxu0
        %v3952 = vadd.f32 %v3839, %v3951
        %3953 = vmatprep.mubr.bf16.mxu0 %v3555
        %3954 = vmatmul.mubr.bf16.gmra.mrb[0].mxu0 %v3554
        %v3955 = vpop.f32.mrb[0].mxu0
        %v3956 = vadd.f32 %v3843, %v3955
        %v3957 = vpop.f32.mrb[0].mxu0
        %v3958 = vadd.f32 %v3845, %v3957
        %v3959 = vpop.f32.mrb[0].mxu0
        %v3960 = vadd.f32 %v3847, %v3959
        %v3961 = vpop.f32.mrb[0].mxu0
        %v3962 = vadd.f32 %v3849, %v3961
        %3963 = vmatprep.mubr.bf16.mxu0 %v3564
        %3964 = vmatmul.mubr.bf16.gmra.mrb[0].mxu0 %v3563
        %v3965 = vpop.f32.mrb[0].mxu0
        %v3966 = vadd.f32 %v3853, %v3965
        %v3967 = vpop.f32.mrb[0].mxu0
        %v3968 = vadd.f32 %v3855, %v3967
        %v3969 = vpop.f32.mrb[0].mxu0
        %v3970 = vadd.f32 %v3857, %v3969
        %v3971 = vpop.f32.mrb[0].mxu0
        %v3972 = vadd.f32 %v3859, %v3971
        %3973 = vmatprep.mubr.bf16.mxu0 %v3573
        %3974 = vmatmul.mubr.bf16.gmra.mrb[0].mxu0 %v3572
        %v3975 = vpop.f32.mrb[0].mxu0
        %v3976 = vadd.f32 %v3863, %v3975
        %v3977 = vpop.f32.mrb[0].mxu0
        %v3978 = vadd.f32 %v3865, %v3977
        %v3979 = vpop.f32.mrb[0].mxu0
        %v3980 = vadd.f32 %v3867, %v3979
        %v3981 = vpop.f32.mrb[0].mxu0
        %v3982 = vadd.f32 %v3869, %v3981
        %3983 = vmatprep.mubr.bf16.mxu0 %v3582
        %3984 = vmatmul.mubr.bf16.gmra.mrb[0].mxu0 %v3581
        %v3985 = vpop.f32.mrb[0].mxu0
        %v3986 = vadd.f32 %v3873, %v3985
        %v3987 = vpop.f32.mrb[0].mxu0
        %v3988 = vadd.f32 %v3875, %v3987
        %v3989 = vpop.f32.mrb[0].mxu0
        %v3990 = vadd.f32 %v3877, %v3989
        %v3991 = vpop.f32.mrb[0].mxu0
        %v3992 = vadd.f32 %v3879, %v3991
        %3993 = vmatprep.mubr.bf16.mxu0 %v3591
        %3994 = vmatmul.mubr.bf16.gmra.mrb[0].mxu0 %v3590
        %v3995 = vpop.f32.mrb[0].mxu0
        %v3996 = vadd.f32 %v3883, %v3995
        %v3997 = vpop.f32.mrb[0].mxu0
        %v3998 = vadd.f32 %v3885, %v3997
        %v3999 = vpop.f32.mrb[0].mxu0
        %v4000 = vadd.f32 %v3887, %v3999
        %v4001 = vpop.f32.mrb[0].mxu0
        %v4002 = vadd.f32 %v3889, %v4001
        %4003 = vmatprep.mubr.bf16.mxu0 %v3600
        %4004 = vmatmul.mubr.bf16.gmra.mrb[0].mxu0 %v3599
        %v4005 = vpop.f32.mrb[0].mxu0
        %v4006 = vadd.f32 %v3893, %v4005
        %v4007 = vpop.f32.mrb[0].mxu0
        %v4008 = vadd.f32 %v3895, %v4007
        %v4009 = vpop.f32.mrb[0].mxu0
        %v4010 = vadd.f32 %v3897, %v4009
        %v4011 = vpop.f32.mrb[0].mxu0
        %v4012 = vadd.f32 %v3899, %v4011
        %4013 = vmatprep.mubr.bf16.mxu0 %v3609
        %4014 = vmatmul.mubr.bf16.gmra.mrb[0].mxu0 %v3608
        %v4015 = vpop.f32.mrb[0].mxu0
        %v4016 = vadd.f32 %v3903, %v4015
        %v4017 = vpop.f32.mrb[0].mxu0
        %v4018 = vadd.f32 %v3905, %v4017
        %v4019 = vpop.f32.mrb[0].mxu0
        %v4020 = vadd.f32 %v3907, %v4019
        %v4021 = vpop.f32.mrb[0].mxu0
        %v4022 = vadd.f32 %v3909, %v4021
        %4023 = vdwg.mxu0
        %4024 = vmatprep.subr.bf16.mxu0 %v2838
        %4025 = vmatpush1.bf16.msra.mxu0 %v2837
        %4026 = vmatprep.subr.bf16.mxu0 %v2840
        %4027 = vmatpush1.bf16.msra.mxu0 %v2839
        %4028 = vmatprep.subr.bf16.mxu0 %v2842
        %4029 = vmatpush1.bf16.msra.mxu0 %v2841
        %4030 = vmatprep.subr.bf16.mxu0 %v2844
        %4031 = vmatpush1.bf16.msra.mxu0 %v2843
        %4032 = vmatprep.subr.bf16.mxu0 %v2846
        %4033 = vmatpush1.bf16.msra.mxu0 %v2845
        %4034 = vmatprep.subr.bf16.mxu0 %v2848
        %4035 = vmatpush1.bf16.msra.mxu0 %v2847
        %4036 = vmatprep.subr.bf16.mxu0 %v2850
        %4037 = vmatpush1.bf16.msra.mxu0 %v2849
        %4038 = vmatprep.subr.bf16.mxu0 %v2852
        %4039 = vmatpush1.bf16.msra.mxu0 %v2851
        %4040 = vmatprep.subr.bf16.mxu0 %v2982
        %4041 = vmatpush1.bf16.msra.mxu0 %v2981
        %4042 = vmatprep.subr.bf16.mxu0 %v2984
        %4043 = vmatpush1.bf16.msra.mxu0 %v2983
        %4044 = vmatprep.subr.bf16.mxu0 %v2986
        %4045 = vmatpush1.bf16.msra.mxu0 %v2985
        %4046 = vmatprep.subr.bf16.mxu0 %v2988
        %4047 = vmatpush1.bf16.msra.mxu0 %v2987
        %4048 = vmatprep.subr.bf16.mxu0 %v2990
        %4049 = vmatpush1.bf16.msra.mxu0 %v2989
        %4050 = vmatprep.subr.bf16.mxu0 %v2992
        %4051 = vmatpush1.bf16.msra.mxu0 %v2991
        %4052 = vmatprep.subr.bf16.mxu0 %v2994
        %4053 = vmatpush1.bf16.msra.mxu0 %v2993
        %4054 = vmatprep.subr.bf16.mxu0 %v2996
        %4055 = vmatpush1.bf16.msra.mxu0 %v2995
        %4056 = vmatprep.mubr.bf16.mxu0 %v3548
        %4057 = vmatmul.mubr.bf16.gmra.mrb[0].mxu0 %v3547
        %v4058 = vpop.f32.mrb[0].mxu0
        %v4059 = vadd.f32 %v3946, %v4058
        %v4060 = vpop.f32.mrb[0].mxu0
        %v4061 = vadd.f32 %v3948, %v4060
        %v4062 = vpop.f32.mrb[0].mxu0
        %v4063 = vadd.f32 %v3950, %v4062
        %v4064 = vpop.f32.mrb[0].mxu0
        %v4065 = vadd.f32 %v3952, %v4064
        %4066 = vmatprep.mubr.bf16.mxu0 %v3557
        %4067 = vmatmul.mubr.bf16.gmra.mrb[0].mxu0 %v3556
        %v4068 = vpop.f32.mrb[0].mxu0
        %v4069 = vadd.f32 %v3956, %v4068
        %v4070 = vpop.f32.mrb[0].mxu0
        %v4071 = vadd.f32 %v3958, %v4070
        %v4072 = vpop.f32.mrb[0].mxu0
        %v4073 = vadd.f32 %v3960, %v4072
        %v4074 = vpop.f32.mrb[0].mxu0
        %v4075 = vadd.f32 %v3962, %v4074
        %4076 = vmatprep.mubr.bf16.mxu0 %v3566
        %4077 = vmatmul.mubr.bf16.gmra.mrb[0].mxu0 %v3565
        %v4078 = vpop.f32.mrb[0].mxu0
        %v4079 = vadd.f32 %v3966, %v4078
        %v4080 = vpop.f32.mrb[0].mxu0
        %v4081 = vadd.f32 %v3968, %v4080
        %v4082 = vpop.f32.mrb[0].mxu0
        %v4083 = vadd.f32 %v3970, %v4082
        %v4084 = vpop.f32.mrb[0].mxu0
        %v4085 = vadd.f32 %v3972, %v4084
        %4086 = vmatprep.mubr.bf16.mxu0 %v3575
        %4087 = vmatmul.mubr.bf16.gmra.mrb[0].mxu0 %v3574
        %v4088 = vpop.f32.mrb[0].mxu0
        %v4089 = vadd.f32 %v3976, %v4088
        %v4090 = vpop.f32.mrb[0].mxu0
        %v4091 = vadd.f32 %v3978, %v4090
        %v4092 = vpop.f32.mrb[0].mxu0
        %v4093 = vadd.f32 %v3980, %v4092
        %v4094 = vpop.f32.mrb[0].mxu0
        %v4095 = vadd.f32 %v3982, %v4094
        %4096 = vmatprep.mubr.bf16.mxu0 %v3584
        %4097 = vmatmul.mubr.bf16.gmra.mrb[0].mxu0 %v3583
        %v4098 = vpop.f32.mrb[0].mxu0
        %v4099 = vadd.f32 %v3986, %v4098
        %v4100 = vpop.f32.mrb[0].mxu0
        %v4101 = vadd.f32 %v3988, %v4100
        %v4102 = vpop.f32.mrb[0].mxu0
        %v4103 = vadd.f32 %v3990, %v4102
        %v4104 = vpop.f32.mrb[0].mxu0
        %v4105 = vadd.f32 %v3992, %v4104
        %4106 = vmatprep.mubr.bf16.mxu0 %v3593
        %4107 = vmatmul.mubr.bf16.gmra.mrb[0].mxu0 %v3592
        %v4108 = vpop.f32.mrb[0].mxu0
        %v4109 = vadd.f32 %v3996, %v4108
        %v4110 = vpop.f32.mrb[0].mxu0
        %v4111 = vadd.f32 %v3998, %v4110
        %v4112 = vpop.f32.mrb[0].mxu0
        %v4113 = vadd.f32 %v4000, %v4112
        %v4114 = vpop.f32.mrb[0].mxu0
        %v4115 = vadd.f32 %v4002, %v4114
        %4116 = vmatprep.mubr.bf16.mxu0 %v3602
        %4117 = vmatmul.mubr.bf16.gmra.mrb[0].mxu0 %v3601
        %v4118 = vpop.f32.mrb[0].mxu0
        %v4119 = vadd.f32 %v4006, %v4118
        %v4120 = vpop.f32.mrb[0].mxu0
        %v4121 = vadd.f32 %v4008, %v4120
        %v4122 = vpop.f32.mrb[0].mxu0
        %v4123 = vadd.f32 %v4010, %v4122
        %v4124 = vpop.f32.mrb[0].mxu0
        %v4125 = vadd.f32 %v4012, %v4124
        %4126 = vmatprep.mubr.bf16.mxu0 %v3611
        %4127 = vmatmul.mubr.bf16.gmra.mrb[0].mxu0 %v3610
        %v4128 = vpop.f32.mrb[0].mxu0
        %v4129 = vadd.f32 %v4016, %v4128
        %v4130 = vpop.f32.mrb[0].mxu0
        %v4131 = vadd.f32 %v4018, %v4130
        %v4132 = vpop.f32.mrb[0].mxu0
        %v4133 = vadd.f32 %v4020, %v4132
        %v4134 = vpop.f32.mrb[0].mxu0
        %v4135 = vadd.f32 %v4022, %v4134
        %4136 = vdwg.mxu0
        %4137 = vmatprep.subr.bf16.mxu0 %v3126
        %4138 = vmatpush1.bf16.msra.mxu0 %v3125
        %4139 = vmatprep.subr.bf16.mxu0 %v3128
        %4140 = vmatpush1.bf16.msra.mxu0 %v3127
        %4141 = vmatprep.subr.bf16.mxu0 %v3130
        %4142 = vmatpush1.bf16.msra.mxu0 %v3129
        %4143 = vmatprep.subr.bf16.mxu0 %v3132
        %4144 = vmatpush1.bf16.msra.mxu0 %v3131
        %4145 = vmatprep.subr.bf16.mxu0 %v3134
        %4146 = vmatpush1.bf16.msra.mxu0 %v3133
        %4147 = vmatprep.subr.bf16.mxu0 %v3136
        %4148 = vmatpush1.bf16.msra.mxu0 %v3135
        %4149 = vmatprep.subr.bf16.mxu0 %v3138
        %4150 = vmatpush1.bf16.msra.mxu0 %v3137
        %4151 = vmatprep.subr.bf16.mxu0 %v3140
        %4152 = vmatpush1.bf16.msra.mxu0 %v3139
        %4153 = vmatprep.subr.bf16.mxu0 0
        %4154 = vmatpush1.bf16.msra.mxu0 0
        %4155 = vmatprep.subr.bf16.mxu0 0
        %4156 = vmatpush1.bf16.msra.mxu0 0
        %4157 = vmatprep.subr.bf16.mxu0 0
        %4158 = vmatpush1.bf16.msra.mxu0 0
        %4159 = vmatprep.subr.bf16.mxu0 0
        %4160 = vmatpush1.bf16.msra.mxu0 0
        %4161 = vmatprep.subr.bf16.mxu0 0
        %4162 = vmatpush1.bf16.msra.mxu0 0
        %4163 = vmatprep.subr.bf16.mxu0 0
        %4164 = vmatpush1.bf16.msra.mxu0 0
        %4165 = vmatprep.subr.bf16.mxu0 0
        %4166 = vmatpush1.bf16.msra.mxu0 0
        %4167 = vmatprep.subr.bf16.mxu0 0
        %4168 = vmatpush1.bf16.msra.mxu0 0
        %4169 = vmatprep.mubr.bf16.mxu0 0
        %4170 = vmatmul.mubr.bf16.gmra.mrb[0].mxu0 %v3549
        %v4171 = vpop.f32.mrb[0].mxu0
        %v4172 = vadd.f32 %v4059, %v4171
        %v4173 = vpop.f32.mrb[0].mxu0
        %v4174 = vadd.f32 %v4061, %v4173
        %v4175 = vpop.f32.mrb[0].mxu0
        %v4176 = vadd.f32 %v4063, %v4175
        %v4177 = vpop.f32.mrb[0].mxu0
        %v4178 = vadd.f32 %v4065, %v4177
        %4179 = vmatprep.mubr.bf16.mxu0 0
        %4180 = vmatmul.mubr.bf16.gmra.mrb[0].mxu0 %v3558
        %v4181 = vpop.f32.mrb[0].mxu0
        %v4182 = vadd.f32 %v4069, %v4181
        %v4183 = vpop.f32.mrb[0].mxu0
        %v4184 = vadd.f32 %v4071, %v4183
        %v4185 = vpop.f32.mrb[0].mxu0
        %v4186 = vadd.f32 %v4073, %v4185
        %v4187 = vpop.f32.mrb[0].mxu0
        %v4188 = vadd.f32 %v4075, %v4187
        %4189 = vmatprep.mubr.bf16.mxu0 0
        %4190 = vmatmul.mubr.bf16.gmra.mrb[0].mxu0 %v3567
        %v4191 = vpop.f32.mrb[0].mxu0
        %v4192 = vadd.f32 %v4079, %v4191
        %v4193 = vpop.f32.mrb[0].mxu0
        %v4194 = vadd.f32 %v4081, %v4193
        %v4195 = vpop.f32.mrb[0].mxu0
        %v4196 = vadd.f32 %v4083, %v4195
        %v4197 = vpop.f32.mrb[0].mxu0
        %v4198 = vadd.f32 %v4085, %v4197
        %4199 = vmatprep.mubr.bf16.mxu0 0
        %4200 = vmatmul.mubr.bf16.gmra.mrb[0].mxu0 %v3576
        %v4201 = vpop.f32.mrb[0].mxu0
        %v4202 = vadd.f32 %v4089, %v4201
        %v4203 = vpop.f32.mrb[0].mxu0
        %v4204 = vadd.f32 %v4091, %v4203
        %v4205 = vpop.f32.mrb[0].mxu0
        %v4206 = vadd.f32 %v4093, %v4205
        %v4207 = vpop.f32.mrb[0].mxu0
        %v4208 = vadd.f32 %v4095, %v4207
        %4209 = vmatprep.mubr.bf16.mxu0 0
        %4210 = vmatmul.mubr.bf16.gmra.mrb[0].mxu0 %v3585
        %v4211 = vpop.f32.mrb[0].mxu0
        %v4212 = vadd.f32 %v4099, %v4211
        %v4213 = vpop.f32.mrb[0].mxu0
        %v4214 = vadd.f32 %v4101, %v4213
        %v4215 = vpop.f32.mrb[0].mxu0
        %v4216 = vadd.f32 %v4103, %v4215
        %v4217 = vpop.f32.mrb[0].mxu0
        %v4218 = vadd.f32 %v4105, %v4217
        %4219 = vmatprep.mubr.bf16.mxu0 0
        %4220 = vmatmul.mubr.bf16.gmra.mrb[0].mxu0 %v3594
        %v4221 = vpop.f32.mrb[0].mxu0
        %v4222 = vadd.f32 %v4109, %v4221
        %v4223 = vpop.f32.mrb[0].mxu0
        %v4224 = vadd.f32 %v4111, %v4223
        %v4225 = vpop.f32.mrb[0].mxu0
        %v4226 = vadd.f32 %v4113, %v4225
        %v4227 = vpop.f32.mrb[0].mxu0
        %v4228 = vadd.f32 %v4115, %v4227
        %4229 = vmatprep.mubr.bf16.mxu0 0
        %4230 = vmatmul.mubr.bf16.gmra.mrb[0].mxu0 %v3603
        %v4231 = vpop.f32.mrb[0].mxu0
        %v4232 = vadd.f32 %v4119, %v4231
        %v4233 = vpop.f32.mrb[0].mxu0
        %v4234 = vadd.f32 %v4121, %v4233
        %v4235 = vpop.f32.mrb[0].mxu0
        %v4236 = vadd.f32 %v4123, %v4235
        %v4237 = vpop.f32.mrb[0].mxu0
        %v4238 = vadd.f32 %v4125, %v4237
        %4239 = vmatprep.mubr.bf16.mxu0 0
        %4240 = vmatmul.mubr.bf16.gmra.mrb[0].mxu0 %v3612
        %v4241 = vpop.f32.mrb[0].mxu0
        %v4242 = vadd.f32 %v4129, %v4241
        %v4243 = vpop.f32.mrb[0].mxu0
        %v4244 = vadd.f32 %v4131, %v4243
        %v4245 = vpop.f32.mrb[0].mxu0
        %v4246 = vadd.f32 %v4133, %v4245
        %v4247 = vpop.f32.mrb[0].mxu0
        %v4248 = vadd.f32 %v4135, %v4247
        %4249 = vdwg.mxu0
        %v4250 = vmax.f32 %v4172, 0.0
        %v4251 = vmax.f32 %v4174, 0.0
        %v4252 = vmax.f32 %v4176, 0.0
        %v4253 = vmax.f32 %v4178, 0.0
        %v4254 = vmax.f32 %v4182, 0.0
        %v4255 = vmax.f32 %v4184, 0.0
        %v4256 = vmax.f32 %v4186, 0.0
        %v4257 = vmax.f32 %v4188, 0.0
        %v4258 = vmax.f32 %v4192, 0.0
        %v4259 = vmax.f32 %v4194, 0.0
        %v4260 = vmax.f32 %v4196, 0.0
        %v4261 = vmax.f32 %v4198, 0.0
        %v4262 = vmax.f32 %v4202, 0.0
        %v4263 = vmax.f32 %v4204, 0.0
        %v4264 = vmax.f32 %v4206, 0.0
        %v4265 = vmax.f32 %v4208, 0.0
        %v4266 = vmax.f32 %v4212, 0.0
        %v4267 = vmax.f32 %v4214, 0.0
        %v4268 = vmax.f32 %v4216, 0.0
        %v4269 = vmax.f32 %v4218, 0.0
        %v4270 = vmax.f32 %v4222, 0.0
        %v4271 = vmax.f32 %v4224, 0.0
        %v4272 = vmax.f32 %v4226, 0.0
        %v4273 = vmax.f32 %v4228, 0.0
        %v4274 = vmax.f32 %v4232, 0.0
        %v4275 = vmax.f32 %v4234, 0.0
        %v4276 = vmax.f32 %v4236, 0.0
        %v4277 = vmax.f32 %v4238, 0.0
        %v4278 = vmax.f32 %v4242, 0.0
        %v4279 = vmax.f32 %v4244, 0.0
        %v4280 = vmax.f32 %v4246, 0.0
        %v4281 = vmax.f32 %v4248, 0.0
        %v4282 = vld [vmem:[%s6] sm:$0xf]
        %v4283 = vpack.c.bf16 %v4252, %v4250
        %v4284 = vpack.c.bf16 %v4253, %v4251
        %v4285 = vpack.c.bf16 %v4256, %v4254
        %v4286 = vpack.c.bf16 %v4257, %v4255
        %v4287 = vpack.c.bf16 %v4260, %v4258
        %v4288 = vpack.c.bf16 %v4261, %v4259
        %v4289 = vpack.c.bf16 %v4264, %v4262
        %v4290 = vpack.c.bf16 %v4265, %v4263
        %v4291 = vpack.c.bf16 %v4268, %v4266
        %v4292 = vpack.c.bf16 %v4269, %v4267
        %v4293 = vpack.c.bf16 %v4272, %v4270
        %v4294 = vpack.c.bf16 %v4273, %v4271
        %v4295 = vpack.c.bf16 %v4276, %v4274
        %v4296 = vpack.c.bf16 %v4277, %v4275
        %v4297 = vpack.c.bf16 %v4280, %v4278
        %v4298 = vpack.c.bf16 %v4281, %v4279
        %v4299 = vld [vmem:[%s7] sm:$0xff]
        %4301 = vset.pattern.permute.xlu0 0
        %4302 = vperm.xlu0 %4301, %v4299
        %v4303 = vpop.permute.xlu0 %4302
        %4305 = vmatprep.subr.bf16.mxu0 %v4284
        %4306 = vmatpush1.bf16.msra.mxu0 %v4283
        %4307 = vmatprep.subr.bf16.mxu0 %v4286
        %4308 = vmatpush1.bf16.msra.mxu0 %v4285
        %4309 = vmatprep.subr.bf16.mxu0 %v4288
        %4310 = vmatpush1.bf16.msra.mxu0 %v4287
        %4311 = vmatprep.subr.bf16.mxu0 %v4290
        %4312 = vmatpush1.bf16.msra.mxu0 %v4289
        %4313 = vmatprep.subr.bf16.mxu0 %v4292
        %4314 = vmatpush1.bf16.msra.mxu0 %v4291
        %4315 = vmatprep.subr.bf16.mxu0 %v4294
        %4316 = vmatpush1.bf16.msra.mxu0 %v4293
        %4317 = vmatprep.subr.bf16.mxu0 %v4296
        %4318 = vmatpush1.bf16.msra.mxu0 %v4295
        %4319 = vmatprep.subr.bf16.mxu0 %v4298
        %4320 = vmatpush1.bf16.msra.mxu0 %v4297
        %4321 = vmatprep.subr.bf16.mxu0 0
        %4322 = vmatpush1.bf16.msra.mxu0 0
        %4323 = vmatprep.subr.bf16.mxu0 0
        %4324 = vmatpush1.bf16.msra.mxu0 0
        %4325 = vmatprep.subr.bf16.mxu0 0
        %4326 = vmatpush1.bf16.msra.mxu0 0
        %4327 = vmatprep.subr.bf16.mxu0 0
        %4328 = vmatpush1.bf16.msra.mxu0 0
        %4329 = vmatprep.subr.bf16.mxu0 0
        %4330 = vmatpush1.bf16.msra.mxu0 0
        %4331 = vmatprep.subr.bf16.mxu0 0
        %4332 = vmatpush1.bf16.msra.mxu0 0
        %4333 = vmatprep.subr.bf16.mxu0 0
        %4334 = vmatpush1.bf16.msra.mxu0 0
        %4335 = vmatprep.subr.bf16.mxu0 0
        %4336 = vmatpush1.bf16.msra.mxu0 0
        %4337 = vmatprep.mubr.bf16.mxu0 0
        %4338 = vmatmul.mubr.bf16.gmra.mrb[0].mxu0 %v4282
        %v4339 = vpop.f32.mrb[0].mxu0
        %v4340 = vadd.f32 %v4303, %v4339
        %v4341 = vpop.f32.mrb[0].mxu0
        %v4342 = vadd.f32 %v4303, %v4341
        %v4343 = vpop.f32.mrb[0].mxu0
        %v4344 = vpop.f32.mrb[0].mxu0
        %4345 = vdwg.mxu0
        %4346 = vst [vmem:[%s506] sm:$0xff] %v4340
        %4347 = vst [vmem:[%s506 + $0x8] sm:$0xff] %v4342
        %v4348 = vld [vmem:[%s8] sm:$0xff]
        %v4349 = vld [vmem:[%s8 + $0x8] sm:$0xff]
        %v4350 = vld [vmem:[%s8 + $0x10] sm:$0xf]
        %v4351 = vld [vmem:[%s8 + $0x14] sm:$0xff]
        %v4352 = vld [vmem:[%s8 + $0x1c] sm:$0xff]
        %v4353 = vld [vmem:[%s8 + $0x24] sm:$0xf]
        %v4354 = vld [vmem:[%s8 + $0x28] sm:$0xff]
        %v4355 = vld [vmem:[%s8 + $0x30] sm:$0xff]
        %v4356 = vld [vmem:[%s8 + $0x38] sm:$0xf]
        %v4357 = vld [vmem:[%s8 + $0x3c] sm:$0xff]
        %v4358 = vld [vmem:[%s8 + $0x44] sm:$0xff]
        %v4359 = vld [vmem:[%s8 + $0x4c] sm:$0xf]
        %v4360 = vld [vmem:[%s8 + $0x50] sm:$0xff]
        %v4361 = vld [vmem:[%s8 + $0x58] sm:$0xff]
        %v4362 = vld [vmem:[%s8 + $0x60] sm:$0xf]
        %v4363 = vld [vmem:[%s8 + $0x64] sm:$0xff]
        %v4364 = vld [vmem:[%s8 + $0x6c] sm:$0xff]
        %v4365 = vld [vmem:[%s8 + $0x74] sm:$0xf]
        %v4366 = vld [vmem:[%s8 + $0x78] sm:$0xff]
        %v4367 = vld [vmem:[%s8 + $0x80] sm:$0xff]
        %v4368 = vld [vmem:[%s8 + $0x88] sm:$0xf]
        %v4369 = vld [vmem:[%s8 + $0x8c] sm:$0xff]
        %v4370 = vld [vmem:[%s8 + $0x94] sm:$0xff]
        %v4371 = vld [vmem:[%s8 + $0x9c] sm:$0xf]
        %v4372 = vld [vmem:[%s9] sm:$0xff]
        %v4373 = vld [vmem:[%s9 + $0x8] sm:$0xff]
        %v4374 = vld [vmem:[%s9 + $0x10] sm:$0xff]
        %v4375 = vld [vmem:[%s9 + $0x18] sm:$0xff]
        %v4376 = vld [vmem:[%s9 + $0x20] sm:$0xff]
        %v4377 = vld [vmem:[%s9 + $0x28] sm:$0xff]
        %v4378 = vld [vmem:[%s9 + $0x30] sm:$0xff]
        %v4379 = vld [vmem:[%s9 + $0x38] sm:$0xff]
        %4381 = vset.pattern.permute.xlu0 0
        %4382 = vperm.xlu0 %4381, %v4372
        %v4383 = vpop.permute.xlu0 %4382
        %4386 = vset.pattern.permute.xlu0 0
        %4387 = vperm.xlu0 %4386, %v4373
        %v4388 = vpop.permute.xlu0 %4387
        %4391 = vset.pattern.permute.xlu0 0
        %4392 = vperm.xlu0 %4391, %v4374
        %v4393 = vpop.permute.xlu0 %4392
        %4396 = vset.pattern.permute.xlu0 0
        %4397 = vperm.xlu0 %4396, %v4375
        %v4398 = vpop.permute.xlu0 %4397
        %4401 = vset.pattern.permute.xlu0 0
        %4402 = vperm.xlu0 %4401, %v4376
        %v4403 = vpop.permute.xlu0 %4402
        %4406 = vset.pattern.permute.xlu0 0
        %4407 = vperm.xlu0 %4406, %v4377
        %v4408 = vpop.permute.xlu0 %4407
        %4411 = vset.pattern.permute.xlu0 0
        %4412 = vperm.xlu0 %4411, %v4378
        %v4413 = vpop.permute.xlu0 %4412
        %4416 = vset.pattern.permute.xlu0 0
        %4417 = vperm.xlu0 %4416, %v4379
        %v4418 = vpop.permute.xlu0 %4417
        %v4444 = vunpack.c.l.b16 %v4348
        %v4445 = vunpack.c.h.b16 %v4348
        %v4446 = vunpack.c.l.b16 %v4349
        %v4447 = vunpack.c.h.b16 %v4349
        %v4448 = vunpack.c.l.b16 %v4350
        %v4449 = vunpack.c.l.b16 %v4351
        %v4450 = vunpack.c.h.b16 %v4351
        %v4451 = vunpack.c.l.b16 %v4352
        %v4452 = vunpack.c.h.b16 %v4352
        %v4453 = vunpack.c.l.b16 %v4353
        %v4454 = vunpack.c.l.b16 %v4354
        %v4455 = vunpack.c.h.b16 %v4354
        %v4456 = vunpack.c.l.b16 %v4355
        %v4457 = vunpack.c.h.b16 %v4355
        %v4458 = vunpack.c.l.b16 %v4356
        %v4459 = vunpack.c.l.b16 %v4357
        %v4460 = vunpack.c.h.b16 %v4357
        %v4461 = vunpack.c.l.b16 %v4358
        %v4462 = vunpack.c.h.b16 %v4358
        %v4463 = vunpack.c.l.b16 %v4359
        %v4464 = vunpack.c.l.b16 %v4360
        %v4465 = vunpack.c.h.b16 %v4360
        %v4466 = vunpack.c.l.b16 %v4361
        %v4467 = vunpack.c.h.b16 %v4361
        %v4468 = vunpack.c.l.b16 %v4362
        %v4469 = vunpack.c.l.b16 %v4363
        %v4470 = vunpack.c.h.b16 %v4363
        %v4471 = vunpack.c.l.b16 %v4364
        %v4472 = vunpack.c.h.b16 %v4364
        %v4473 = vunpack.c.l.b16 %v4365
        %v4474 = vunpack.c.l.b16 %v4366
        %v4475 = vunpack.c.h.b16 %v4366
        %v4476 = vunpack.c.l.b16 %v4367
        %v4477 = vunpack.c.h.b16 %v4367
        %v4478 = vunpack.c.l.b16 %v4368
        %v4479 = vunpack.c.l.b16 %v4369
        %v4480 = vunpack.c.h.b16 %v4369
        %v4481 = vunpack.c.l.b16 %v4370
        %v4482 = vunpack.c.h.b16 %v4370
        %v4483 = vunpack.c.l.b16 %v4371
        %v4484 = vpack.c.b16 %v4449, %v4444
        %v4485 = vpack.c.b16 %v4450, %v4445
        %v4486 = vpack.c.b16 %v4451, %v4446
        %v4487 = vpack.c.b16 %v4452, %v4447
        %v4488 = vpack.c.b16 %v4453, %v4448
        %v4489 = vpack.c.b16 %v4459, %v4454
        %v4490 = vpack.c.b16 %v4460, %v4455
        %v4491 = vpack.c.b16 %v4461, %v4456
        %v4492 = vpack.c.b16 %v4462, %v4457
        %v4493 = vpack.c.b16 %v4463, %v4458
        %v4494 = vpack.c.b16 %v4469, %v4464
        %v4495 = vpack.c.b16 %v4470, %v4465
        %v4496 = vpack.c.b16 %v4471, %v4466
        %v4497 = vpack.c.b16 %v4472, %v4467
        %v4498 = vpack.c.b16 %v4473, %v4468
        %v4499 = vpack.c.b16 %v4479, %v4474
        %v4500 = vpack.c.b16 %v4480, %v4475
        %v4501 = vpack.c.b16 %v4481, %v4476
        %v4502 = vpack.c.b16 %v4482, %v4477
        %v4503 = vpack.c.b16 %v4483, %v4478
        %v4521 = vsel %vm1577, %v4488, 0
        %v4524 = vsel %vm1577, %v4493, 0
        %v4527 = vsel %vm1577, %v4498, 0
        %v4530 = vsel %vm1577, %v4503, 0
        %4532 = vmatprep.subr.bf16.mxu0 %v630
        %4533 = vmatpush1.bf16.msra.mxu0 %v629
        %4534 = vmatprep.subr.bf16.mxu0 %v632
        %4535 = vmatpush1.bf16.msra.mxu0 %v631
        %4536 = vmatprep.subr.bf16.mxu0 %v634
        %4537 = vmatpush1.bf16.msra.mxu0 %v633
        %4538 = vmatprep.subr.bf16.mxu0 %v636
        %4539 = vmatpush1.bf16.msra.mxu0 %v635
        %4540 = vmatprep.subr.bf16.mxu0 %v714
        %4541 = vmatpush1.bf16.msra.mxu0 %v713
        %4542 = vmatprep.subr.bf16.mxu0 %v716
        %4543 = vmatpush1.bf16.msra.mxu0 %v715
        %4544 = vmatprep.subr.bf16.mxu0 %v718
        %4545 = vmatpush1.bf16.msra.mxu0 %v717
        %4546 = vmatprep.subr.bf16.mxu0 %v720
        %4547 = vmatpush1.bf16.msra.mxu0 %v719
        %4548 = vmatprep.subr.bf16.mxu0 %v798
        %4549 = vmatpush1.bf16.msra.mxu0 %v797
        %4550 = vmatprep.subr.bf16.mxu0 %v800
        %4551 = vmatpush1.bf16.msra.mxu0 %v799
        %4552 = vmatprep.subr.bf16.mxu0 %v802
        %4553 = vmatpush1.bf16.msra.mxu0 %v801
        %4554 = vmatprep.subr.bf16.mxu0 %v804
        %4555 = vmatpush1.bf16.msra.mxu0 %v803
        %4556 = vmatprep.subr.bf16.mxu0 %v882
        %4557 = vmatpush1.bf16.msra.mxu0 %v881
        %4558 = vmatprep.subr.bf16.mxu0 %v884
        %4559 = vmatpush1.bf16.msra.mxu0 %v883
        %4560 = vmatprep.subr.bf16.mxu0 %v886
        %4561 = vmatpush1.bf16.msra.mxu0 %v885
        %4562 = vmatprep.subr.bf16.mxu0 %v888
        %4563 = vmatpush1.bf16.msra.mxu0 %v887
        %4564 = vmatprep.mubr.bf16.mxu0 %v4485
        %4565 = vmatmul.mubr.bf16.gmra.mrb[0].mxu0 %v4484
        %v4566 = vpop.f32.mrb[0].mxu0
        %v4567 = vadd.f32 %v4383, %v4566
        %v4568 = vpop.f32.mrb[0].mxu0
        %v4569 = vadd.f32 %v4383, %v4568
        %v4570 = vpop.f32.mrb[0].mxu0
        %v4571 = vadd.f32 %v4388, %v4570
        %v4572 = vpop.f32.mrb[0].mxu0
        %v4573 = vadd.f32 %v4388, %v4572
        %4574 = vmatprep.mubr.bf16.mxu0 %v4490
        %4575 = vmatmul.mubr.bf16.gmra.mrb[0].mxu0 %v4489
        %v4576 = vpop.f32.mrb[0].mxu0
        %v4577 = vadd.f32 %v4393, %v4576
        %v4578 = vpop.f32.mrb[0].mxu0
        %v4579 = vadd.f32 %v4393, %v4578
        %v4580 = vpop.f32.mrb[0].mxu0
        %v4581 = vadd.f32 %v4398, %v4580
        %v4582 = vpop.f32.mrb[0].mxu0
        %v4583 = vadd.f32 %v4398, %v4582
        %4584 = vmatprep.mubr.bf16.mxu0 %v4495
        %4585 = vmatmul.mubr.bf16.gmra.mrb[0].mxu0 %v4494
        %v4586 = vpop.f32.mrb[0].mxu0
        %v4587 = vadd.f32 %v4403, %v4586
        %v4588 = vpop.f32.mrb[0].mxu0
        %v4589 = vadd.f32 %v4403, %v4588
        %v4590 = vpop.f32.mrb[0].mxu0
        %v4591 = vadd.f32 %v4408, %v4590
        %v4592 = vpop.f32.mrb[0].mxu0
        %v4593 = vadd.f32 %v4408, %v4592
        %4594 = vmatprep.mubr.bf16.mxu0 %v4500
        %4595 = vmatmul.mubr.bf16.gmra.mrb[0].mxu0 %v4499
        %v4596 = vpop.f32.mrb[0].mxu0
        %v4597 = vadd.f32 %v4413, %v4596
        %v4598 = vpop.f32.mrb[0].mxu0
        %v4599 = vadd.f32 %v4413, %v4598
        %v4600 = vpop.f32.mrb[0].mxu0
        %v4601 = vadd.f32 %v4418, %v4600
        %v4602 = vpop.f32.mrb[0].mxu0
        %v4603 = vadd.f32 %v4418, %v4602
        %4604 = vdwg.mxu0
        %4605 = vmatprep.subr.bf16.mxu0 %v890
        %4606 = vmatpush1.bf16.msra.mxu0 %v889
        %4607 = vmatprep.subr.bf16.mxu0 %v892
        %4608 = vmatpush1.bf16.msra.mxu0 %v891
        %4609 = vmatprep.subr.bf16.mxu0 %v894
        %4610 = vmatpush1.bf16.msra.mxu0 %v893
        %4611 = vmatprep.subr.bf16.mxu0 %v896
        %4612 = vmatpush1.bf16.msra.mxu0 %v895
        %4613 = vmatprep.subr.bf16.mxu0 %v974
        %4614 = vmatpush1.bf16.msra.mxu0 %v973
        %4615 = vmatprep.subr.bf16.mxu0 %v976
        %4616 = vmatpush1.bf16.msra.mxu0 %v975
        %4617 = vmatprep.subr.bf16.mxu0 %v978
        %4618 = vmatpush1.bf16.msra.mxu0 %v977
        %4619 = vmatprep.subr.bf16.mxu0 %v980
        %4620 = vmatpush1.bf16.msra.mxu0 %v979
        %4621 = vmatprep.subr.bf16.mxu0 %v1058
        %4622 = vmatpush1.bf16.msra.mxu0 %v1057
        %4623 = vmatprep.subr.bf16.mxu0 %v1060
        %4624 = vmatpush1.bf16.msra.mxu0 %v1059
        %4625 = vmatprep.subr.bf16.mxu0 %v1062
        %4626 = vmatpush1.bf16.msra.mxu0 %v1061
        %4627 = vmatprep.subr.bf16.mxu0 %v1064
        %4628 = vmatpush1.bf16.msra.mxu0 %v1063
        %4629 = vmatprep.subr.bf16.mxu0 %v1142
        %4630 = vmatpush1.bf16.msra.mxu0 %v1141
        %4631 = vmatprep.subr.bf16.mxu0 %v1144
        %4632 = vmatpush1.bf16.msra.mxu0 %v1143
        %4633 = vmatprep.subr.bf16.mxu0 %v1146
        %4634 = vmatpush1.bf16.msra.mxu0 %v1145
        %4635 = vmatprep.subr.bf16.mxu0 %v1148
        %4636 = vmatpush1.bf16.msra.mxu0 %v1147
        %4637 = vmatprep.mubr.bf16.mxu0 %v4487
        %4638 = vmatmul.mubr.bf16.gmra.mrb[0].mxu0 %v4486
        %v4639 = vpop.f32.mrb[0].mxu0
        %v4640 = vadd.f32 %v4567, %v4639
        %v4641 = vpop.f32.mrb[0].mxu0
        %v4642 = vadd.f32 %v4569, %v4641
        %v4643 = vpop.f32.mrb[0].mxu0
        %v4644 = vadd.f32 %v4571, %v4643
        %v4645 = vpop.f32.mrb[0].mxu0
        %v4646 = vadd.f32 %v4573, %v4645
        %4647 = vmatprep.mubr.bf16.mxu0 %v4492
        %4648 = vmatmul.mubr.bf16.gmra.mrb[0].mxu0 %v4491
        %v4649 = vpop.f32.mrb[0].mxu0
        %v4650 = vadd.f32 %v4577, %v4649
        %v4651 = vpop.f32.mrb[0].mxu0
        %v4652 = vadd.f32 %v4579, %v4651
        %v4653 = vpop.f32.mrb[0].mxu0
        %v4654 = vadd.f32 %v4581, %v4653
        %v4655 = vpop.f32.mrb[0].mxu0
        %v4656 = vadd.f32 %v4583, %v4655
        %4657 = vmatprep.mubr.bf16.mxu0 %v4497
        %4658 = vmatmul.mubr.bf16.gmra.mrb[0].mxu0 %v4496
        %v4659 = vpop.f32.mrb[0].mxu0
        %v4660 = vadd.f32 %v4587, %v4659
        %v4661 = vpop.f32.mrb[0].mxu0
        %v4662 = vadd.f32 %v4589, %v4661
        %v4663 = vpop.f32.mrb[0].mxu0
        %v4664 = vadd.f32 %v4591, %v4663
        %v4665 = vpop.f32.mrb[0].mxu0
        %v4666 = vadd.f32 %v4593, %v4665
        %4667 = vmatprep.mubr.bf16.mxu0 %v4502
        %4668 = vmatmul.mubr.bf16.gmra.mrb[0].mxu0 %v4501
        %v4669 = vpop.f32.mrb[0].mxu0
        %v4670 = vadd.f32 %v4597, %v4669
        %v4671 = vpop.f32.mrb[0].mxu0
        %v4672 = vadd.f32 %v4599, %v4671
        %v4673 = vpop.f32.mrb[0].mxu0
        %v4674 = vadd.f32 %v4601, %v4673
        %v4675 = vpop.f32.mrb[0].mxu0
        %v4676 = vadd.f32 %v4603, %v4675
        %4677 = vdwg.mxu0
        %4678 = vmatprep.subr.bf16.mxu0 %v1226
        %4679 = vmatpush1.bf16.msra.mxu0 %v1225
        %4680 = vmatprep.subr.bf16.mxu0 %v1228
        %4681 = vmatpush1.bf16.msra.mxu0 %v1227
        %4682 = vmatprep.subr.bf16.mxu0 %v1230
        %4683 = vmatpush1.bf16.msra.mxu0 %v1229
        %4684 = vmatprep.subr.bf16.mxu0 %v1232
        %4685 = vmatpush1.bf16.msra.mxu0 %v1231
        %4686 = vmatprep.subr.bf16.mxu0 0
        %4687 = vmatpush1.bf16.msra.mxu0 0
        %4688 = vmatprep.subr.bf16.mxu0 0
        %4689 = vmatpush1.bf16.msra.mxu0 0
        %4690 = vmatprep.subr.bf16.mxu0 0
        %4691 = vmatpush1.bf16.msra.mxu0 0
        %4692 = vmatprep.subr.bf16.mxu0 0
        %4693 = vmatpush1.bf16.msra.mxu0 0
        %4694 = vmatprep.subr.bf16.mxu0 0
        %4695 = vmatpush1.bf16.msra.mxu0 0
        %4696 = vmatprep.subr.bf16.mxu0 0
        %4697 = vmatpush1.bf16.msra.mxu0 0
        %4698 = vmatprep.subr.bf16.mxu0 0
        %4699 = vmatpush1.bf16.msra.mxu0 0
        %4700 = vmatprep.subr.bf16.mxu0 0
        %4701 = vmatpush1.bf16.msra.mxu0 0
        %4702 = vmatprep.subr.bf16.mxu0 0
        %4703 = vmatpush1.bf16.msra.mxu0 0
        %4704 = vmatprep.subr.bf16.mxu0 0
        %4705 = vmatpush1.bf16.msra.mxu0 0
        %4706 = vmatprep.subr.bf16.mxu0 0
        %4707 = vmatpush1.bf16.msra.mxu0 0
        %4708 = vmatprep.subr.bf16.mxu0 0
        %4709 = vmatpush1.bf16.msra.mxu0 0
        %4710 = vmatprep.mubr.bf16.mxu0 0
        %4711 = vmatmul.mubr.bf16.gmra.mrb[0].mxu0 %v4521
        %v4712 = vpop.f32.mrb[0].mxu0
        %v4713 = vadd.f32 %v4640, %v4712
        %v4714 = vpop.f32.mrb[0].mxu0
        %v4715 = vadd.f32 %v4642, %v4714
        %v4716 = vpop.f32.mrb[0].mxu0
        %v4717 = vadd.f32 %v4644, %v4716
        %v4718 = vpop.f32.mrb[0].mxu0
        %v4719 = vadd.f32 %v4646, %v4718
        %4720 = vmatprep.mubr.bf16.mxu0 0
        %4721 = vmatmul.mubr.bf16.gmra.mrb[0].mxu0 %v4524
        %v4722 = vpop.f32.mrb[0].mxu0
        %v4723 = vadd.f32 %v4650, %v4722
        %v4724 = vpop.f32.mrb[0].mxu0
        %v4725 = vadd.f32 %v4652, %v4724
        %v4726 = vpop.f32.mrb[0].mxu0
        %v4727 = vadd.f32 %v4654, %v4726
        %v4728 = vpop.f32.mrb[0].mxu0
        %v4729 = vadd.f32 %v4656, %v4728
        %4730 = vmatprep.mubr.bf16.mxu0 0
        %4731 = vmatmul.mubr.bf16.gmra.mrb[0].mxu0 %v4527
        %v4732 = vpop.f32.mrb[0].mxu0
        %v4733 = vadd.f32 %v4660, %v4732
        %v4734 = vpop.f32.mrb[0].mxu0
        %v4735 = vadd.f32 %v4662, %v4734
        %v4736 = vpop.f32.mrb[0].mxu0
        %v4737 = vadd.f32 %v4664, %v4736
        %v4738 = vpop.f32.mrb[0].mxu0
        %v4739 = vadd.f32 %v4666, %v4738
        %4740 = vmatprep.mubr.bf16.mxu0 0
        %4741 = vmatmul.mubr.bf16.gmra.mrb[0].mxu0 %v4530
        %v4742 = vpop.f32.mrb[0].mxu0
        %v4743 = vadd.f32 %v4670, %v4742
        %v4744 = vpop.f32.mrb[0].mxu0
        %v4745 = vadd.f32 %v4672, %v4744
        %v4746 = vpop.f32.mrb[0].mxu0
        %v4747 = vadd.f32 %v4674, %v4746
        %v4748 = vpop.f32.mrb[0].mxu0
        %v4749 = vadd.f32 %v4676, %v4748
        %4750 = vdwg.mxu0
        %v4751 = vmax.f32 %v4713, 0.0
        %v4752 = vmax.f32 %v4715, 0.0
        %v4753 = vmax.f32 %v4717, 0.0
        %v4754 = vmax.f32 %v4719, 0.0
        %v4755 = vmax.f32 %v4723, 0.0
        %v4756 = vmax.f32 %v4725, 0.0
        %v4757 = vmax.f32 %v4727, 0.0
        %v4758 = vmax.f32 %v4729, 0.0
        %v4759 = vmax.f32 %v4733, 0.0
        %v4760 = vmax.f32 %v4735, 0.0
        %v4761 = vmax.f32 %v4737, 0.0
        %v4762 = vmax.f32 %v4739, 0.0
        %v4763 = vmax.f32 %v4743, 0.0
        %v4764 = vmax.f32 %v4745, 0.0
        %v4765 = vmax.f32 %v4747, 0.0
        %v4766 = vmax.f32 %v4749, 0.0
        %4767 = vrot.lane.b32.xlu0 %v4751, 17
        %v4768 = vpop.permute.xlu0 %4767
        %4769 = vrot.lane.b32.xlu0 %v4753, 17
        %v4770 = vpop.permute.xlu0 %4769
        %4771 = vrot.lane.b32.xlu0 %v4755, 17
        %v4772 = vpop.permute.xlu0 %4771
        %4773 = vrot.lane.b32.xlu0 %v4757, 17
        %v4774 = vpop.permute.xlu0 %4773
        %4775 = vrot.lane.b32.xlu0 %v4759, 17
        %v4776 = vpop.permute.xlu0 %4775
        %4777 = vrot.lane.b32.xlu0 %v4761, 17
        %v4778 = vpop.permute.xlu0 %4777
        %4779 = vrot.lane.b32.xlu0 %v4763, 17
        %v4780 = vpop.permute.xlu0 %4779
        %4781 = vrot.lane.b32.xlu0 %v4765, 17
        %v4782 = vpop.permute.xlu0 %4781
        %4783 = vrot.lane.b32.xlu0 %v4752, 17
        %v4784 = vpop.permute.xlu0 %4783
        %4785 = vrot.lane.b32.xlu0 %v4754, 17
        %v4786 = vpop.permute.xlu0 %4785
        %4787 = vrot.lane.b32.xlu0 %v4756, 17
        %v4788 = vpop.permute.xlu0 %4787
        %4789 = vrot.lane.b32.xlu0 %v4758, 17
        %v4790 = vpop.permute.xlu0 %4789
        %4791 = vrot.lane.b32.xlu0 %v4760, 17
        %v4792 = vpop.permute.xlu0 %4791
        %4793 = vrot.lane.b32.xlu0 %v4762, 17
        %v4794 = vpop.permute.xlu0 %4793
        %4795 = vrot.lane.b32.xlu0 %v4764, 17
        %v4796 = vpop.permute.xlu0 %4795
        %4797 = vrot.lane.b32.xlu0 %v4766, 17
        %v4798 = vpop.permute.xlu0 %4797
        %v4799 = vsel %vm585, %v4768, %v4784
        %v4800 = vsel %vm585, %v4770, %v4786
        %v4801 = vsel %vm585, %v4772, %v4788
        %v4802 = vsel %vm585, %v4774, %v4790
        %v4803 = vsel %vm585, %v4776, %v4792
        %v4804 = vsel %vm585, %v4778, %v4794
        %v4805 = vsel %vm585, %v4780, %v4796
        %v4806 = vsel %vm585, %v4782, %v4798
        %v4807 = vsel %vm585, %v4784, %v4768
        %v4808 = vsel %vm585, %v4786, %v4770
        %v4809 = vsel %vm585, %v4788, %v4772
        %v4810 = vsel %vm585, %v4790, %v4774
        %v4811 = vsel %vm585, %v4792, %v4776
        %v4812 = vsel %vm585, %v4794, %v4778
        %v4813 = vsel %vm585, %v4796, %v4780
        %v4814 = vsel %vm585, %v4798, %v4782
        %v4815 = vmul.f32 %v4807, %v606
        %v4816 = vmul.f32 %v4799, %v610
        %v4817 = vmul.f32 %v4808, %v606
        %v4818 = vmul.f32 %v4800, %v610
        %v4819 = vmul.f32 %v4809, %v606
        %v4820 = vmul.f32 %v4801, %v610
        %v4821 = vmul.f32 %v4810, %v606
        %v4822 = vmul.f32 %v4802, %v610
        %v4823 = vmul.f32 %v4811, %v606
        %v4824 = vmul.f32 %v4803, %v610
        %v4825 = vmul.f32 %v4812, %v606
        %v4826 = vmul.f32 %v4804, %v610
        %v4827 = vmul.f32 %v4813, %v606
        %v4828 = vmul.f32 %v4805, %v610
        %v4829 = vmul.f32 %v4814, %v606
        %v4830 = vmul.f32 %v4806, %v610
        %v4831 = vpack.c.bf16 %v4817, %v4815
        %v4832 = vpack.c.bf16 %v4818, %v4816
        %v4833 = vpack.c.bf16 %v4821, %v4819
        %v4834 = vpack.c.bf16 %v4822, %v4820
        %v4835 = vpack.c.bf16 %v4825, %v4823
        %v4836 = vpack.c.bf16 %v4826, %v4824
        %v4837 = vpack.c.bf16 %v4829, %v4827
        %v4838 = vpack.c.bf16 %v4830, %v4828
        %4839 = vrot.lane.b32.xlu0 %v4751, 16
        %v4840 = vpop.permute.xlu0 %4839
        %4841 = vrot.lane.b32.xlu0 %v4753, 16
        %v4842 = vpop.permute.xlu0 %4841
        %4843 = vrot.lane.b32.xlu0 %v4755, 16
        %v4844 = vpop.permute.xlu0 %4843
        %4845 = vrot.lane.b32.xlu0 %v4757, 16
        %v4846 = vpop.permute.xlu0 %4845
        %4847 = vrot.lane.b32.xlu0 %v4759, 16
        %v4848 = vpop.permute.xlu0 %4847
        %4849 = vrot.lane.b32.xlu0 %v4761, 16
        %v4850 = vpop.permute.xlu0 %4849
        %4851 = vrot.lane.b32.xlu0 %v4763, 16
        %v4852 = vpop.permute.xlu0 %4851
        %4853 = vrot.lane.b32.xlu0 %v4765, 16
        %v4854 = vpop.permute.xlu0 %4853
        %4855 = vrot.lane.b32.xlu0 %v4752, 16
        %v4856 = vpop.permute.xlu0 %4855
        %4857 = vrot.lane.b32.xlu0 %v4754, 16
        %v4858 = vpop.permute.xlu0 %4857
        %4859 = vrot.lane.b32.xlu0 %v4756, 16
        %v4860 = vpop.permute.xlu0 %4859
        %4861 = vrot.lane.b32.xlu0 %v4758, 16
        %v4862 = vpop.permute.xlu0 %4861
        %4863 = vrot.lane.b32.xlu0 %v4760, 16
        %v4864 = vpop.permute.xlu0 %4863
        %4865 = vrot.lane.b32.xlu0 %v4762, 16
        %v4866 = vpop.permute.xlu0 %4865
        %4867 = vrot.lane.b32.xlu0 %v4764, 16
        %v4868 = vpop.permute.xlu0 %4867
        %4869 = vrot.lane.b32.xlu0 %v4766, 16
        %v4870 = vpop.permute.xlu0 %4869
        %v4871 = vsel %vm669, %v4840, %v4856
        %v4872 = vsel %vm669, %v4842, %v4858
        %v4873 = vsel %vm669, %v4844, %v4860
        %v4874 = vsel %vm669, %v4846, %v4862
        %v4875 = vsel %vm669, %v4848, %v4864
        %v4876 = vsel %vm669, %v4850, %v4866
        %v4877 = vsel %vm669, %v4852, %v4868
        %v4878 = vsel %vm669, %v4854, %v4870
        %v4879 = vsel %vm669, %v4856, %v4840
        %v4880 = vsel %vm669, %v4858, %v4842
        %v4881 = vsel %vm669, %v4860, %v4844
        %v4882 = vsel %vm669, %v4862, %v4846
        %v4883 = vsel %vm669, %v4864, %v4848
        %v4884 = vsel %vm669, %v4866, %v4850
        %v4885 = vsel %vm669, %v4868, %v4852
        %v4886 = vsel %vm669, %v4870, %v4854
        %v4887 = vmul.f32 %v4879, %v690
        %v4888 = vmul.f32 %v4871, %v694
        %v4889 = vmul.f32 %v4880, %v690
        %v4890 = vmul.f32 %v4872, %v694
        %v4891 = vmul.f32 %v4881, %v690
        %v4892 = vmul.f32 %v4873, %v694
        %v4893 = vmul.f32 %v4882, %v690
        %v4894 = vmul.f32 %v4874, %v694
        %v4895 = vmul.f32 %v4883, %v690
        %v4896 = vmul.f32 %v4875, %v694
        %v4897 = vmul.f32 %v4884, %v690
        %v4898 = vmul.f32 %v4876, %v694
        %v4899 = vmul.f32 %v4885, %v690
        %v4900 = vmul.f32 %v4877, %v694
        %v4901 = vmul.f32 %v4886, %v690
        %v4902 = vmul.f32 %v4878, %v694
        %v4903 = vpack.c.bf16 %v4889, %v4887
        %v4904 = vpack.c.bf16 %v4890, %v4888
        %v4905 = vpack.c.bf16 %v4893, %v4891
        %v4906 = vpack.c.bf16 %v4894, %v4892
        %v4907 = vpack.c.bf16 %v4897, %v4895
        %v4908 = vpack.c.bf16 %v4898, %v4896
        %v4909 = vpack.c.bf16 %v4901, %v4899
        %v4910 = vpack.c.bf16 %v4902, %v4900
        %4911 = vrot.lane.b32.xlu0 %v4751, 15
        %v4912 = vpop.permute.xlu0 %4911
        %4913 = vrot.lane.b32.xlu0 %v4753, 15
        %v4914 = vpop.permute.xlu0 %4913
        %4915 = vrot.lane.b32.xlu0 %v4755, 15
        %v4916 = vpop.permute.xlu0 %4915
        %4917 = vrot.lane.b32.xlu0 %v4757, 15
        %v4918 = vpop.permute.xlu0 %4917
        %4919 = vrot.lane.b32.xlu0 %v4759, 15
        %v4920 = vpop.permute.xlu0 %4919
        %4921 = vrot.lane.b32.xlu0 %v4761, 15
        %v4922 = vpop.permute.xlu0 %4921
        %4923 = vrot.lane.b32.xlu0 %v4763, 15
        %v4924 = vpop.permute.xlu0 %4923
        %4925 = vrot.lane.b32.xlu0 %v4765, 15
        %v4926 = vpop.permute.xlu0 %4925
        %4927 = vrot.lane.b32.xlu0 %v4752, 15
        %v4928 = vpop.permute.xlu0 %4927
        %4929 = vrot.lane.b32.xlu0 %v4754, 15
        %v4930 = vpop.permute.xlu0 %4929
        %4931 = vrot.lane.b32.xlu0 %v4756, 15
        %v4932 = vpop.permute.xlu0 %4931
        %4933 = vrot.lane.b32.xlu0 %v4758, 15
        %v4934 = vpop.permute.xlu0 %4933
        %4935 = vrot.lane.b32.xlu0 %v4760, 15
        %v4936 = vpop.permute.xlu0 %4935
        %4937 = vrot.lane.b32.xlu0 %v4762, 15
        %v4938 = vpop.permute.xlu0 %4937
        %4939 = vrot.lane.b32.xlu0 %v4764, 15
        %v4940 = vpop.permute.xlu0 %4939
        %4941 = vrot.lane.b32.xlu0 %v4766, 15
        %v4942 = vpop.permute.xlu0 %4941
        %v4943 = vsel %vm753, %v4912, %v4928
        %v4944 = vsel %vm753, %v4914, %v4930
        %v4945 = vsel %vm753, %v4916, %v4932
        %v4946 = vsel %vm753, %v4918, %v4934
        %v4947 = vsel %vm753, %v4920, %v4936
        %v4948 = vsel %vm753, %v4922, %v4938
        %v4949 = vsel %vm753, %v4924, %v4940
        %v4950 = vsel %vm753, %v4926, %v4942
        %v4951 = vsel %vm753, %v4928, %v4912
        %v4952 = vsel %vm753, %v4930, %v4914
        %v4953 = vsel %vm753, %v4932, %v4916
        %v4954 = vsel %vm753, %v4934, %v4918
        %v4955 = vsel %vm753, %v4936, %v4920
        %v4956 = vsel %vm753, %v4938, %v4922
        %v4957 = vsel %vm753, %v4940, %v4924
        %v4958 = vsel %vm753, %v4942, %v4926
        %v4959 = vmul.f32 %v4951, %v774
        %v4960 = vmul.f32 %v4943, %v778
        %v4961 = vmul.f32 %v4952, %v774
        %v4962 = vmul.f32 %v4944, %v778
        %v4963 = vmul.f32 %v4953, %v774
        %v4964 = vmul.f32 %v4945, %v778
        %v4965 = vmul.f32 %v4954, %v774
        %v4966 = vmul.f32 %v4946, %v778
        %v4967 = vmul.f32 %v4955, %v774
        %v4968 = vmul.f32 %v4947, %v778
        %v4969 = vmul.f32 %v4956, %v774
        %v4970 = vmul.f32 %v4948, %v778
        %v4971 = vmul.f32 %v4957, %v774
        %v4972 = vmul.f32 %v4949, %v778
        %v4973 = vmul.f32 %v4958, %v774
        %v4974 = vmul.f32 %v4950, %v778
        %v4975 = vpack.c.bf16 %v4961, %v4959
        %v4976 = vpack.c.bf16 %v4962, %v4960
        %v4977 = vpack.c.bf16 %v4965, %v4963
        %v4978 = vpack.c.bf16 %v4966, %v4964
        %v4979 = vpack.c.bf16 %v4969, %v4967
        %v4980 = vpack.c.bf16 %v4970, %v4968
        %v4981 = vpack.c.bf16 %v4973, %v4971
        %v4982 = vpack.c.bf16 %v4974, %v4972
        %4983 = vrot.lane.b32.xlu0 %v4751, 1
        %v4984 = vpop.permute.xlu0 %4983
        %4985 = vrot.lane.b32.xlu0 %v4753, 1
        %v4986 = vpop.permute.xlu0 %4985
        %4987 = vrot.lane.b32.xlu0 %v4755, 1
        %v4988 = vpop.permute.xlu0 %4987
        %4989 = vrot.lane.b32.xlu0 %v4757, 1
        %v4990 = vpop.permute.xlu0 %4989
        %4991 = vrot.lane.b32.xlu0 %v4759, 1
        %v4992 = vpop.permute.xlu0 %4991
        %4993 = vrot.lane.b32.xlu0 %v4761, 1
        %v4994 = vpop.permute.xlu0 %4993
        %4995 = vrot.lane.b32.xlu0 %v4763, 1
        %v4996 = vpop.permute.xlu0 %4995
        %4997 = vrot.lane.b32.xlu0 %v4765, 1
        %v4998 = vpop.permute.xlu0 %4997
        %4999 = vrot.lane.b32.xlu0 %v4752, 1
        %v5000 = vpop.permute.xlu0 %4999
        %5001 = vrot.lane.b32.xlu0 %v4754, 1
        %v5002 = vpop.permute.xlu0 %5001
        %5003 = vrot.lane.b32.xlu0 %v4756, 1
        %v5004 = vpop.permute.xlu0 %5003
        %5005 = vrot.lane.b32.xlu0 %v4758, 1
        %v5006 = vpop.permute.xlu0 %5005
        %5007 = vrot.lane.b32.xlu0 %v4760, 1
        %v5008 = vpop.permute.xlu0 %5007
        %5009 = vrot.lane.b32.xlu0 %v4762, 1
        %v5010 = vpop.permute.xlu0 %5009
        %5011 = vrot.lane.b32.xlu0 %v4764, 1
        %v5012 = vpop.permute.xlu0 %5011
        %5013 = vrot.lane.b32.xlu0 %v4766, 1
        %v5014 = vpop.permute.xlu0 %5013
        %v5015 = vsel %vm837, %v4984, %v5000
        %v5016 = vsel %vm837, %v4986, %v5002
        %v5017 = vsel %vm837, %v4988, %v5004
        %v5018 = vsel %vm837, %v4990, %v5006
        %v5019 = vsel %vm837, %v4992, %v5008
        %v5020 = vsel %vm837, %v4994, %v5010
        %v5021 = vsel %vm837, %v4996, %v5012
        %v5022 = vsel %vm837, %v4998, %v5014
        %v5023 = vsel %vm837, %v5000, %v4984
        %v5024 = vsel %vm837, %v5002, %v4986
        %v5025 = vsel %vm837, %v5004, %v4988
        %v5026 = vsel %vm837, %v5006, %v4990
        %v5027 = vsel %vm837, %v5008, %v4992
        %v5028 = vsel %vm837, %v5010, %v4994
        %v5029 = vsel %vm837, %v5012, %v4996
        %v5030 = vsel %vm837, %v5014, %v4998
        %v5031 = vmul.f32 %v5023, %v858
        %v5032 = vmul.f32 %v5015, %v862
        %v5033 = vmul.f32 %v5024, %v858
        %v5034 = vmul.f32 %v5016, %v862
        %v5035 = vmul.f32 %v5025, %v858
        %v5036 = vmul.f32 %v5017, %v862
        %v5037 = vmul.f32 %v5026, %v858
        %v5038 = vmul.f32 %v5018, %v862
        %v5039 = vmul.f32 %v5027, %v858
        %v5040 = vmul.f32 %v5019, %v862
        %v5041 = vmul.f32 %v5028, %v858
        %v5042 = vmul.f32 %v5020, %v862
        %v5043 = vmul.f32 %v5029, %v858
        %v5044 = vmul.f32 %v5021, %v862
        %v5045 = vmul.f32 %v5030, %v858
        %v5046 = vmul.f32 %v5022, %v862
        %v5047 = vpack.c.bf16 %v5033, %v5031
        %v5048 = vpack.c.bf16 %v5034, %v5032
        %v5049 = vpack.c.bf16 %v5037, %v5035
        %v5050 = vpack.c.bf16 %v5038, %v5036
        %v5051 = vpack.c.bf16 %v5041, %v5039
        %v5052 = vpack.c.bf16 %v5042, %v5040
        %v5053 = vpack.c.bf16 %v5045, %v5043
        %v5054 = vpack.c.bf16 %v5046, %v5044
        %v5055 = vpack.c.bf16 %v4753, %v4751
        %v5056 = vpack.c.bf16 %v4754, %v4752
        %v5057 = vpack.c.bf16 %v4757, %v4755
        %v5058 = vpack.c.bf16 %v4758, %v4756
        %v5059 = vpack.c.bf16 %v4761, %v4759
        %v5060 = vpack.c.bf16 %v4762, %v4760
        %v5061 = vpack.c.bf16 %v4765, %v4763
        %v5062 = vpack.c.bf16 %v4766, %v4764
        %5063 = vrot.lane.b32.xlu0 %v4751, 127
        %v5064 = vpop.permute.xlu0 %5063
        %5065 = vrot.lane.b32.xlu0 %v4753, 127
        %v5066 = vpop.permute.xlu0 %5065
        %5067 = vrot.lane.b32.xlu0 %v4755, 127
        %v5068 = vpop.permute.xlu0 %5067
        %5069 = vrot.lane.b32.xlu0 %v4757, 127
        %v5070 = vpop.permute.xlu0 %5069
        %5071 = vrot.lane.b32.xlu0 %v4759, 127
        %v5072 = vpop.permute.xlu0 %5071
        %5073 = vrot.lane.b32.xlu0 %v4761, 127
        %v5074 = vpop.permute.xlu0 %5073
        %5075 = vrot.lane.b32.xlu0 %v4763, 127
        %v5076 = vpop.permute.xlu0 %5075
        %5077 = vrot.lane.b32.xlu0 %v4765, 127
        %v5078 = vpop.permute.xlu0 %5077
        %5079 = vrot.lane.b32.xlu0 %v4752, 127
        %v5080 = vpop.permute.xlu0 %5079
        %5081 = vrot.lane.b32.xlu0 %v4754, 127
        %v5082 = vpop.permute.xlu0 %5081
        %5083 = vrot.lane.b32.xlu0 %v4756, 127
        %v5084 = vpop.permute.xlu0 %5083
        %5085 = vrot.lane.b32.xlu0 %v4758, 127
        %v5086 = vpop.permute.xlu0 %5085
        %5087 = vrot.lane.b32.xlu0 %v4760, 127
        %v5088 = vpop.permute.xlu0 %5087
        %5089 = vrot.lane.b32.xlu0 %v4762, 127
        %v5090 = vpop.permute.xlu0 %5089
        %5091 = vrot.lane.b32.xlu0 %v4764, 127
        %v5092 = vpop.permute.xlu0 %5091
        %5093 = vrot.lane.b32.xlu0 %v4766, 127
        %v5094 = vpop.permute.xlu0 %5093
        %v5095 = vsel %vm929, %v5064, %v5080
        %v5096 = vsel %vm929, %v5066, %v5082
        %v5097 = vsel %vm929, %v5068, %v5084
        %v5098 = vsel %vm929, %v5070, %v5086
        %v5099 = vsel %vm929, %v5072, %v5088
        %v5100 = vsel %vm929, %v5074, %v5090
        %v5101 = vsel %vm929, %v5076, %v5092
        %v5102 = vsel %vm929, %v5078, %v5094
        %v5103 = vsel %vm929, %v5080, %v5064
        %v5104 = vsel %vm929, %v5082, %v5066
        %v5105 = vsel %vm929, %v5084, %v5068
        %v5106 = vsel %vm929, %v5086, %v5070
        %v5107 = vsel %vm929, %v5088, %v5072
        %v5108 = vsel %vm929, %v5090, %v5074
        %v5109 = vsel %vm929, %v5092, %v5076
        %v5110 = vsel %vm929, %v5094, %v5078
        %v5111 = vmul.f32 %v5095, %v950
        %v5112 = vmul.f32 %v5103, %v954
        %v5113 = vmul.f32 %v5096, %v950
        %v5114 = vmul.f32 %v5104, %v954
        %v5115 = vmul.f32 %v5097, %v950
        %v5116 = vmul.f32 %v5105, %v954
        %v5117 = vmul.f32 %v5098, %v950
        %v5118 = vmul.f32 %v5106, %v954
        %v5119 = vmul.f32 %v5099, %v950
        %v5120 = vmul.f32 %v5107, %v954
        %v5121 = vmul.f32 %v5100, %v950
        %v5122 = vmul.f32 %v5108, %v954
        %v5123 = vmul.f32 %v5101, %v950
        %v5124 = vmul.f32 %v5109, %v954
        %v5125 = vmul.f32 %v5102, %v950
        %v5126 = vmul.f32 %v5110, %v954
        %v5127 = vpack.c.bf16 %v5113, %v5111
        %v5128 = vpack.c.bf16 %v5114, %v5112
        %v5129 = vpack.c.bf16 %v5117, %v5115
        %v5130 = vpack.c.bf16 %v5118, %v5116
        %v5131 = vpack.c.bf16 %v5121, %v5119
        %v5132 = vpack.c.bf16 %v5122, %v5120
        %v5133 = vpack.c.bf16 %v5125, %v5123
        %v5134 = vpack.c.bf16 %v5126, %v5124
        %5135 = vrot.lane.b32.xlu0 %v4751, 113
        %v5136 = vpop.permute.xlu0 %5135
        %5137 = vrot.lane.b32.xlu0 %v4753, 113
        %v5138 = vpop.permute.xlu0 %5137
        %5139 = vrot.lane.b32.xlu0 %v4755, 113
        %v5140 = vpop.permute.xlu0 %5139
        %5141 = vrot.lane.b32.xlu0 %v4757, 113
        %v5142 = vpop.permute.xlu0 %5141
        %5143 = vrot.lane.b32.xlu0 %v4759, 113
        %v5144 = vpop.permute.xlu0 %5143
        %5145 = vrot.lane.b32.xlu0 %v4761, 113
        %v5146 = vpop.permute.xlu0 %5145
        %5147 = vrot.lane.b32.xlu0 %v4763, 113
        %v5148 = vpop.permute.xlu0 %5147
        %5149 = vrot.lane.b32.xlu0 %v4765, 113
        %v5150 = vpop.permute.xlu0 %5149
        %5151 = vrot.lane.b32.xlu0 %v4752, 113
        %v5152 = vpop.permute.xlu0 %5151
        %5153 = vrot.lane.b32.xlu0 %v4754, 113
        %v5154 = vpop.permute.xlu0 %5153
        %5155 = vrot.lane.b32.xlu0 %v4756, 113
        %v5156 = vpop.permute.xlu0 %5155
        %5157 = vrot.lane.b32.xlu0 %v4758, 113
        %v5158 = vpop.permute.xlu0 %5157
        %5159 = vrot.lane.b32.xlu0 %v4760, 113
        %v5160 = vpop.permute.xlu0 %5159
        %5161 = vrot.lane.b32.xlu0 %v4762, 113
        %v5162 = vpop.permute.xlu0 %5161
        %5163 = vrot.lane.b32.xlu0 %v4764, 113
        %v5164 = vpop.permute.xlu0 %5163
        %5165 = vrot.lane.b32.xlu0 %v4766, 113
        %v5166 = vpop.permute.xlu0 %5165
        %v5167 = vsel %vm1013, %v5136, %v5152
        %v5168 = vsel %vm1013, %v5138, %v5154
        %v5169 = vsel %vm1013, %v5140, %v5156
        %v5170 = vsel %vm1013, %v5142, %v5158
        %v5171 = vsel %vm1013, %v5144, %v5160
        %v5172 = vsel %vm1013, %v5146, %v5162
        %v5173 = vsel %vm1013, %v5148, %v5164
        %v5174 = vsel %vm1013, %v5150, %v5166
        %v5175 = vsel %vm1013, %v5152, %v5136
        %v5176 = vsel %vm1013, %v5154, %v5138
        %v5177 = vsel %vm1013, %v5156, %v5140
        %v5178 = vsel %vm1013, %v5158, %v5142
        %v5179 = vsel %vm1013, %v5160, %v5144
        %v5180 = vsel %vm1013, %v5162, %v5146
        %v5181 = vsel %vm1013, %v5164, %v5148
        %v5182 = vsel %vm1013, %v5166, %v5150
        %v5183 = vmul.f32 %v5167, %v1034
        %v5184 = vmul.f32 %v5175, %v1038
        %v5185 = vmul.f32 %v5168, %v1034
        %v5186 = vmul.f32 %v5176, %v1038
        %v5187 = vmul.f32 %v5169, %v1034
        %v5188 = vmul.f32 %v5177, %v1038
        %v5189 = vmul.f32 %v5170, %v1034
        %v5190 = vmul.f32 %v5178, %v1038
        %v5191 = vmul.f32 %v5171, %v1034
        %v5192 = vmul.f32 %v5179, %v1038
        %v5193 = vmul.f32 %v5172, %v1034
        %v5194 = vmul.f32 %v5180, %v1038
        %v5195 = vmul.f32 %v5173, %v1034
        %v5196 = vmul.f32 %v5181, %v1038
        %v5197 = vmul.f32 %v5174, %v1034
        %v5198 = vmul.f32 %v5182, %v1038
        %v5199 = vpack.c.bf16 %v5185, %v5183
        %v5200 = vpack.c.bf16 %v5186, %v5184
        %v5201 = vpack.c.bf16 %v5189, %v5187
        %v5202 = vpack.c.bf16 %v5190, %v5188
        %v5203 = vpack.c.bf16 %v5193, %v5191
        %v5204 = vpack.c.bf16 %v5194, %v5192
        %v5205 = vpack.c.bf16 %v5197, %v5195
        %v5206 = vpack.c.bf16 %v5198, %v5196
        %5207 = vrot.lane.b32.xlu0 %v4751, 112
        %v5208 = vpop.permute.xlu0 %5207
        %5209 = vrot.lane.b32.xlu0 %v4753, 112
        %v5210 = vpop.permute.xlu0 %5209
        %5211 = vrot.lane.b32.xlu0 %v4755, 112
        %v5212 = vpop.permute.xlu0 %5211
        %5213 = vrot.lane.b32.xlu0 %v4757, 112
        %v5214 = vpop.permute.xlu0 %5213
        %5215 = vrot.lane.b32.xlu0 %v4759, 112
        %v5216 = vpop.permute.xlu0 %5215
        %5217 = vrot.lane.b32.xlu0 %v4761, 112
        %v5218 = vpop.permute.xlu0 %5217
        %5219 = vrot.lane.b32.xlu0 %v4763, 112
        %v5220 = vpop.permute.xlu0 %5219
        %5221 = vrot.lane.b32.xlu0 %v4765, 112
        %v5222 = vpop.permute.xlu0 %5221
        %5223 = vrot.lane.b32.xlu0 %v4752, 112
        %v5224 = vpop.permute.xlu0 %5223
        %5225 = vrot.lane.b32.xlu0 %v4754, 112
        %v5226 = vpop.permute.xlu0 %5225
        %5227 = vrot.lane.b32.xlu0 %v4756, 112
        %v5228 = vpop.permute.xlu0 %5227
        %5229 = vrot.lane.b32.xlu0 %v4758, 112
        %v5230 = vpop.permute.xlu0 %5229
        %5231 = vrot.lane.b32.xlu0 %v4760, 112
        %v5232 = vpop.permute.xlu0 %5231
        %5233 = vrot.lane.b32.xlu0 %v4762, 112
        %v5234 = vpop.permute.xlu0 %5233
        %5235 = vrot.lane.b32.xlu0 %v4764, 112
        %v5236 = vpop.permute.xlu0 %5235
        %5237 = vrot.lane.b32.xlu0 %v4766, 112
        %v5238 = vpop.permute.xlu0 %5237
        %v5239 = vsel %vm1097, %v5208, %v5224
        %v5240 = vsel %vm1097, %v5210, %v5226
        %v5241 = vsel %vm1097, %v5212, %v5228
        %v5242 = vsel %vm1097, %v5214, %v5230
        %v5243 = vsel %vm1097, %v5216, %v5232
        %v5244 = vsel %vm1097, %v5218, %v5234
        %v5245 = vsel %vm1097, %v5220, %v5236
        %v5246 = vsel %vm1097, %v5222, %v5238
        %v5247 = vsel %vm1097, %v5224, %v5208
        %v5248 = vsel %vm1097, %v5226, %v5210
        %v5249 = vsel %vm1097, %v5228, %v5212
        %v5250 = vsel %vm1097, %v5230, %v5214
        %v5251 = vsel %vm1097, %v5232, %v5216
        %v5252 = vsel %vm1097, %v5234, %v5218
        %v5253 = vsel %vm1097, %v5236, %v5220
        %v5254 = vsel %vm1097, %v5238, %v5222
        %v5255 = vmul.f32 %v5239, %v1118
        %v5256 = vmul.f32 %v5247, %v1122
        %v5257 = vmul.f32 %v5240, %v1118
        %v5258 = vmul.f32 %v5248, %v1122
        %v5259 = vmul.f32 %v5241, %v1118
        %v5260 = vmul.f32 %v5249, %v1122
        %v5261 = vmul.f32 %v5242, %v1118
        %v5262 = vmul.f32 %v5250, %v1122
        %v5263 = vmul.f32 %v5243, %v1118
        %v5264 = vmul.f32 %v5251, %v1122
        %v5265 = vmul.f32 %v5244, %v1118
        %v5266 = vmul.f32 %v5252, %v1122
        %v5267 = vmul.f32 %v5245, %v1118
        %v5268 = vmul.f32 %v5253, %v1122
        %v5269 = vmul.f32 %v5246, %v1118
        %v5270 = vmul.f32 %v5254, %v1122
        %v5271 = vpack.c.bf16 %v5257, %v5255
        %v5272 = vpack.c.bf16 %v5258, %v5256
        %v5273 = vpack.c.bf16 %v5261, %v5259
        %v5274 = vpack.c.bf16 %v5262, %v5260
        %v5275 = vpack.c.bf16 %v5265, %v5263
        %v5276 = vpack.c.bf16 %v5266, %v5264
        %v5277 = vpack.c.bf16 %v5269, %v5267
        %v5278 = vpack.c.bf16 %v5270, %v5268
        %5279 = vrot.lane.b32.xlu0 %v4751, 111
        %v5280 = vpop.permute.xlu0 %5279
        %5281 = vrot.lane.b32.xlu0 %v4753, 111
        %v5282 = vpop.permute.xlu0 %5281
        %5283 = vrot.lane.b32.xlu0 %v4755, 111
        %v5284 = vpop.permute.xlu0 %5283
        %5285 = vrot.lane.b32.xlu0 %v4757, 111
        %v5286 = vpop.permute.xlu0 %5285
        %5287 = vrot.lane.b32.xlu0 %v4759, 111
        %v5288 = vpop.permute.xlu0 %5287
        %5289 = vrot.lane.b32.xlu0 %v4761, 111
        %v5290 = vpop.permute.xlu0 %5289
        %5291 = vrot.lane.b32.xlu0 %v4763, 111
        %v5292 = vpop.permute.xlu0 %5291
        %5293 = vrot.lane.b32.xlu0 %v4765, 111
        %v5294 = vpop.permute.xlu0 %5293
        %5295 = vrot.lane.b32.xlu0 %v4752, 111
        %v5296 = vpop.permute.xlu0 %5295
        %5297 = vrot.lane.b32.xlu0 %v4754, 111
        %v5298 = vpop.permute.xlu0 %5297
        %5299 = vrot.lane.b32.xlu0 %v4756, 111
        %v5300 = vpop.permute.xlu0 %5299
        %5301 = vrot.lane.b32.xlu0 %v4758, 111
        %v5302 = vpop.permute.xlu0 %5301
        %5303 = vrot.lane.b32.xlu0 %v4760, 111
        %v5304 = vpop.permute.xlu0 %5303
        %5305 = vrot.lane.b32.xlu0 %v4762, 111
        %v5306 = vpop.permute.xlu0 %5305
        %5307 = vrot.lane.b32.xlu0 %v4764, 111
        %v5308 = vpop.permute.xlu0 %5307
        %5309 = vrot.lane.b32.xlu0 %v4766, 111
        %v5310 = vpop.permute.xlu0 %5309
        %v5311 = vsel %vm1181, %v5280, %v5296
        %v5312 = vsel %vm1181, %v5282, %v5298
        %v5313 = vsel %vm1181, %v5284, %v5300
        %v5314 = vsel %vm1181, %v5286, %v5302
        %v5315 = vsel %vm1181, %v5288, %v5304
        %v5316 = vsel %vm1181, %v5290, %v5306
        %v5317 = vsel %vm1181, %v5292, %v5308
        %v5318 = vsel %vm1181, %v5294, %v5310
        %v5319 = vsel %vm1181, %v5296, %v5280
        %v5320 = vsel %vm1181, %v5298, %v5282
        %v5321 = vsel %vm1181, %v5300, %v5284
        %v5322 = vsel %vm1181, %v5302, %v5286
        %v5323 = vsel %vm1181, %v5304, %v5288
        %v5324 = vsel %vm1181, %v5306, %v5290
        %v5325 = vsel %vm1181, %v5308, %v5292
        %v5326 = vsel %vm1181, %v5310, %v5294
        %v5327 = vmul.f32 %v5311, %v1202
        %v5328 = vmul.f32 %v5319, %v1206
        %v5329 = vmul.f32 %v5312, %v1202
        %v5330 = vmul.f32 %v5320, %v1206
        %v5331 = vmul.f32 %v5313, %v1202
        %v5332 = vmul.f32 %v5321, %v1206
        %v5333 = vmul.f32 %v5314, %v1202
        %v5334 = vmul.f32 %v5322, %v1206
        %v5335 = vmul.f32 %v5315, %v1202
        %v5336 = vmul.f32 %v5323, %v1206
        %v5337 = vmul.f32 %v5316, %v1202
        %v5338 = vmul.f32 %v5324, %v1206
        %v5339 = vmul.f32 %v5317, %v1202
        %v5340 = vmul.f32 %v5325, %v1206
        %v5341 = vmul.f32 %v5318, %v1202
        %v5342 = vmul.f32 %v5326, %v1206
        %v5343 = vpack.c.bf16 %v5329, %v5327
        %v5344 = vpack.c.bf16 %v5330, %v5328
        %v5345 = vpack.c.bf16 %v5333, %v5331
        %v5346 = vpack.c.bf16 %v5334, %v5332
        %v5347 = vpack.c.bf16 %v5337, %v5335
        %v5348 = vpack.c.bf16 %v5338, %v5336
        %v5349 = vpack.c.bf16 %v5341, %v5339
        %v5350 = vpack.c.bf16 %v5342, %v5340
        %v5351 = vld [vmem:[#allocation2] sm:$0xff]
        %v5352 = vld [vmem:[#allocation2 + $0x8] sm:$0xff]
        %v5353 = vld [vmem:[#allocation2 + $0x10] sm:$0xf]
        %v5354 = vld [vmem:[#allocation2 + $0x14] sm:$0xff]
        %v5355 = vld [vmem:[#allocation2 + $0x1c] sm:$0xff]
        %v5356 = vld [vmem:[#allocation2 + $0x24] sm:$0xf]
        %v5357 = vld [vmem:[#allocation2 + $0x28] sm:$0xff]
        %v5358 = vld [vmem:[#allocation2 + $0x30] sm:$0xff]
        %v5359 = vld [vmem:[#allocation2 + $0x38] sm:$0xf]
        %v5360 = vld [vmem:[#allocation2 + $0x3c] sm:$0xff]
        %v5361 = vld [vmem:[#allocation2 + $0x44] sm:$0xff]
        %v5362 = vld [vmem:[#allocation2 + $0x4c] sm:$0xf]
        %v5363 = vld [vmem:[#allocation2 + $0x50] sm:$0xff]
        %v5364 = vld [vmem:[#allocation2 + $0x58] sm:$0xff]
        %v5365 = vld [vmem:[#allocation2 + $0x60] sm:$0xf]
        %v5366 = vld [vmem:[#allocation2 + $0x64] sm:$0xff]
        %v5367 = vld [vmem:[#allocation2 + $0x6c] sm:$0xff]
        %v5368 = vld [vmem:[#allocation2 + $0x74] sm:$0xf]
        %v5369 = vld [vmem:[#allocation2 + $0x78] sm:$0xff]
        %v5370 = vld [vmem:[#allocation2 + $0x80] sm:$0xff]
        %v5371 = vld [vmem:[#allocation2 + $0x88] sm:$0xf]
        %v5372 = vld [vmem:[#allocation2 + $0x8c] sm:$0xff]
        %v5373 = vld [vmem:[#allocation2 + $0x94] sm:$0xff]
        %v5374 = vld [vmem:[#allocation2 + $0x9c] sm:$0xf]
        %v5375 = vld [vmem:[%s11] sm:$0xff]
        %v5376 = vld [vmem:[%s11 + $0x8] sm:$0xff]
        %v5377 = vld [vmem:[%s11 + $0x10] sm:$0xff]
        %v5378 = vld [vmem:[%s11 + $0x18] sm:$0xff]
        %v5379 = vld [vmem:[%s11 + $0x20] sm:$0xff]
        %v5380 = vld [vmem:[%s11 + $0x28] sm:$0xff]
        %v5381 = vld [vmem:[%s11 + $0x30] sm:$0xff]
        %v5382 = vld [vmem:[%s11 + $0x38] sm:$0xff]
        %5384 = vset.pattern.permute.xlu0 0
        %5385 = vperm.xlu0 %5384, %v5375
        %v5386 = vpop.permute.xlu0 %5385
        %5389 = vset.pattern.permute.xlu0 0
        %5390 = vperm.xlu0 %5389, %v5376
        %v5391 = vpop.permute.xlu0 %5390
        %5394 = vset.pattern.permute.xlu0 0
        %5395 = vperm.xlu0 %5394, %v5377
        %v5396 = vpop.permute.xlu0 %5395
        %5399 = vset.pattern.permute.xlu0 0
        %5400 = vperm.xlu0 %5399, %v5378
        %v5401 = vpop.permute.xlu0 %5400
        %5404 = vset.pattern.permute.xlu0 0
        %5405 = vperm.xlu0 %5404, %v5379
        %v5406 = vpop.permute.xlu0 %5405
        %5409 = vset.pattern.permute.xlu0 0
        %5410 = vperm.xlu0 %5409, %v5380
        %v5411 = vpop.permute.xlu0 %5410
        %5414 = vset.pattern.permute.xlu0 0
        %5415 = vperm.xlu0 %5414, %v5381
        %v5416 = vpop.permute.xlu0 %5415
        %5419 = vset.pattern.permute.xlu0 0
        %5420 = vperm.xlu0 %5419, %v5382
        %v5421 = vpop.permute.xlu0 %5420
        %v5447 = vunpack.c.l.b16 %v5351
        %v5448 = vunpack.c.h.b16 %v5351
        %v5449 = vunpack.c.l.b16 %v5352
        %v5450 = vunpack.c.h.b16 %v5352
        %v5451 = vunpack.c.l.b16 %v5353
        %v5452 = vunpack.c.l.b16 %v5354
        %v5453 = vunpack.c.h.b16 %v5354
        %v5454 = vunpack.c.l.b16 %v5355
        %v5455 = vunpack.c.h.b16 %v5355
        %v5456 = vunpack.c.l.b16 %v5356
        %v5457 = vunpack.c.l.b16 %v5357
        %v5458 = vunpack.c.h.b16 %v5357
        %v5459 = vunpack.c.l.b16 %v5358
        %v5460 = vunpack.c.h.b16 %v5358
        %v5461 = vunpack.c.l.b16 %v5359
        %v5462 = vunpack.c.l.b16 %v5360
        %v5463 = vunpack.c.h.b16 %v5360
        %v5464 = vunpack.c.l.b16 %v5361
        %v5465 = vunpack.c.h.b16 %v5361
        %v5466 = vunpack.c.l.b16 %v5362
        %v5467 = vunpack.c.l.b16 %v5363
        %v5468 = vunpack.c.h.b16 %v5363
        %v5469 = vunpack.c.l.b16 %v5364
        %v5470 = vunpack.c.h.b16 %v5364
        %v5471 = vunpack.c.l.b16 %v5365
        %v5472 = vunpack.c.l.b16 %v5366
        %v5473 = vunpack.c.h.b16 %v5366
        %v5474 = vunpack.c.l.b16 %v5367
        %v5475 = vunpack.c.h.b16 %v5367
        %v5476 = vunpack.c.l.b16 %v5368
        %v5477 = vunpack.c.l.b16 %v5369
        %v5478 = vunpack.c.h.b16 %v5369
        %v5479 = vunpack.c.l.b16 %v5370
        %v5480 = vunpack.c.h.b16 %v5370
        %v5481 = vunpack.c.l.b16 %v5371
        %v5482 = vunpack.c.l.b16 %v5372
        %v5483 = vunpack.c.h.b16 %v5372
        %v5484 = vunpack.c.l.b16 %v5373
        %v5485 = vunpack.c.h.b16 %v5373
        %v5486 = vunpack.c.l.b16 %v5374
        %v5487 = vpack.c.b16 %v5452, %v5447
        %v5488 = vpack.c.b16 %v5453, %v5448
        %v5489 = vpack.c.b16 %v5454, %v5449
        %v5490 = vpack.c.b16 %v5455, %v5450
        %v5491 = vpack.c.b16 %v5456, %v5451
        %v5492 = vpack.c.b16 %v5462, %v5457
        %v5493 = vpack.c.b16 %v5463, %v5458
        %v5494 = vpack.c.b16 %v5464, %v5459
        %v5495 = vpack.c.b16 %v5465, %v5460
        %v5496 = vpack.c.b16 %v5466, %v5461
        %v5497 = vpack.c.b16 %v5472, %v5467
        %v5498 = vpack.c.b16 %v5473, %v5468
        %v5499 = vpack.c.b16 %v5474, %v5469
        %v5500 = vpack.c.b16 %v5475, %v5470
        %v5501 = vpack.c.b16 %v5476, %v5471
        %v5502 = vpack.c.b16 %v5482, %v5477
        %v5503 = vpack.c.b16 %v5483, %v5478
        %v5504 = vpack.c.b16 %v5484, %v5479
        %v5505 = vpack.c.b16 %v5485, %v5480
        %v5506 = vpack.c.b16 %v5486, %v5481
        %v5524 = vsel %vm1577, %v5491, 0
        %v5527 = vsel %vm1577, %v5496, 0
        %v5530 = vsel %vm1577, %v5501, 0
        %v5533 = vsel %vm1577, %v5506, 0
        %5535 = vmatprep.subr.bf16.mxu0 %v4832
        %5536 = vmatpush1.bf16.msra.mxu0 %v4831
        %5537 = vmatprep.subr.bf16.mxu0 %v4834
        %5538 = vmatpush1.bf16.msra.mxu0 %v4833
        %5539 = vmatprep.subr.bf16.mxu0 %v4836
        %5540 = vmatpush1.bf16.msra.mxu0 %v4835
        %5541 = vmatprep.subr.bf16.mxu0 %v4838
        %5542 = vmatpush1.bf16.msra.mxu0 %v4837
        %5543 = vmatprep.subr.bf16.mxu0 %v4904
        %5544 = vmatpush1.bf16.msra.mxu0 %v4903
        %5545 = vmatprep.subr.bf16.mxu0 %v4906
        %5546 = vmatpush1.bf16.msra.mxu0 %v4905
        %5547 = vmatprep.subr.bf16.mxu0 %v4908
        %5548 = vmatpush1.bf16.msra.mxu0 %v4907
        %5549 = vmatprep.subr.bf16.mxu0 %v4910
        %5550 = vmatpush1.bf16.msra.mxu0 %v4909
        %5551 = vmatprep.subr.bf16.mxu0 %v4976
        %5552 = vmatpush1.bf16.msra.mxu0 %v4975
        %5553 = vmatprep.subr.bf16.mxu0 %v4978
        %5554 = vmatpush1.bf16.msra.mxu0 %v4977
        %5555 = vmatprep.subr.bf16.mxu0 %v4980
        %5556 = vmatpush1.bf16.msra.mxu0 %v4979
        %5557 = vmatprep.subr.bf16.mxu0 %v4982
        %5558 = vmatpush1.bf16.msra.mxu0 %v4981
        %5559 = vmatprep.subr.bf16.mxu0 %v5048
        %5560 = vmatpush1.bf16.msra.mxu0 %v5047
        %5561 = vmatprep.subr.bf16.mxu0 %v5050
        %5562 = vmatpush1.bf16.msra.mxu0 %v5049
        %5563 = vmatprep.subr.bf16.mxu0 %v5052
        %5564 = vmatpush1.bf16.msra.mxu0 %v5051
        %5565 = vmatprep.subr.bf16.mxu0 %v5054
        %5566 = vmatpush1.bf16.msra.mxu0 %v5053
        %5567 = vmatprep.mubr.bf16.mxu0 %v5488
        %5568 = vmatmul.mubr.bf16.gmra.mrb[0].mxu0 %v5487
        %v5569 = vpop.f32.mrb[0].mxu0
        %v5570 = vadd.f32 %v5386, %v5569
        %v5571 = vpop.f32.mrb[0].mxu0
        %v5572 = vadd.f32 %v5386, %v5571
        %v5573 = vpop.f32.mrb[0].mxu0
        %v5574 = vadd.f32 %v5391, %v5573
        %v5575 = vpop.f32.mrb[0].mxu0
        %v5576 = vadd.f32 %v5391, %v5575
        %5577 = vmatprep.mubr.bf16.mxu0 %v5493
        %5578 = vmatmul.mubr.bf16.gmra.mrb[0].mxu0 %v5492
        %v5579 = vpop.f32.mrb[0].mxu0
        %v5580 = vadd.f32 %v5396, %v5579
        %v5581 = vpop.f32.mrb[0].mxu0
        %v5582 = vadd.f32 %v5396, %v5581
        %v5583 = vpop.f32.mrb[0].mxu0
        %v5584 = vadd.f32 %v5401, %v5583
        %v5585 = vpop.f32.mrb[0].mxu0
        %v5586 = vadd.f32 %v5401, %v5585
        %5587 = vmatprep.mubr.bf16.mxu0 %v5498
        %5588 = vmatmul.mubr.bf16.gmra.mrb[0].mxu0 %v5497
        %v5589 = vpop.f32.mrb[0].mxu0
        %v5590 = vadd.f32 %v5406, %v5589
        %v5591 = vpop.f32.mrb[0].mxu0
        %v5592 = vadd.f32 %v5406, %v5591
        %v5593 = vpop.f32.mrb[0].mxu0
        %v5594 = vadd.f32 %v5411, %v5593
        %v5595 = vpop.f32.mrb[0].mxu0
        %v5596 = vadd.f32 %v5411, %v5595
        %5597 = vmatprep.mubr.bf16.mxu0 %v5503
        %5598 = vmatmul.mubr.bf16.gmra.mrb[0].mxu0 %v5502
        %v5599 = vpop.f32.mrb[0].mxu0
        %v5600 = vadd.f32 %v5416, %v5599
        %v5601 = vpop.f32.mrb[0].mxu0
        %v5602 = vadd.f32 %v5416, %v5601
        %v5603 = vpop.f32.mrb[0].mxu0
        %v5604 = vadd.f32 %v5421, %v5603
        %v5605 = vpop.f32.mrb[0].mxu0
        %v5606 = vadd.f32 %v5421, %v5605
        %5607 = vdwg.mxu0
        %5608 = vmatprep.subr.bf16.mxu0 %v5056
        %5609 = vmatpush1.bf16.msra.mxu0 %v5055
        %5610 = vmatprep.subr.bf16.mxu0 %v5058
        %5611 = vmatpush1.bf16.msra.mxu0 %v5057
        %5612 = vmatprep.subr.bf16.mxu0 %v5060
        %5613 = vmatpush1.bf16.msra.mxu0 %v5059
        %5614 = vmatprep.subr.bf16.mxu0 %v5062
        %5615 = vmatpush1.bf16.msra.mxu0 %v5061
        %5616 = vmatprep.subr.bf16.mxu0 %v5128
        %5617 = vmatpush1.bf16.msra.mxu0 %v5127
        %5618 = vmatprep.subr.bf16.mxu0 %v5130
        %5619 = vmatpush1.bf16.msra.mxu0 %v5129
        %5620 = vmatprep.subr.bf16.mxu0 %v5132
        %5621 = vmatpush1.bf16.msra.mxu0 %v5131
        %5622 = vmatprep.subr.bf16.mxu0 %v5134
        %5623 = vmatpush1.bf16.msra.mxu0 %v5133
        %5624 = vmatprep.subr.bf16.mxu0 %v5200
        %5625 = vmatpush1.bf16.msra.mxu0 %v5199
        %5626 = vmatprep.subr.bf16.mxu0 %v5202
        %5627 = vmatpush1.bf16.msra.mxu0 %v5201
        %5628 = vmatprep.subr.bf16.mxu0 %v5204
        %5629 = vmatpush1.bf16.msra.mxu0 %v5203
        %5630 = vmatprep.subr.bf16.mxu0 %v5206
        %5631 = vmatpush1.bf16.msra.mxu0 %v5205
        %5632 = vmatprep.subr.bf16.mxu0 %v5272
        %5633 = vmatpush1.bf16.msra.mxu0 %v5271
        %5634 = vmatprep.subr.bf16.mxu0 %v5274
        %5635 = vmatpush1.bf16.msra.mxu0 %v5273
        %5636 = vmatprep.subr.bf16.mxu0 %v5276
        %5637 = vmatpush1.bf16.msra.mxu0 %v5275
        %5638 = vmatprep.subr.bf16.mxu0 %v5278
        %5639 = vmatpush1.bf16.msra.mxu0 %v5277
        %5640 = vmatprep.mubr.bf16.mxu0 %v5490
        %5641 = vmatmul.mubr.bf16.gmra.mrb[0].mxu0 %v5489
        %v5642 = vpop.f32.mrb[0].mxu0
        %v5643 = vadd.f32 %v5570, %v5642
        %v5644 = vpop.f32.mrb[0].mxu0
        %v5645 = vadd.f32 %v5572, %v5644
        %v5646 = vpop.f32.mrb[0].mxu0
        %v5647 = vadd.f32 %v5574, %v5646
        %v5648 = vpop.f32.mrb[0].mxu0
        %v5649 = vadd.f32 %v5576, %v5648
        %5650 = vmatprep.mubr.bf16.mxu0 %v5495
        %5651 = vmatmul.mubr.bf16.gmra.mrb[0].mxu0 %v5494
        %v5652 = vpop.f32.mrb[0].mxu0
        %v5653 = vadd.f32 %v5580, %v5652
        %v5654 = vpop.f32.mrb[0].mxu0
        %v5655 = vadd.f32 %v5582, %v5654
        %v5656 = vpop.f32.mrb[0].mxu0
        %v5657 = vadd.f32 %v5584, %v5656
        %v5658 = vpop.f32.mrb[0].mxu0
        %v5659 = vadd.f32 %v5586, %v5658
        %5660 = vmatprep.mubr.bf16.mxu0 %v5500
        %5661 = vmatmul.mubr.bf16.gmra.mrb[0].mxu0 %v5499
        %v5662 = vpop.f32.mrb[0].mxu0
        %v5663 = vadd.f32 %v5590, %v5662
        %v5664 = vpop.f32.mrb[0].mxu0
        %v5665 = vadd.f32 %v5592, %v5664
        %v5666 = vpop.f32.mrb[0].mxu0
        %v5667 = vadd.f32 %v5594, %v5666
        %v5668 = vpop.f32.mrb[0].mxu0
        %v5669 = vadd.f32 %v5596, %v5668
        %5670 = vmatprep.mubr.bf16.mxu0 %v5505
        %5671 = vmatmul.mubr.bf16.gmra.mrb[0].mxu0 %v5504
        %v5672 = vpop.f32.mrb[0].mxu0
        %v5673 = vadd.f32 %v5600, %v5672
        %v5674 = vpop.f32.mrb[0].mxu0
        %v5675 = vadd.f32 %v5602, %v5674
        %v5676 = vpop.f32.mrb[0].mxu0
        %v5677 = vadd.f32 %v5604, %v5676
        %v5678 = vpop.f32.mrb[0].mxu0
        %v5679 = vadd.f32 %v5606, %v5678
        %5680 = vdwg.mxu0
        %5681 = vmatprep.subr.bf16.mxu0 %v5344
        %5682 = vmatpush1.bf16.msra.mxu0 %v5343
        %5683 = vmatprep.subr.bf16.mxu0 %v5346
        %5684 = vmatpush1.bf16.msra.mxu0 %v5345
        %5685 = vmatprep.subr.bf16.mxu0 %v5348
        %5686 = vmatpush1.bf16.msra.mxu0 %v5347
        %5687 = vmatprep.subr.bf16.mxu0 %v5350
        %5688 = vmatpush1.bf16.msra.mxu0 %v5349
        %5689 = vmatprep.subr.bf16.mxu0 0
        %5690 = vmatpush1.bf16.msra.mxu0 0
        %5691 = vmatprep.subr.bf16.mxu0 0
        %5692 = vmatpush1.bf16.msra.mxu0 0
        %5693 = vmatprep.subr.bf16.mxu0 0
        %5694 = vmatpush1.bf16.msra.mxu0 0
        %5695 = vmatprep.subr.bf16.mxu0 0
        %5696 = vmatpush1.bf16.msra.mxu0 0
        %5697 = vmatprep.subr.bf16.mxu0 0
        %5698 = vmatpush1.bf16.msra.mxu0 0
        %5699 = vmatprep.subr.bf16.mxu0 0
        %5700 = vmatpush1.bf16.msra.mxu0 0
        %5701 = vmatprep.subr.bf16.mxu0 0
        %5702 = vmatpush1.bf16.msra.mxu0 0
        %5703 = vmatprep.subr.bf16.mxu0 0
        %5704 = vmatpush1.bf16.msra.mxu0 0
        %5705 = vmatprep.subr.bf16.mxu0 0
        %5706 = vmatpush1.bf16.msra.mxu0 0
        %5707 = vmatprep.subr.bf16.mxu0 0
        %5708 = vmatpush1.bf16.msra.mxu0 0
        %5709 = vmatprep.subr.bf16.mxu0 0
        %5710 = vmatpush1.bf16.msra.mxu0 0
        %5711 = vmatprep.subr.bf16.mxu0 0
        %5712 = vmatpush1.bf16.msra.mxu0 0
        %5713 = vmatprep.mubr.bf16.mxu0 0
        %5714 = vmatmul.mubr.bf16.gmra.mrb[0].mxu0 %v5524
        %v5715 = vpop.f32.mrb[0].mxu0
        %v5716 = vadd.f32 %v5643, %v5715
        %v5717 = vpop.f32.mrb[0].mxu0
        %v5718 = vadd.f32 %v5645, %v5717
        %v5719 = vpop.f32.mrb[0].mxu0
        %v5720 = vadd.f32 %v5647, %v5719
        %v5721 = vpop.f32.mrb[0].mxu0
        %v5722 = vadd.f32 %v5649, %v5721
        %5723 = vmatprep.mubr.bf16.mxu0 0
        %5724 = vmatmul.mubr.bf16.gmra.mrb[0].mxu0 %v5527
        %v5725 = vpop.f32.mrb[0].mxu0
        %v5726 = vadd.f32 %v5653, %v5725
        %v5727 = vpop.f32.mrb[0].mxu0
        %v5728 = vadd.f32 %v5655, %v5727
        %v5729 = vpop.f32.mrb[0].mxu0
        %v5730 = vadd.f32 %v5657, %v5729
        %v5731 = vpop.f32.mrb[0].mxu0
        %v5732 = vadd.f32 %v5659, %v5731
        %5733 = vmatprep.mubr.bf16.mxu0 0
        %5734 = vmatmul.mubr.bf16.gmra.mrb[0].mxu0 %v5530
        %v5735 = vpop.f32.mrb[0].mxu0
        %v5736 = vadd.f32 %v5663, %v5735
        %v5737 = vpop.f32.mrb[0].mxu0
        %v5738 = vadd.f32 %v5665, %v5737
        %v5739 = vpop.f32.mrb[0].mxu0
        %v5740 = vadd.f32 %v5667, %v5739
        %v5741 = vpop.f32.mrb[0].mxu0
        %v5742 = vadd.f32 %v5669, %v5741
        %5743 = vmatprep.mubr.bf16.mxu0 0
        %5744 = vmatmul.mubr.bf16.gmra.mrb[0].mxu0 %v5533
        %v5745 = vpop.f32.mrb[0].mxu0
        %v5746 = vadd.f32 %v5673, %v5745
        %v5747 = vpop.f32.mrb[0].mxu0
        %v5748 = vadd.f32 %v5675, %v5747
        %v5749 = vpop.f32.mrb[0].mxu0
        %v5750 = vadd.f32 %v5677, %v5749
        %v5751 = vpop.f32.mrb[0].mxu0
        %v5752 = vadd.f32 %v5679, %v5751
        %5753 = vdwg.mxu0
        %v5754 = vmax.f32 %v5716, 0.0
        %v5755 = vmax.f32 %v5718, 0.0
        %v5756 = vmax.f32 %v5720, 0.0
        %v5757 = vmax.f32 %v5722, 0.0
        %v5758 = vmax.f32 %v5726, 0.0
        %v5759 = vmax.f32 %v5728, 0.0
        %v5760 = vmax.f32 %v5730, 0.0
        %v5761 = vmax.f32 %v5732, 0.0
        %v5762 = vmax.f32 %v5736, 0.0
        %v5763 = vmax.f32 %v5738, 0.0
        %v5764 = vmax.f32 %v5740, 0.0
        %v5765 = vmax.f32 %v5742, 0.0
        %v5766 = vmax.f32 %v5746, 0.0
        %v5767 = vmax.f32 %v5748, 0.0
        %v5768 = vmax.f32 %v5750, 0.0
        %v5769 = vmax.f32 %v5752, 0.0
        %v5770 = vld [vmem:[%s12] sm:$0x3]
        %v5771 = vpack.c.bf16 %v5756, %v5754
        %v5772 = vpack.c.bf16 %v5757, %v5755
        %v5773 = vpack.c.bf16 %v5760, %v5758
        %v5774 = vpack.c.bf16 %v5761, %v5759
        %v5775 = vpack.c.bf16 %v5764, %v5762
        %v5776 = vpack.c.bf16 %v5765, %v5763
        %v5777 = vpack.c.bf16 %v5768, %v5766
        %v5778 = vpack.c.bf16 %v5769, %v5767
        %v5779 = vld [vmem:[%s13] sm:$0xf]
        %5781 = vset.pattern.permute.xlu0 0
        %5782 = vperm.xlu0 %5781, %v5779
        %v5783 = vpop.permute.xlu0 %5782
        %v5786 = vsel %vm1577, %v5770, 0
        %5788 = vmatprep.subr.bf16.mxu0 %v5772
        %5789 = vmatpush1.bf16.msra.mxu0 %v5771
        %5790 = vmatprep.subr.bf16.mxu0 %v5774
        %5791 = vmatpush1.bf16.msra.mxu0 %v5773
        %5792 = vmatprep.subr.bf16.mxu0 %v5776
        %5793 = vmatpush1.bf16.msra.mxu0 %v5775
        %5794 = vmatprep.subr.bf16.mxu0 %v5778
        %5795 = vmatpush1.bf16.msra.mxu0 %v5777
        %5796 = vmatprep.subr.bf16.mxu0 0
        %5797 = vmatpush1.bf16.msra.mxu0 0
        %5798 = vmatprep.subr.bf16.mxu0 0
        %5799 = vmatpush1.bf16.msra.mxu0 0
        %5800 = vmatprep.subr.bf16.mxu0 0
        %5801 = vmatpush1.bf16.msra.mxu0 0
        %5802 = vmatprep.subr.bf16.mxu0 0
        %5803 = vmatpush1.bf16.msra.mxu0 0
        %5804 = vmatprep.subr.bf16.mxu0 0
        %5805 = vmatpush1.bf16.msra.mxu0 0
        %5806 = vmatprep.subr.bf16.mxu0 0
        %5807 = vmatpush1.bf16.msra.mxu0 0
        %5808 = vmatprep.subr.bf16.mxu0 0
        %5809 = vmatpush1.bf16.msra.mxu0 0
        %5810 = vmatprep.subr.bf16.mxu0 0
        %5811 = vmatpush1.bf16.msra.mxu0 0
        %5812 = vmatprep.subr.bf16.mxu0 0
        %5813 = vmatpush1.bf16.msra.mxu0 0
        %5814 = vmatprep.subr.bf16.mxu0 0
        %5815 = vmatpush1.bf16.msra.mxu0 0
        %5816 = vmatprep.subr.bf16.mxu0 0
        %5817 = vmatpush1.bf16.msra.mxu0 0
        %5818 = vmatprep.subr.bf16.mxu0 0
        %5819 = vmatpush1.bf16.msra.mxu0 0
        %5820 = vmatprep.mubr.bf16.mxu0 0
        %5821 = vmatmul.mubr.bf16.gmra.mrb[0].mxu0 %v5786
        %v5822 = vpop.f32.mrb[0].mxu0
        %v5823 = vadd.f32 %v5783, %v5822
        %v5824 = vpop.f32.mrb[0].mxu0
        %v5825 = vadd.f32 %v5783, %v5824
        %v5826 = vpop.f32.mrb[0].mxu0
        %v5827 = vpop.f32.mrb[0].mxu0
        %5828 = vdwg.mxu0
        %v5829 = vmax.f32 %v5823, 0.0
        %v5830 = vmax.f32 %v5825, 0.0
        %v5833 = vcombine.low %v5829, %v5830
        %5835 = vst [vmem:[%s513] sm:$0xff] %v5833
        %s5836 = sand.u32 %s341, 1
        %s5837 = scalar_lea.sflag [#allocation4], %s5836
        %s5838 = sand.u32 %s341, 1
        %s5839 = smul.addr %s5838, 16
        %s5840 = scalar_lea.vmem [#allocation5], %s5839
        %s5841 = sand.u32 %s367, 1
        %s5842 = scalar_lea.sflag [#allocation7], %s5841
        %s5843 = sand.u32 %s367, 1
        %s5844 = smul.addr %s5843, 8
        %s5845 = scalar_lea.vmem [#allocation6], %s5844
        // Predicated region
        $region81: #{tpu_custom_call.1} parent=75 // pred_check
          %p5846 = pneg %p351
        $region82: #{tpu_custom_call.1} parent=75 // pred_check_branch
          %5848 = sbr.rel (%p5846) target = $region84
        $region83: #{tpu_custom_call.1} parent=75 // pred_region
          %s5850 = ssub.s32 256, 256
          %5851 = vsyncadd %s5837, %s5850
          %s5852 = smul.addr %s34, 2
          %s5853 = smul.addr %s5852, 128
          %s5854 = scalar_lea.hbm %s14, %s5853
          %s5856 = sshll.u32 %s5840, 4
          %s5857 = int_to_ptr.vmem [resolvable:$true] %s5856
          %5859 = dma.vmem_to_hbm [thread:$0]  %s5857, 256, %s5854, %s5837
        $region84: #{tpu_custom_call.1} parent=75 // pred_fallthru
          _
        // Predicated region
        $region85: #{tpu_custom_call.1} parent=75 // pred_check
          %p5860 = pneg %p377
        $region86: #{tpu_custom_call.1} parent=75 // pred_check_branch
          %5862 = sbr.rel (%p5860) target = $region88
        $region87: #{tpu_custom_call.1} parent=75 // pred_region
          %s5864 = ssub.s32 128, 128
          %5865 = vsyncadd %s5842, %s5864
          %s5866 = smul.addr %s34, 2
          %s5867 = smul.addr %s5866, 64
          %s5868 = scalar_lea.hbm %s15, %s5867
          %s5870 = sshll.u32 %s5845, 4
          %s5871 = int_to_ptr.vmem [resolvable:$true] %s5870
          %5873 = dma.vmem_to_hbm [thread:$0]  %s5871, 128, %s5868, %s5842
        $region88: #{tpu_custom_call.1} parent=75 // pred_fallthru
          _
      $region76: #{tpu_custom_call.1} parent=5 // pred_fallthru
        _
      %p5874 = scmp.le.s32.totalorder 2, %s29
      // Predicated region
      $region89: #{tpu_custom_call.1} parent=5 // pred_check
        %p5875 = pneg %p5874
      $region90: #{tpu_custom_call.1} parent=5 // pred_check_branch
        %5877 = sbr.rel (%p5875) target = $region92
      $region91: #{tpu_custom_call.1} parent=5 // pred_region
        %s5878 = ssub.s32 %s29, 2
        // Predicated region
        $region93: #{tpu_custom_call.1} parent=91 // pred_check
          %p5879 = pneg %p357
        $region94: #{tpu_custom_call.1} parent=91 // pred_check_branch
          %5881 = sbr.rel (%p5879) target = $region96
        $region95: #{tpu_custom_call.1} parent=91 // pred_region
          %s5882 = sand.u32 %s342, 1
          %s5883 = scalar_lea.sflag [#allocation4], %s5882
          %s5884 = sand.u32 %s342, 1
          %s5885 = smul.addr %s5884, 16
          %s5886 = scalar_lea.vmem [#allocation5], %s5885
          %5887 = dma.done %s5883, 256
        $region96: #{tpu_custom_call.1} parent=91 // pred_fallthru
          _
        // Predicated region
        $region97: #{tpu_custom_call.1} parent=91 // pred_check
          %p5888 = pneg %p383
        $region98: #{tpu_custom_call.1} parent=91 // pred_check_branch
          %5890 = sbr.rel (%p5888) target = $region100
        $region99: #{tpu_custom_call.1} parent=91 // pred_region
          %s5891 = sand.u32 %s368, 1
          %s5892 = scalar_lea.sflag [#allocation7], %s5891
          %s5893 = sand.u32 %s368, 1
          %s5894 = smul.addr %s5893, 8
          %s5895 = scalar_lea.vmem [#allocation6], %s5894
          %5896 = dma.done %s5892, 128
        $region100: #{tpu_custom_call.1} parent=91 // pred_fallthru
          _
      $region92: #{tpu_custom_call.1} parent=5 // pred_fallthru
        _
    $region6: #{tpu_custom_call.1} parent=1 // loop_footer
      %s33 = sadd.s32 1, %s29
    $region7: #{tpu_custom_call.1} parent=1 // loop_footer_branch
      %28 = sbr.rel target = $region3
    $region8: #{tpu_custom_call.1} parent=1 // loop_exit
      _
    %5897 = vsyncpa [#allocation3], 1
    %s5898 = scalar_lea.sflag [#allocation3], 1
    %5899 = vsyncpa %s5898, 1
    %5900 = vsyncpa [#allocation4], 1
    %s5901 = scalar_lea.sflag [#allocation4], 1
    %5902 = vsyncpa %s5901, 1
    %5903 = vsyncpa [#allocation7], 1
    %s5904 = scalar_lea.sflag [#allocation7], 1
    %5905 = vsyncpa %s5904, 1

</llo_original>
